<compile_context>
chip_gen: v5e
topology: v5e:2x2
jax: 0.10.0
libtpu: 0.0.40
codegen_flags: <defaults>
</compile_context>

<pallas_src>
import jax
import jax.numpy as jnp
from jax.experimental import pallas as pl
from jax.experimental.pallas import tpu as pltpu

BN_EPS = 1e-5


# --------------------------------------------------------------------------- #
# Fused Pallas kernel                                                          #
# --------------------------------------------------------------------------- #
def _make_double_conv_kernel(N, H, W, Cin, Cout):
    inv_m = 1.0 / float(N * H * W)
    inv_hw = 1.0 / float(H * W)

    def stage(x_flat, xpad_ref, band_ref, bias_ref, gamma_ref, beta_ref,
              sw1_ref, sw2_ref, fold, unfold):
        """One conv3x3(pad=1) -> BN(batch stats) -> ReLU -> SE stage.

        x_flat   : (N, H, W*Ci)  lane-dense activation (value)
        xpad_ref : (N, H+2, W*Ci) VMEM scratch for the H halo
        band_ref : (3, W*Ci, W*Cout) banded conv weights (one band per dy)
        bias_ref : (1, W*Cout)   conv bias pre-tiled to lane-dense width
        gamma_ref, beta_ref : (1, Cout)
        sw1_ref  : (Cout, Cr), sw2_ref : (Cr, Cout)  SE weights (no bias)
        fold     : (W*Cout, Cout)  sums the W copies of each channel
        unfold   : (Cout, W*Cout)  broadcasts per-channel values back to lanes
        returns  : (N, H, W*Cout)
        """
        # ---- 3x3 conv, padding=1 ------------------------------------------
        # H halo: zeroed VMEM scratch; W halo: already folded into band_ref
        # (out-of-range taps simply have no rows in the banded weight).
        xpad_ref[...] = jnp.zeros(xpad_ref.shape, jnp.float32)
        xpad_ref[:, 1:H + 1, :] = x_flat
        xp = xpad_ref[...]                                    # (N, H+2, W*Ci)
        wci = xp.shape[-1]

        acc = jnp.dot(xp[:, 0:H, :].reshape(N * H, wci), band_ref[0],
                      preferred_element_type=jnp.float32)     # (N*H, W*Cout)
        for dy in (1, 2):
            acc = acc + jnp.dot(xp[:, dy:dy + H, :].reshape(N * H, wci),
                                band_ref[dy],
                                preferred_element_type=jnp.float32)
        acc = acc + bias_ref[...]

        # ---- BatchNorm2d (training-mode batch stats, biased var) -----------
        # single pass: per-(w,c) column sums, then fold the W copies per channel.
        colsum = jnp.sum(acc, axis=0, keepdims=True)          # (1, W*Cout)
        colsq = jnp.sum(acc * acc, axis=0, keepdims=True)     # (1, W*Cout)
        mean = jnp.dot(colsum, fold, preferred_element_type=jnp.float32) * inv_m
        ex2 = jnp.dot(colsq, fold, preferred_element_type=jnp.float32) * inv_m
        var = ex2 - mean * mean                               # (1, Cout)
        scale = gamma_ref[...] * jax.lax.rsqrt(var + BN_EPS)
        shift = beta_ref[...] - mean * scale
        scale_w = jnp.dot(scale, unfold, preferred_element_type=jnp.float32)
        shift_w = jnp.dot(shift, unfold, preferred_element_type=jnp.float32)

        # ---- ReLU (lane-dense: W*Cout lanes) --------------------------------
        y = jnp.maximum(acc * scale_w + shift_w, 0.0)         # (N*H, W*Cout)

        # ---- SEBlock: avg-pool -> fc -> ReLU -> fc -> sigmoid -> scale ------
        y3 = y.reshape(N, H, W * Cout)
        pooled = jnp.dot(jnp.sum(y3, axis=1), fold,
                         preferred_element_type=jnp.float32) * inv_hw  # (N, Cout)
        hid = jnp.maximum(jnp.dot(pooled, sw1_ref[...],
                                  preferred_element_type=jnp.float32), 0.0)
        gate = jax.nn.sigmoid(jnp.dot(hid, sw2_ref[...],
                                      preferred_element_type=jnp.float32))  # (N, Cout)
        gate_w = jnp.dot(gate, unfold, preferred_element_type=jnp.float32)  # (N, W*Cout)
        return y3 * gate_w[:, None, :]                        # (N, H, W*Cout)

    def kernel(x_ref,
               band1_ref, b1_ref, g1_ref, be1_ref, s1a_ref, s1b_ref,
               band2_ref, b2_ref, g2_ref, be2_ref, s2a_ref, s2b_ref,
               fold_ref, unfold_ref,
               out_ref,
               xpad1_ref, xpad2_ref):
        fold = fold_ref[...]
        unfold = unfold_ref[...]
        y1 = stage(x_ref[...], xpad1_ref, band1_ref, b1_ref, g1_ref, be1_ref,
                   s1a_ref, s1b_ref, fold, unfold)            # (N, H, W*Cout)
        y2 = stage(y1, xpad2_ref, band2_ref, b2_ref, g2_ref, be2_ref,
                   s2a_ref, s2b_ref, fold, unfold)            # (N, H, W*Cout)
        out_ref[...] = y2                                     # lane-dense store

    return kernel


# --------------------------------------------------------------------------- #
# Host-side weight preparation (pure layout work, done once per call by XLA)   #
# --------------------------------------------------------------------------- #
def _band_weights(w_hwio, W):
    """(3,3,Cin,Cout) HWIO conv weight -> (3, W*Cin, W*Cout) banded weights.

    band[dy, u*Cin + c, w*Cout + o] = w_hwio[dy, dx, c, o]  with u = w + dx - 1.
    Rows for u outside [0, W) are simply absent, which implements the W-direction
    zero padding of padding=1.
    """
    _, _, cin, cout = w_hwio.shape
    u = jnp.arange(W)[:, None, None]
    dx = jnp.arange(3)[None, :, None]
    wo = jnp.arange(W)[None, None, :]
    sel = (u == wo + dx - 1).astype(w_hwio.dtype)             # (W, 3, W)
    band = jnp.einsum("udw,ydco->yucwo", sel, w_hwio)          # (3, W, Cin, W, Cout)
    return band.reshape(3, W * cin, W * cout)


def double_conv_pallas(x_nchw, params):
    """Forward of DoubleConv. Input/output NCHW (PyTorch convention)."""
    x = jnp.transpose(x_nchw, (0, 2, 3, 1))                   # NCHW -> NHWC
    N, H, W, Cin = x.shape
    w1, b1, g1, be1, s1a, s1b = params["stage1"]
    w2, b2, g2, be2, s2a, s2b = params["stage2"]
    Cout = w1.shape[-1]

    band1 = _band_weights(w1, W)                              # (3, W*Cin,  W*Cout)
    band2 = _band_weights(w2, W)                              # (3, W*Cout, W*Cout)
    b1w = jnp.tile(b1, (1, W))                                # (1, W*Cout)
    b2w = jnp.tile(b2, (1, W))
    fold = jnp.tile(jnp.eye(Cout, dtype=jnp.float32), (W, 1))  # (W*Cout, Cout)
    unfold = fold.T                                           # (Cout, W*Cout)

    x_flat = x.reshape(N, H, W * Cin)                         # lane-dense activation

    kernel = _make_double_conv_kernel(N, H, W, Cin, Cout)
    vmem = pl.BlockSpec(memory_space=pltpu.MemorySpace.VMEM)
    out = pl.pallas_call(
        kernel,
        out_shape=jax.ShapeDtypeStruct((N, H, W * Cout), jnp.float32),
        in_specs=[vmem] * 15,
        out_specs=vmem,
        scratch_shapes=[
            pltpu.VMEM((N, H + 2, W * Cin), jnp.float32),     # stage-1 H-halo buffer
            pltpu.VMEM((N, H + 2, W * Cout), jnp.float32),    # stage-2 H-halo buffer
        ],
        compiler_params=pltpu.CompilerParams(vmem_limit_bytes=32 * 1024 * 1024),
    )(x_flat, band1, b1w, g1, be1, s1a, s1b,
      band2, b2w, g2, be2, s2a, s2b, fold, unfold)

    out = out.reshape(N, H, W, Cout)                          # free metadata reshape
    return jnp.transpose(out, (0, 3, 1, 2))                   # NHWC -> NCHW


# --------------------------------------------------------------------------- #
# Pure-JAX reference (for correctness check)                                   #
# --------------------------------------------------------------------------- #
def _stage_ref(x_nhwc, w, b, gamma, beta, w1, w2):
    conv = jax.lax.conv_general_dilated(
        x_nhwc, w, window_strides=(1, 1), padding="SAME",
        dimension_numbers=("NHWC", "HWIO", "NHWC")) + b.reshape(-1)
    mean = jnp.mean(conv, axis=(0, 1, 2))
    var = jnp.mean((conv - mean) ** 2, axis=(0, 1, 2))
    y = (conv - mean) / jnp.sqrt(var + BN_EPS) * gamma.reshape(-1) + beta.reshape(-1)
    y = jnp.maximum(y, 0.0)
    s = jnp.mean(y, axis=(1, 2))
    g = jax.nn.sigmoid(jnp.maximum(s @ w1, 0.0) @ w2)
    return y * g[:, None, None, :]


def double_conv_ref(x_nchw, params):
    x = jnp.transpose(x_nchw, (0, 2, 3, 1))
    x = _stage_ref(x, *params["stage1"])
    x = _stage_ref(x, *params["stage2"])
    return jnp.transpose(x, (0, 3, 1, 2))


# --------------------------------------------------------------------------- #
# Deterministic parameter construction                                         #
# --------------------------------------------------------------------------- #
def make_params(key, cin, cout, reduction=16):
    cr = max(cout // reduction, 1)
    ks = jax.random.split(key, 2)

    def stage(k, ci):
        k = jax.random.split(k, 6)
        w = 0.1 * jax.random.normal(k[0], (3, 3, ci, cout), jnp.float32)     # conv (HWIO)
        b = 0.1 * jax.random.normal(k[1], (1, cout), jnp.float32)            # conv bias
        gamma = 1.0 + 0.1 * jax.random.normal(k[2], (1, cout), jnp.float32)  # BN weight
        beta = 0.1 * jax.random.normal(k[3], (1, cout), jnp.float32)         # BN bias
        w1 = 0.2 * jax.random.normal(k[4], (cout, cr), jnp.float32)          # SE fc1 (no bias)
        w2 = 0.2 * jax.random.normal(k[5], (cr, cout), jnp.float32)          # SE fc2 (no bias)
        return (w, b, gamma, beta, w1, w2)

    return {"stage1": stage(ks[0], cin), "stage2": stage(ks[1], cout)}


if __name__ == "__main__":
    key = jax.random.PRNGKey(0)
    kx, kp = jax.random.split(key)

    N, Cin, H, W = 2, 4, 16, 16
    Cout = 32  # out_channels; SE reduction=16 -> hidden = 2

    x = jax.random.normal(kx, (N, Cin, H, W), jnp.float32)    # NCHW, like PyTorch
    params = make_params(kp, Cin, Cout)

    out = jax.block_until_ready(double_conv_pallas(x, params))
    ref = jax.block_until_ready(double_conv_ref(x, params))

    assert out.shape == (N, Cout, H, W), out.shape
    max_err = float(jnp.max(jnp.abs(out - ref)))
    assert jnp.allclose(out, ref, atol=2e-3, rtol=2e-3), max_err

    print("KERNEL_OK")
</pallas_src>

<mosaic_0001>
module attributes {stable_mosaic.version = 11 : i64} {
  func.func @kernel(%arg0: memref<2x16x64xf32, #tpu.memory_space<vmem>>, %arg1: memref<3x64x512xf32, #tpu.memory_space<vmem>>, %arg2: memref<1x512xf32, #tpu.memory_space<vmem>>, %arg3: memref<1x32xf32, #tpu.memory_space<vmem>>, %arg4: memref<1x32xf32, #tpu.memory_space<vmem>>, %arg5: memref<32x2xf32, #tpu.memory_space<vmem>>, %arg6: memref<2x32xf32, #tpu.memory_space<vmem>>, %arg7: memref<3x512x512xf32, #tpu.memory_space<vmem>>, %arg8: memref<1x512xf32, #tpu.memory_space<vmem>>, %arg9: memref<1x32xf32, #tpu.memory_space<vmem>>, %arg10: memref<1x32xf32, #tpu.memory_space<vmem>>, %arg11: memref<32x2xf32, #tpu.memory_space<vmem>>, %arg12: memref<2x32xf32, #tpu.memory_space<vmem>>, %arg13: memref<512x32xf32, #tpu.memory_space<vmem>>, %arg14: memref<32x512xf32, #tpu.memory_space<vmem>>, %arg15: memref<2x16x512xf32, #tpu.memory_space<vmem>>, %arg16: memref<2x18x64xf32, #tpu.memory_space<vmem>>, %arg17: memref<2x18x512xf32, #tpu.memory_space<vmem>>) attributes {dimension_semantics = [], scalar_prefetch = 0 : i64, scratch_operands = 2 : i64, tpu.core_type = #tpu.core_type<tc>} {
    %c0 = arith.constant 0 : index
    %c0_0 = arith.constant 0 : index
    %0 = vector.load %arg13[%c0, %c0_0] : memref<512x32xf32, #tpu.memory_space<vmem>>, vector<512x32xf32>
    %c0_1 = arith.constant 0 : index
    %c0_2 = arith.constant 0 : index
    %1 = vector.load %arg14[%c0_1, %c0_2] : memref<32x512xf32, #tpu.memory_space<vmem>>, vector<32x512xf32>
    %c0_3 = arith.constant 0 : index
    %c0_4 = arith.constant 0 : index
    %c0_5 = arith.constant 0 : index
    %2 = vector.load %arg0[%c0_3, %c0_4, %c0_5] : memref<2x16x64xf32, #tpu.memory_space<vmem>>, vector<2x16x64xf32>
    %cst = arith.constant 0.000000e+00 : f32
    %3 = vector.broadcast %cst : f32 to vector<2x18x64xf32>
    %c0_6 = arith.constant 0 : index
    %c0_7 = arith.constant 0 : index
    %c0_8 = arith.constant 0 : index
    %4 = vector.load %arg16[%c0_6, %c0_7, %c0_8] : memref<2x18x64xf32, #tpu.memory_space<vmem>>, vector<2x18x64xf32>
    tpu.vector_store %arg16[%c0_6, %c0_7, %c0_8], %3 {strides = array<i32>} : memref<2x18x64xf32, #tpu.memory_space<vmem>>, vector<2x18x64xf32>,
    %c0_9 = arith.constant 0 : index
    %c1 = arith.constant 1 : index
    %c0_10 = arith.constant 0 : index
    %5 = vector.load %arg16[%c0_9, %c1, %c0_10] : memref<2x18x64xf32, #tpu.memory_space<vmem>>, vector<2x16x64xf32>
    tpu.vector_store %arg16[%c0_9, %c1, %c0_10], %2 {strides = array<i32>} : memref<2x18x64xf32, #tpu.memory_space<vmem>>, vector<2x16x64xf32>,
    %c0_11 = arith.constant 0 : index
    %c0_12 = arith.constant 0 : index
    %c0_13 = arith.constant 0 : index
    %6 = vector.load %arg16[%c0_11, %c0_12, %c0_13] : memref<2x18x64xf32, #tpu.memory_space<vmem>>, vector<2x18x64xf32>
    %7 = vector.extract_strided_slice %6 {offsets = [0, 0, 0], sizes = [2, 16, 64], strides = [1, 1, 1]} : vector<2x18x64xf32> to vector<2x16x64xf32>
    %8 = vector.shape_cast %7 : vector<2x16x64xf32> to vector<32x64xf32>
    %c0_14 = arith.constant 0 : index
    %c0_15 = arith.constant 0 : index
    %c0_16 = arith.constant 0 : index
    %9 = vector.load %arg1[%c0_14, %c0_15, %c0_16] : memref<3x64x512xf32, #tpu.memory_space<vmem>>, vector<1x64x512xf32>
    %10 = vector.shape_cast %9 : vector<1x64x512xf32> to vector<64x512xf32>
    %cst_17 = arith.constant dense<0.000000e+00> : vector<32x512xf32>
    %11 = tpu.matmul %8, %10, %cst_17 {dimension_numbers = #tpu.dot_dimension_numbers<[1], [0], [0], [1], [0, 0, 1, 1], [], []>} : vector<32x64xf32>, vector<64x512xf32>, vector<32x512xf32> -> vector<32x512xf32>
    %12 = vector.extract_strided_slice %6 {offsets = [0, 1, 0], sizes = [2, 16, 64], strides = [1, 1, 1]} : vector<2x18x64xf32> to vector<2x16x64xf32>
    %13 = vector.shape_cast %12 : vector<2x16x64xf32> to vector<32x64xf32>
    %c1_18 = arith.constant 1 : index
    %c0_19 = arith.constant 0 : index
    %c0_20 = arith.constant 0 : index
    %14 = vector.load %arg1[%c1_18, %c0_19, %c0_20] : memref<3x64x512xf32, #tpu.memory_space<vmem>>, vector<1x64x512xf32>
    %15 = vector.shape_cast %14 : vector<1x64x512xf32> to vector<64x512xf32>
    %cst_21 = arith.constant dense<0.000000e+00> : vector<32x512xf32>
    %16 = tpu.matmul %13, %15, %cst_21 {dimension_numbers = #tpu.dot_dimension_numbers<[1], [0], [0], [1], [0, 0, 1, 1], [], []>} : vector<32x64xf32>, vector<64x512xf32>, vector<32x512xf32> -> vector<32x512xf32>
    %17 = arith.addf %11, %16 : vector<32x512xf32>
    %18 = vector.extract_strided_slice %6 {offsets = [0, 2, 0], sizes = [2, 16, 64], strides = [1, 1, 1]} : vector<2x18x64xf32> to vector<2x16x64xf32>
    %19 = vector.shape_cast %18 : vector<2x16x64xf32> to vector<32x64xf32>
    %c2 = arith.constant 2 : index
    %c0_22 = arith.constant 0 : index
    %c0_23 = arith.constant 0 : index
    %20 = vector.load %arg1[%c2, %c0_22, %c0_23] : memref<3x64x512xf32, #tpu.memory_space<vmem>>, vector<1x64x512xf32>
    %21 = vector.shape_cast %20 : vector<1x64x512xf32> to vector<64x512xf32>
    %cst_24 = arith.constant dense<0.000000e+00> : vector<32x512xf32>
    %22 = tpu.matmul %19, %21, %cst_24 {dimension_numbers = #tpu.dot_dimension_numbers<[1], [0], [0], [1], [0, 0, 1, 1], [], []>} : vector<32x64xf32>, vector<64x512xf32>, vector<32x512xf32> -> vector<32x512xf32>
    %23 = arith.addf %17, %22 : vector<32x512xf32>
    %c0_25 = arith.constant 0 : index
    %c0_26 = arith.constant 0 : index
    %24 = vector.load %arg2[%c0_25, %c0_26] : memref<1x512xf32, #tpu.memory_space<vmem>>, vector<1x512xf32>
    %25 = vector.broadcast %24 : vector<1x512xf32> to vector<32x512xf32>
    %26 = arith.addf %23, %25 : vector<32x512xf32>
    %cst_27 = arith.constant dense<0.000000e+00> : vector<512xf32>
    %27 = vector.multi_reduction <add>, %26, %cst_27 [0] : vector<32x512xf32> to vector<512xf32>
    %28 = vector.shape_cast %27 : vector<512xf32> to vector<1x512xf32>
    %29 = arith.mulf %26, %26 : vector<32x512xf32>
    %cst_28 = arith.constant dense<0.000000e+00> : vector<512xf32>
    %30 = vector.multi_reduction <add>, %29, %cst_28 [0] : vector<32x512xf32> to vector<512xf32>
    %31 = vector.shape_cast %30 : vector<512xf32> to vector<1x512xf32>
    %cst_29 = arith.constant dense<0.000000e+00> : vector<1x32xf32>
    %32 = tpu.matmul %28, %0, %cst_29 {dimension_numbers = #tpu.dot_dimension_numbers<[1], [0], [0], [1], [0, 0, 1, 1], [], []>} : vector<1x512xf32>, vector<512x32xf32>, vector<1x32xf32> -> vector<1x32xf32>
    %cst_30 = arith.constant 0.001953125 : f32
    %33 = vector.broadcast %cst_30 : f32 to vector<1x32xf32>
    %34 = arith.mulf %32, %33 : vector<1x32xf32>
    %cst_31 = arith.constant dense<0.000000e+00> : vector<1x32xf32>
    %35 = tpu.matmul %31, %0, %cst_31 {dimension_numbers = #tpu.dot_dimension_numbers<[1], [0], [0], [1], [0, 0, 1, 1], [], []>} : vector<1x512xf32>, vector<512x32xf32>, vector<1x32xf32> -> vector<1x32xf32>
    %cst_32 = arith.constant 0.001953125 : f32
    %36 = vector.broadcast %cst_32 : f32 to vector<1x32xf32>
    %37 = arith.mulf %35, %36 : vector<1x32xf32>
    %38 = arith.mulf %34, %34 : vector<1x32xf32>
    %39 = arith.subf %37, %38 : vector<1x32xf32>
    %c0_33 = arith.constant 0 : index
    %c0_34 = arith.constant 0 : index
    %40 = vector.load %arg3[%c0_33, %c0_34] : memref<1x32xf32, #tpu.memory_space<vmem>>, vector<1x32xf32>
    %cst_35 = arith.constant 9.99999974E-6 : f32
    %41 = vector.broadcast %cst_35 : f32 to vector<1x32xf32>
    %42 = arith.addf %39, %41 : vector<1x32xf32>
    %43 = math.rsqrt %42 : vector<1x32xf32>
    %44 = arith.mulf %40, %43 : vector<1x32xf32>
    %c0_36 = arith.constant 0 : index
    %c0_37 = arith.constant 0 : index
    %45 = vector.load %arg4[%c0_36, %c0_37] : memref<1x32xf32, #tpu.memory_space<vmem>>, vector<1x32xf32>
    %46 = arith.mulf %34, %44 : vector<1x32xf32>
    %47 = arith.subf %45, %46 : vector<1x32xf32>
    %cst_38 = arith.constant dense<0.000000e+00> : vector<1x512xf32>
    %48 = tpu.matmul %44, %1, %cst_38 {dimension_numbers = #tpu.dot_dimension_numbers<[1], [0], [0], [1], [0, 0, 1, 1], [], []>} : vector<1x32xf32>, vector<32x512xf32>, vector<1x512xf32> -> vector<1x512xf32>
    %cst_39 = arith.constant dense<0.000000e+00> : vector<1x512xf32>
    %49 = tpu.matmul %47, %1, %cst_39 {dimension_numbers = #tpu.dot_dimension_numbers<[1], [0], [0], [1], [0, 0, 1, 1], [], []>} : vector<1x32xf32>, vector<32x512xf32>, vector<1x512xf32> -> vector<1x512xf32>
    %50 = vector.broadcast %48 : vector<1x512xf32> to vector<32x512xf32>
    %51 = arith.mulf %26, %50 : vector<32x512xf32>
    %52 = vector.broadcast %49 : vector<1x512xf32> to vector<32x512xf32>
    %53 = arith.addf %51, %52 : vector<32x512xf32>
    %cst_40 = arith.constant 0.000000e+00 : f32
    %54 = vector.broadcast %cst_40 : f32 to vector<32x512xf32>
    %55 = arith.maximumf %53, %54 : vector<32x512xf32>
    %56 = vector.shape_cast %55 : vector<32x512xf32> to vector<2x16x512xf32>
    %cst_41 = arith.constant dense<0.000000e+00> : vector<2x512xf32>
    %57 = vector.multi_reduction <add>, %56, %cst_41 [1] : vector<2x16x512xf32> to vector<2x512xf32>
    %cst_42 = arith.constant dense<0.000000e+00> : vector<2x32xf32>
    %58 = tpu.matmul %57, %0, %cst_42 {dimension_numbers = #tpu.dot_dimension_numbers<[1], [0], [0], [1], [0, 0, 1, 1], [], []>} : vector<2x512xf32>, vector<512x32xf32>, vector<2x32xf32> -> vector<2x32xf32>
    %cst_43 = arith.constant 3.906250e-03 : f32
    %59 = vector.broadcast %cst_43 : f32 to vector<2x32xf32>
    %60 = arith.mulf %58, %59 : vector<2x32xf32>
    %c0_44 = arith.constant 0 : index
    %c0_45 = arith.constant 0 : index
    %61 = vector.load %arg5[%c0_44, %c0_45] : memref<32x2xf32, #tpu.memory_space<vmem>>, vector<32x2xf32>
    %cst_46 = arith.constant dense<0.000000e+00> : vector<2x2xf32>
    %62 = tpu.matmul %60, %61, %cst_46 {dimension_numbers = #tpu.dot_dimension_numbers<[1], [0], [0], [1], [0, 0, 1, 1], [], []>} : vector<2x32xf32>, vector<32x2xf32>, vector<2x2xf32> -> vector<2x2xf32>
    %cst_47 = arith.constant 0.000000e+00 : f32
    %63 = vector.broadcast %cst_47 : f32 to vector<2x2xf32>
    %64 = arith.maximumf %62, %63 : vector<2x2xf32>
    %c0_48 = arith.constant 0 : index
    %c0_49 = arith.constant 0 : index
    %65 = vector.load %arg6[%c0_48, %c0_49] : memref<2x32xf32, #tpu.memory_space<vmem>>, vector<2x32xf32>
    %cst_50 = arith.constant dense<0.000000e+00> : vector<2x32xf32>
    %66 = tpu.matmul %64, %65, %cst_50 {dimension_numbers = #tpu.dot_dimension_numbers<[1], [0], [0], [1], [0, 0, 1, 1], [], []>} : vector<2x2xf32>, vector<2x32xf32>, vector<2x32xf32> -> vector<2x32xf32>
    %67 = arith.negf %66 : vector<2x32xf32>
    %68 = math.exp %67 : vector<2x32xf32>
    %cst_51 = arith.constant 1.000000e+00 : f32
    %69 = vector.broadcast %cst_51 : f32 to vector<2x32xf32>
    %70 = arith.addf %69, %68 : vector<2x32xf32>
    %71 = arith.divf %69, %70 : vector<2x32xf32>
    %cst_52 = arith.constant dense<0.000000e+00> : vector<2x512xf32>
    %72 = tpu.matmul %71, %1, %cst_52 {dimension_numbers = #tpu.dot_dimension_numbers<[1], [0], [0], [1], [0, 0, 1, 1], [], []>} : vector<2x32xf32>, vector<32x512xf32>, vector<2x512xf32> -> vector<2x512xf32>
    %73 = vector.shape_cast %72 : vector<2x512xf32> to vector<2x1x512xf32>
    %74 = vector.broadcast %73 : vector<2x1x512xf32> to vector<2x16x512xf32>
    %75 = arith.mulf %56, %74 : vector<2x16x512xf32>
    %cst_53 = arith.constant 0.000000e+00 : f32
    %76 = vector.broadcast %cst_53 : f32 to vector<2x18x512xf32>
    %c0_54 = arith.constant 0 : index
    %c0_55 = arith.constant 0 : index
    %c0_56 = arith.constant 0 : index
    %77 = vector.load %arg17[%c0_54, %c0_55, %c0_56] : memref<2x18x512xf32, #tpu.memory_space<vmem>>, vector<2x18x512xf32>
    tpu.vector_store %arg17[%c0_54, %c0_55, %c0_56], %76 {strides = array<i32>} : memref<2x18x512xf32, #tpu.memory_space<vmem>>, vector<2x18x512xf32>,
    %c0_57 = arith.constant 0 : index
    %c1_58 = arith.constant 1 : index
    %c0_59 = arith.constant 0 : index
    %78 = vector.load %arg17[%c0_57, %c1_58, %c0_59] : memref<2x18x512xf32, #tpu.memory_space<vmem>>, vector<2x16x512xf32>
    tpu.vector_store %arg17[%c0_57, %c1_58, %c0_59], %75 {strides = array<i32>} : memref<2x18x512xf32, #tpu.memory_space<vmem>>, vector<2x16x512xf32>,
    %c0_60 = arith.constant 0 : index
    %c0_61 = arith.constant 0 : index
    %c0_62 = arith.constant 0 : index
    %79 = vector.load %arg17[%c0_60, %c0_61, %c0_62] : memref<2x18x512xf32, #tpu.memory_space<vmem>>, vector<2x18x512xf32>
    %80 = vector.extract_strided_slice %79 {offsets = [0, 0, 0], sizes = [2, 16, 512], strides = [1, 1, 1]} : vector<2x18x512xf32> to vector<2x16x512xf32>
    %81 = vector.shape_cast %80 : vector<2x16x512xf32> to vector<32x512xf32>
    %c0_63 = arith.constant 0 : index
    %c0_64 = arith.constant 0 : index
    %c0_65 = arith.constant 0 : index
    %82 = vector.load %arg7[%c0_63, %c0_64, %c0_65] : memref<3x512x512xf32, #tpu.memory_space<vmem>>, vector<1x512x512xf32>
    %83 = vector.shape_cast %82 : vector<1x512x512xf32> to vector<512x512xf32>
    %cst_66 = arith.constant dense<0.000000e+00> : vector<32x512xf32>
    %84 = tpu.matmul %81, %83, %cst_66 {dimension_numbers = #tpu.dot_dimension_numbers<[1], [0], [0], [1], [0, 0, 1, 1], [], []>} : vector<32x512xf32>, vector<512x512xf32>, vector<32x512xf32> -> vector<32x512xf32>
    %85 = vector.extract_strided_slice %79 {offsets = [0, 1, 0], sizes = [2, 16, 512], strides = [1, 1, 1]} : vector<2x18x512xf32> to vector<2x16x512xf32>
    %86 = vector.shape_cast %85 : vector<2x16x512xf32> to vector<32x512xf32>
    %c1_67 = arith.constant 1 : index
    %c0_68 = arith.constant 0 : index
    %c0_69 = arith.constant 0 : index
    %87 = vector.load %arg7[%c1_67, %c0_68, %c0_69] : memref<3x512x512xf32, #tpu.memory_space<vmem>>, vector<1x512x512xf32>
    %88 = vector.shape_cast %87 : vector<1x512x512xf32> to vector<512x512xf32>
    %cst_70 = arith.constant dense<0.000000e+00> : vector<32x512xf32>
    %89 = tpu.matmul %86, %88, %cst_70 {dimension_numbers = #tpu.dot_dimension_numbers<[1], [0], [0], [1], [0, 0, 1, 1], [], []>} : vector<32x512xf32>, vector<512x512xf32>, vector<32x512xf32> -> vector<32x512xf32>
    %90 = arith.addf %84, %89 : vector<32x512xf32>
    %91 = vector.extract_strided_slice %79 {offsets = [0, 2, 0], sizes = [2, 16, 512], strides = [1, 1, 1]} : vector<2x18x512xf32> to vector<2x16x512xf32>
    %92 = vector.shape_cast %91 : vector<2x16x512xf32> to vector<32x512xf32>
    %c2_71 = arith.constant 2 : index
    %c0_72 = arith.constant 0 : index
    %c0_73 = arith.constant 0 : index
    %93 = vector.load %arg7[%c2_71, %c0_72, %c0_73] : memref<3x512x512xf32, #tpu.memory_space<vmem>>, vector<1x512x512xf32>
    %94 = vector.shape_cast %93 : vector<1x512x512xf32> to vector<512x512xf32>
    %cst_74 = arith.constant dense<0.000000e+00> : vector<32x512xf32>
    %95 = tpu.matmul %92, %94, %cst_74 {dimension_numbers = #tpu.dot_dimension_numbers<[1], [0], [0], [1], [0, 0, 1, 1], [], []>} : vector<32x512xf32>, vector<512x512xf32>, vector<32x512xf32> -> vector<32x512xf32>
    %96 = arith.addf %90, %95 : vector<32x512xf32>
    %c0_75 = arith.constant 0 : index
    %c0_76 = arith.constant 0 : index
    %97 = vector.load %arg8[%c0_75, %c0_76] : memref<1x512xf32, #tpu.memory_space<vmem>>, vector<1x512xf32>
    %98 = vector.broadcast %97 : vector<1x512xf32> to vector<32x512xf32>
    %99 = arith.addf %96, %98 : vector<32x512xf32>
    %cst_77 = arith.constant dense<0.000000e+00> : vector<512xf32>
    %100 = vector.multi_reduction <add>, %99, %cst_77 [0] : vector<32x512xf32> to vector<512xf32>
    %101 = vector.shape_cast %100 : vector<512xf32> to vector<1x512xf32>
    %102 = arith.mulf %99, %99 : vector<32x512xf32>
    %cst_78 = arith.constant dense<0.000000e+00> : vector<512xf32>
    %103 = vector.multi_reduction <add>, %102, %cst_78 [0] : vector<32x512xf32> to vector<512xf32>
    %104 = vector.shape_cast %103 : vector<512xf32> to vector<1x512xf32>
    %cst_79 = arith.constant dense<0.000000e+00> : vector<1x32xf32>
    %105 = tpu.matmul %101, %0, %cst_79 {dimension_numbers = #tpu.dot_dimension_numbers<[1], [0], [0], [1], [0, 0, 1, 1], [], []>} : vector<1x512xf32>, vector<512x32xf32>, vector<1x32xf32> -> vector<1x32xf32>
    %cst_80 = arith.constant 0.001953125 : f32
    %106 = vector.broadcast %cst_80 : f32 to vector<1x32xf32>
    %107 = arith.mulf %105, %106 : vector<1x32xf32>
    %cst_81 = arith.constant dense<0.000000e+00> : vector<1x32xf32>
    %108 = tpu.matmul %104, %0, %cst_81 {dimension_numbers = #tpu.dot_dimension_numbers<[1], [0], [0], [1], [0, 0, 1, 1], [], []>} : vector<1x512xf32>, vector<512x32xf32>, vector<1x32xf32> -> vector<1x32xf32>
    %cst_82 = arith.constant 0.001953125 : f32
    %109 = vector.broadcast %cst_82 : f32 to vector<1x32xf32>
    %110 = arith.mulf %108, %109 : vector<1x32xf32>
    %111 = arith.mulf %107, %107 : vector<1x32xf32>
    %112 = arith.subf %110, %111 : vector<1x32xf32>
    %c0_83 = arith.constant 0 : index
    %c0_84 = arith.constant 0 : index
    %113 = vector.load %arg9[%c0_83, %c0_84] : memref<1x32xf32, #tpu.memory_space<vmem>>, vector<1x32xf32>
    %cst_85 = arith.constant 9.99999974E-6 : f32
    %114 = vector.broadcast %cst_85 : f32 to vector<1x32xf32>
    %115 = arith.addf %112, %114 : vector<1x32xf32>
    %116 = math.rsqrt %115 : vector<1x32xf32>
    %117 = arith.mulf %113, %116 : vector<1x32xf32>
    %c0_86 = arith.constant 0 : index
    %c0_87 = arith.constant 0 : index
    %118 = vector.load %arg10[%c0_86, %c0_87] : memref<1x32xf32, #tpu.memory_space<vmem>>, vector<1x32xf32>
    %119 = arith.mulf %107, %117 : vector<1x32xf32>
    %120 = arith.subf %118, %119 : vector<1x32xf32>
    %cst_88 = arith.constant dense<0.000000e+00> : vector<1x512xf32>
    %121 = tpu.matmul %117, %1, %cst_88 {dimension_numbers = #tpu.dot_dimension_numbers<[1], [0], [0], [1], [0, 0, 1, 1], [], []>} : vector<1x32xf32>, vector<32x512xf32>, vector<1x512xf32> -> vector<1x512xf32>
    %cst_89 = arith.constant dense<0.000000e+00> : vector<1x512xf32>
    %122 = tpu.matmul %120, %1, %cst_89 {dimension_numbers = #tpu.dot_dimension_numbers<[1], [0], [0], [1], [0, 0, 1, 1], [], []>} : vector<1x32xf32>, vector<32x512xf32>, vector<1x512xf32> -> vector<1x512xf32>
    %123 = vector.broadcast %121 : vector<1x512xf32> to vector<32x512xf32>
    %124 = arith.mulf %99, %123 : vector<32x512xf32>
    %125 = vector.broadcast %122 : vector<1x512xf32> to vector<32x512xf32>
    %126 = arith.addf %124, %125 : vector<32x512xf32>
    %cst_90 = arith.constant 0.000000e+00 : f32
    %127 = vector.broadcast %cst_90 : f32 to vector<32x512xf32>
    %128 = arith.maximumf %126, %127 : vector<32x512xf32>
    %129 = vector.shape_cast %128 : vector<32x512xf32> to vector<2x16x512xf32>
    %cst_91 = arith.constant dense<0.000000e+00> : vector<2x512xf32>
    %130 = vector.multi_reduction <add>, %129, %cst_91 [1] : vector<2x16x512xf32> to vector<2x512xf32>
    %cst_92 = arith.constant dense<0.000000e+00> : vector<2x32xf32>
    %131 = tpu.matmul %130, %0, %cst_92 {dimension_numbers = #tpu.dot_dimension_numbers<[1], [0], [0], [1], [0, 0, 1, 1], [], []>} : vector<2x512xf32>, vector<512x32xf32>, vector<2x32xf32> -> vector<2x32xf32>
    %cst_93 = arith.constant 3.906250e-03 : f32
    %132 = vector.broadcast %cst_93 : f32 to vector<2x32xf32>
    %133 = arith.mulf %131, %132 : vector<2x32xf32>
    %c0_94 = arith.constant 0 : index
    %c0_95 = arith.constant 0 : index
    %134 = vector.load %arg11[%c0_94, %c0_95] : memref<32x2xf32, #tpu.memory_space<vmem>>, vector<32x2xf32>
    %cst_96 = arith.constant dense<0.000000e+00> : vector<2x2xf32>
    %135 = tpu.matmul %133, %134, %cst_96 {dimension_numbers = #tpu.dot_dimension_numbers<[1], [0], [0], [1], [0, 0, 1, 1], [], []>} : vector<2x32xf32>, vector<32x2xf32>, vector<2x2xf32> -> vector<2x2xf32>
    %cst_97 = arith.constant 0.000000e+00 : f32
    %136 = vector.broadcast %cst_97 : f32 to vector<2x2xf32>
    %137 = arith.maximumf %135, %136 : vector<2x2xf32>
    %c0_98 = arith.constant 0 : index
    %c0_99 = arith.constant 0 : index
    %138 = vector.load %arg12[%c0_98, %c0_99] : memref<2x32xf32, #tpu.memory_space<vmem>>, vector<2x32xf32>
    %cst_100 = arith.constant dense<0.000000e+00> : vector<2x32xf32>
    %139 = tpu.matmul %137, %138, %cst_100 {dimension_numbers = #tpu.dot_dimension_numbers<[1], [0], [0], [1], [0, 0, 1, 1], [], []>} : vector<2x2xf32>, vector<2x32xf32>, vector<2x32xf32> -> vector<2x32xf32>
    %140 = arith.negf %139 : vector<2x32xf32>
    %141 = math.exp %140 : vector<2x32xf32>
    %cst_101 = arith.constant 1.000000e+00 : f32
    %142 = vector.broadcast %cst_101 : f32 to vector<2x32xf32>
    %143 = arith.addf %142, %141 : vector<2x32xf32>
    %144 = arith.divf %142, %143 : vector<2x32xf32>
    %cst_102 = arith.constant dense<0.000000e+00> : vector<2x512xf32>
    %145 = tpu.matmul %144, %1, %cst_102 {dimension_numbers = #tpu.dot_dimension_numbers<[1], [0], [0], [1], [0, 0, 1, 1], [], []>} : vector<2x32xf32>, vector<32x512xf32>, vector<2x512xf32> -> vector<2x512xf32>
    %146 = vector.shape_cast %145 : vector<2x512xf32> to vector<2x1x512xf32>
    %147 = vector.broadcast %146 : vector<2x1x512xf32> to vector<2x16x512xf32>
    %148 = arith.mulf %129, %147 : vector<2x16x512xf32>
    %c0_103 = arith.constant 0 : index
    %c0_104 = arith.constant 0 : index
    %c0_105 = arith.constant 0 : index
    %149 = vector.load %arg15[%c0_103, %c0_104, %c0_105] : memref<2x16x512xf32, #tpu.memory_space<vmem>>, vector<2x16x512xf32>
    tpu.vector_store %arg15[%c0_103, %c0_104, %c0_105], %148 {strides = array<i32>} : memref<2x16x512xf32, #tpu.memory_space<vmem>>, vector<2x16x512xf32>,
    return
  }
}

</mosaic_0001>

<llo_original>
// kernel: tpu_custom_call.1
$region0: #{tpu_custom_call.1}
  #allocation0 [shape = 'u32[]', space=smem, size = 0x4, offset = 0x4, fixed_abs, tag = 'smem constant byte address 0x4 - core index']
  #allocation1 [shape = 'u32[72,128]{1,0:T(1,128)}', space=vmem, size = 0x9000, scoped, tag = 'internal scratch']
  #allocation2 [shape = 'f32[2,18,64]{2,1,0:T(8,128)}', space=vmem, size = 0x6000, scoped, tag = 'scratch operand']
  #allocation3 [shape = 'f32[2,18,512]{2,1,0:T(8,128)}', space=vmem, size = 0x18000, scoped, tag = 'scratch operand']
  %s0 = inlined_call_operand.hbm [shape: f32[2,16,64], index: 0, kind: input, shape index: {}]
  %s1 = inlined_call_operand.hbm [shape: f32[3,64,512], index: 1, kind: input, shape index: {}]
  %s2 = inlined_call_operand.hbm [shape: f32[1,512], index: 2, kind: input, shape index: {}]
  %s3 = inlined_call_operand.hbm [shape: f32[1,32], index: 3, kind: input, shape index: {}]
  %s4 = inlined_call_operand.hbm [shape: f32[1,32], index: 4, kind: input, shape index: {}]
  %s5 = inlined_call_operand.vmem [shape: f32[32,2], index: 5, kind: input, shape index: {}]
  %s6 = inlined_call_operand.hbm [shape: f32[2,32], index: 6, kind: input, shape index: {}]
  %s7 = inlined_call_operand.hbm [shape: f32[3,512,512], index: 7, kind: input, shape index: {}]
  %s8 = inlined_call_operand.hbm [shape: f32[1,512], index: 8, kind: input, shape index: {}]
  %s9 = inlined_call_operand.hbm [shape: f32[1,32], index: 9, kind: input, shape index: {}]
  %s10 = inlined_call_operand.hbm [shape: f32[1,32], index: 10, kind: input, shape index: {}]
  %s11 = inlined_call_operand.vmem [shape: f32[32,2], index: 11, kind: input, shape index: {}]
  %s12 = inlined_call_operand.hbm [shape: f32[2,32], index: 12, kind: input, shape index: {}]
  %s13 = inlined_call_operand.vmem [shape: f32[512,32], index: 13, kind: input, shape index: {}]
  %s14 = inlined_call_operand.hbm [shape: f32[32,512], index: 14, kind: input, shape index: {}]
  %s15 = inlined_call_operand.hbm [shape: f32[2,16,512], index: 15, kind: output, shape index: {}]
  %s16 = sld [smem:[#allocation0]]
  $region118: #{tpu_custom_call.1} parent=0
    _
  %s18 = ssub.s32 1, %s16
  %s19 = scalar_select 0, %s18, %s16
  $region1: #{tpu_custom_call.1} parent=0
    #allocation4 [shape = 'u8[16384]{0}', space=vmem, size = 0x4000, scoped, tag = 'input window, operand 0, single buffered']
    #allocation5 [shape = 's32[1]{0}', space=sflag, size = 0x4, scoped, tag = 'scoped memory for tpu_custom_call.1']
    #allocation6 [shape = 's32[1]{0}', space=sflag, size = 0x4, scoped, tag = 'scoped memory for tpu_custom_call.1']
    #allocation7 [shape = 'u8[393216]{0}', space=vmem, size = 0x60000, scoped, tag = 'input window, operand 1, single buffered']
    #allocation8 [shape = 's32[1]{0}', space=sflag, size = 0x4, scoped, tag = 'scoped memory for tpu_custom_call.1']
    #allocation9 [shape = 'u8[2048]{0}', space=vmem, size = 0x800, scoped, tag = 'input window, operand 2, single buffered']
    #allocation10 [shape = 'u8[512]{0}', space=vmem, size = 0x400, scoped, tag = 'input window, operand 3, single buffered']
    #allocation11 [shape = 's32[1]{0}', space=sflag, size = 0x4, scoped, tag = 'scoped memory for tpu_custom_call.1']
    #allocation12 [shape = 'u8[512]{0}', space=vmem, size = 0x400, scoped, tag = 'input window, operand 4, single buffered']
    #allocation13 [shape = 'u8[1024]{0}', space=vmem, size = 0x400, scoped, tag = 'input window, operand 6, single buffered']
    #allocation14 [shape = 's32[1]{0}', space=sflag, size = 0x4, scoped, tag = 'scoped memory for tpu_custom_call.1']
    #allocation15 [shape = 'u8[3145728]{0}', space=vmem, size = 0x300000, scoped, tag = 'input window, operand 7, single buffered']
    #allocation16 [shape = 'u8[2048]{0}', space=vmem, size = 0x800, scoped, tag = 'input window, operand 8, single buffered']
    #allocation17 [shape = 's32[1]{0}', space=sflag, size = 0x4, scoped, tag = 'scoped memory for tpu_custom_call.1']
    #allocation18 [shape = 'u8[512]{0}', space=vmem, size = 0x400, scoped, tag = 'input window, operand 9, single buffered']
    #allocation19 [shape = 'u8[512]{0}', space=vmem, size = 0x400, scoped, tag = 'input window, operand 10, single buffered']
    #allocation20 [shape = 's32[1]{0}', space=sflag, size = 0x4, scoped, tag = 'scoped memory for tpu_custom_call.1']
    #allocation21 [shape = 'u8[1024]{0}', space=vmem, size = 0x400, scoped, tag = 'input window, operand 12, single buffered']
    #allocation22 [shape = 'u8[65536]{0}', space=vmem, size = 0x10000, scoped, tag = 'input window, operand 14, single buffered']
    #allocation23 [shape = 's32[1]{0}', space=sflag, size = 0x4, scoped, tag = 'scoped memory for tpu_custom_call.1']
    #allocation24 [shape = 'u8[65536]{0}', space=vmem, size = 0x10000, scoped, tag = 'output window, operand 0, single buffered']
    %20 = vsyncpa [#allocation5], 0
    %21 = vsyncpa [#allocation8], 0
    %22 = vsyncpa [#allocation11], 0
    %23 = vsyncpa [#allocation14], 0
    %24 = vsyncpa [#allocation17], 0
    %25 = vsyncpa [#allocation20], 0
    %26 = vsyncpa [#allocation23], 0
    %27 = vsyncpa [#allocation6], 0
    // Predicated region
    $region2: #{tpu_custom_call.1} parent=1 // pred_check
      _
    $region3: #{tpu_custom_call.1} parent=1 // pred_check_branch
      %29 = sbr.rel (0) target = $region5
    $region4: #{tpu_custom_call.1} parent=1 // pred_region
      %31 = vsyncadd [#allocation5], 0
      %s32 = sshll.u32 %s0, 4
      %s33 = int_to_ptr.hbm [resolvable:$true] %s32
      %s34 = sshll.u32 [#allocation4], 4
      %s35 = int_to_ptr.vmem [resolvable:$true] %s34
      %40 = dma.hbm_to_vmem [thread:$0]  %s33, 512, %s35, [#allocation5], 128, 128, 8
    $region5: #{tpu_custom_call.1} parent=1 // pred_fallthru
      _
    // Predicated region
    $region6: #{tpu_custom_call.1} parent=1 // pred_check
      _
    $region7: #{tpu_custom_call.1} parent=1 // pred_check_branch
      %42 = sbr.rel (0) target = $region9
    $region8: #{tpu_custom_call.1} parent=1 // pred_region
      %44 = vsyncadd [#allocation8], 0
      %s45 = sshll.u32 %s1, 4
      %s46 = int_to_ptr.hbm [resolvable:$true] %s45
      %s47 = sshll.u32 [#allocation7], 4
      %s48 = int_to_ptr.vmem [resolvable:$true] %s47
      %53 = dma.hbm_to_vmem [thread:$0]  %s46, 12288, %s48, [#allocation8], 512, 512, 32
    $region9: #{tpu_custom_call.1} parent=1 // pred_fallthru
      _
    // Predicated region
    $region10: #{tpu_custom_call.1} parent=1 // pred_check
      _
    $region11: #{tpu_custom_call.1} parent=1 // pred_check_branch
      %55 = sbr.rel (0) target = $region13
    $region12: #{tpu_custom_call.1} parent=1 // pred_region
      %57 = vsyncadd [#allocation8], 0
      %s59 = sshll.u32 %s2, 4
      %s60 = int_to_ptr.hbm [resolvable:$true] %s59
      %s61 = sshll.u32 [#allocation9], 4
      %s62 = int_to_ptr.vmem [resolvable:$true] %s61
      %64 = dma.hbm_to_vmem [thread:$0]  %s60, 64, %s62, [#allocation8]
    $region13: #{tpu_custom_call.1} parent=1 // pred_fallthru
      _
    // Predicated region
    $region14: #{tpu_custom_call.1} parent=1 // pred_check
      _
    $region15: #{tpu_custom_call.1} parent=1 // pred_check_branch
      %66 = sbr.rel (0) target = $region17
    $region16: #{tpu_custom_call.1} parent=1 // pred_region
      %68 = vsyncadd [#allocation11], 0
      %s70 = sshll.u32 %s3, 4
      %s71 = int_to_ptr.hbm [resolvable:$true] %s70
      %s72 = sshll.u32 [#allocation10], 4
      %s73 = int_to_ptr.vmem [resolvable:$true] %s72
      %75 = dma.hbm_to_vmem [thread:$0]  %s71, 16, %s73, [#allocation11]
    $region17: #{tpu_custom_call.1} parent=1 // pred_fallthru
      _
    // Predicated region
    $region18: #{tpu_custom_call.1} parent=1 // pred_check
      _
    $region19: #{tpu_custom_call.1} parent=1 // pred_check_branch
      %77 = sbr.rel (0) target = $region21
    $region20: #{tpu_custom_call.1} parent=1 // pred_region
      %79 = vsyncadd [#allocation11], 0
      %s81 = sshll.u32 %s4, 4
      %s82 = int_to_ptr.hbm [resolvable:$true] %s81
      %s83 = sshll.u32 [#allocation12], 4
      %s84 = int_to_ptr.vmem [resolvable:$true] %s83
      %86 = dma.hbm_to_vmem [thread:$0]  %s82, 16, %s84, [#allocation11]
    $region21: #{tpu_custom_call.1} parent=1 // pred_fallthru
      _
    // Predicated region
    $region22: #{tpu_custom_call.1} parent=1 // pred_check
      _
    $region23: #{tpu_custom_call.1} parent=1 // pred_check_branch
      %88 = sbr.rel (0) target = $region25
    $region24: #{tpu_custom_call.1} parent=1 // pred_region
      _
    $region25: #{tpu_custom_call.1} parent=1 // pred_fallthru
      _
    // Predicated region
    $region26: #{tpu_custom_call.1} parent=1 // pred_check
      _
    $region27: #{tpu_custom_call.1} parent=1 // pred_check_branch
      %90 = sbr.rel (0) target = $region29
    $region28: #{tpu_custom_call.1} parent=1 // pred_region
      %92 = vsyncadd [#allocation14], 0
      %s94 = sshll.u32 %s6, 4
      %s95 = int_to_ptr.hbm [resolvable:$true] %s94
      %s96 = sshll.u32 [#allocation13], 4
      %s97 = int_to_ptr.vmem [resolvable:$true] %s96
      %99 = dma.hbm_to_vmem [thread:$0]  %s95, 32, %s97, [#allocation14]
    $region29: #{tpu_custom_call.1} parent=1 // pred_fallthru
      _
    // Predicated region
    $region30: #{tpu_custom_call.1} parent=1 // pred_check
      _
    $region31: #{tpu_custom_call.1} parent=1 // pred_check_branch
      %101 = sbr.rel (0) target = $region33
    $region32: #{tpu_custom_call.1} parent=1 // pred_region
      %103 = vsyncadd [#allocation14], 0
      %s104 = sshll.u32 %s7, 4
      %s105 = int_to_ptr.hbm [resolvable:$true] %s104
      %s106 = sshll.u32 [#allocation15], 4
      %s107 = int_to_ptr.vmem [resolvable:$true] %s106
      %112 = dma.hbm_to_vmem [thread:$0]  %s105, 98304, %s107, [#allocation14], 512, 512, 32
    $region33: #{tpu_custom_call.1} parent=1 // pred_fallthru
      _
    // Predicated region
    $region34: #{tpu_custom_call.1} parent=1 // pred_check
      _
    $region35: #{tpu_custom_call.1} parent=1 // pred_check_branch
      %114 = sbr.rel (0) target = $region37
    $region36: #{tpu_custom_call.1} parent=1 // pred_region
      %116 = vsyncadd [#allocation17], 0
      %s118 = sshll.u32 %s8, 4
      %s119 = int_to_ptr.hbm [resolvable:$true] %s118
      %s120 = sshll.u32 [#allocation16], 4
      %s121 = int_to_ptr.vmem [resolvable:$true] %s120
      %123 = dma.hbm_to_vmem [thread:$0]  %s119, 64, %s121, [#allocation17]
    $region37: #{tpu_custom_call.1} parent=1 // pred_fallthru
      _
    // Predicated region
    $region38: #{tpu_custom_call.1} parent=1 // pred_check
      _
    $region39: #{tpu_custom_call.1} parent=1 // pred_check_branch
      %125 = sbr.rel (0) target = $region41
    $region40: #{tpu_custom_call.1} parent=1 // pred_region
      %127 = vsyncadd [#allocation17], 0
      %s129 = sshll.u32 %s9, 4
      %s130 = int_to_ptr.hbm [resolvable:$true] %s129
      %s131 = sshll.u32 [#allocation18], 4
      %s132 = int_to_ptr.vmem [resolvable:$true] %s131
      %134 = dma.hbm_to_vmem [thread:$0]  %s130, 16, %s132, [#allocation17]
    $region41: #{tpu_custom_call.1} parent=1 // pred_fallthru
      _
    // Predicated region
    $region42: #{tpu_custom_call.1} parent=1 // pred_check
      _
    $region43: #{tpu_custom_call.1} parent=1 // pred_check_branch
      %136 = sbr.rel (0) target = $region45
    $region44: #{tpu_custom_call.1} parent=1 // pred_region
      %138 = vsyncadd [#allocation20], 0
      %s140 = sshll.u32 %s10, 4
      %s141 = int_to_ptr.hbm [resolvable:$true] %s140
      %s142 = sshll.u32 [#allocation19], 4
      %s143 = int_to_ptr.vmem [resolvable:$true] %s142
      %145 = dma.hbm_to_vmem [thread:$0]  %s141, 16, %s143, [#allocation20]
    $region45: #{tpu_custom_call.1} parent=1 // pred_fallthru
      _
    // Predicated region
    $region46: #{tpu_custom_call.1} parent=1 // pred_check
      _
    $region47: #{tpu_custom_call.1} parent=1 // pred_check_branch
      %147 = sbr.rel (0) target = $region49
    $region48: #{tpu_custom_call.1} parent=1 // pred_region
      _
    $region49: #{tpu_custom_call.1} parent=1 // pred_fallthru
      _
    // Predicated region
    $region50: #{tpu_custom_call.1} parent=1 // pred_check
      _
    $region51: #{tpu_custom_call.1} parent=1 // pred_check_branch
      %149 = sbr.rel (0) target = $region53
    $region52: #{tpu_custom_call.1} parent=1 // pred_region
      %151 = vsyncadd [#allocation20], 0
      %s153 = sshll.u32 %s12, 4
      %s154 = int_to_ptr.hbm [resolvable:$true] %s153
      %s155 = sshll.u32 [#allocation21], 4
      %s156 = int_to_ptr.vmem [resolvable:$true] %s155
      %158 = dma.hbm_to_vmem [thread:$0]  %s154, 32, %s156, [#allocation20]
    $region53: #{tpu_custom_call.1} parent=1 // pred_fallthru
      _
    // Predicated region
    $region54: #{tpu_custom_call.1} parent=1 // pred_check
      _
    $region55: #{tpu_custom_call.1} parent=1 // pred_check_branch
      %160 = sbr.rel (0) target = $region57
    $region56: #{tpu_custom_call.1} parent=1 // pred_region
      _
    $region57: #{tpu_custom_call.1} parent=1 // pred_fallthru
      _
    // Predicated region
    $region58: #{tpu_custom_call.1} parent=1 // pred_check
      _
    $region59: #{tpu_custom_call.1} parent=1 // pred_check_branch
      %162 = sbr.rel (0) target = $region61
    $region60: #{tpu_custom_call.1} parent=1 // pred_region
      %164 = vsyncadd [#allocation23], 0
      %s165 = sshll.u32 %s14, 4
      %s166 = int_to_ptr.hbm [resolvable:$true] %s165
      %s167 = sshll.u32 [#allocation22], 4
      %s168 = int_to_ptr.vmem [resolvable:$true] %s167
      %173 = dma.hbm_to_vmem [thread:$0]  %s166, 2048, %s168, [#allocation23], 512, 512, 32
    $region61: #{tpu_custom_call.1} parent=1 // pred_fallthru
      _
    // Predicated region
    $region62: #{tpu_custom_call.1} parent=1 // pred_check
      _
    $region63: #{tpu_custom_call.1} parent=1 // pred_check_branch
      %175 = sbr.rel (0) target = $region65
    $region64: #{tpu_custom_call.1} parent=1 // pred_region
      %177 = dma.done [#allocation5], 512
    $region65: #{tpu_custom_call.1} parent=1 // pred_fallthru
      _
    // Predicated region
    $region66: #{tpu_custom_call.1} parent=1 // pred_check
      _
    $region67: #{tpu_custom_call.1} parent=1 // pred_check_branch
      %179 = sbr.rel (0) target = $region69
    $region68: #{tpu_custom_call.1} parent=1 // pred_region
      %181 = dma.done [#allocation8], 12288
    $region69: #{tpu_custom_call.1} parent=1 // pred_fallthru
      _
    // Predicated region
    $region70: #{tpu_custom_call.1} parent=1 // pred_check
      _
    $region71: #{tpu_custom_call.1} parent=1 // pred_check_branch
      %183 = sbr.rel (0) target = $region73
    $region72: #{tpu_custom_call.1} parent=1 // pred_region
      %185 = dma.done [#allocation8], 64
    $region73: #{tpu_custom_call.1} parent=1 // pred_fallthru
      _
    // Predicated region
    $region74: #{tpu_custom_call.1} parent=1 // pred_check
      _
    $region75: #{tpu_custom_call.1} parent=1 // pred_check_branch
      %187 = sbr.rel (0) target = $region77
    $region76: #{tpu_custom_call.1} parent=1 // pred_region
      %189 = dma.done [#allocation11], 16
    $region77: #{tpu_custom_call.1} parent=1 // pred_fallthru
      _
    // Predicated region
    $region78: #{tpu_custom_call.1} parent=1 // pred_check
      _
    $region79: #{tpu_custom_call.1} parent=1 // pred_check_branch
      %191 = sbr.rel (0) target = $region81
    $region80: #{tpu_custom_call.1} parent=1 // pred_region
      %193 = dma.done [#allocation11], 16
    $region81: #{tpu_custom_call.1} parent=1 // pred_fallthru
      _
    // Predicated region
    $region82: #{tpu_custom_call.1} parent=1 // pred_check
      _
    $region83: #{tpu_custom_call.1} parent=1 // pred_check_branch
      %195 = sbr.rel (0) target = $region85
    $region84: #{tpu_custom_call.1} parent=1 // pred_region
      %197 = dma.done [#allocation14], 32
    $region85: #{tpu_custom_call.1} parent=1 // pred_fallthru
      _
    // Predicated region
    $region86: #{tpu_custom_call.1} parent=1 // pred_check
      _
    $region87: #{tpu_custom_call.1} parent=1 // pred_check_branch
      %199 = sbr.rel (0) target = $region89
    $region88: #{tpu_custom_call.1} parent=1 // pred_region
      %201 = dma.done [#allocation14], 98304
    $region89: #{tpu_custom_call.1} parent=1 // pred_fallthru
      _
    // Predicated region
    $region90: #{tpu_custom_call.1} parent=1 // pred_check
      _
    $region91: #{tpu_custom_call.1} parent=1 // pred_check_branch
      %203 = sbr.rel (0) target = $region93
    $region92: #{tpu_custom_call.1} parent=1 // pred_region
      %205 = dma.done [#allocation17], 64
    $region93: #{tpu_custom_call.1} parent=1 // pred_fallthru
      _
    // Predicated region
    $region94: #{tpu_custom_call.1} parent=1 // pred_check
      _
    $region95: #{tpu_custom_call.1} parent=1 // pred_check_branch
      %207 = sbr.rel (0) target = $region97
    $region96: #{tpu_custom_call.1} parent=1 // pred_region
      %209 = dma.done [#allocation17], 16
    $region97: #{tpu_custom_call.1} parent=1 // pred_fallthru
      _
    // Predicated region
    $region98: #{tpu_custom_call.1} parent=1 // pred_check
      _
    $region99: #{tpu_custom_call.1} parent=1 // pred_check_branch
      %211 = sbr.rel (0) target = $region101
    $region100: #{tpu_custom_call.1} parent=1 // pred_region
      %213 = dma.done [#allocation20], 16
    $region101: #{tpu_custom_call.1} parent=1 // pred_fallthru
      _
    // Predicated region
    $region102: #{tpu_custom_call.1} parent=1 // pred_check
      _
    $region103: #{tpu_custom_call.1} parent=1 // pred_check_branch
      %215 = sbr.rel (0) target = $region105
    $region104: #{tpu_custom_call.1} parent=1 // pred_region
      %217 = dma.done [#allocation20], 32
    $region105: #{tpu_custom_call.1} parent=1 // pred_fallthru
      _
    // Predicated region
    $region106: #{tpu_custom_call.1} parent=1 // pred_check
      _
    $region107: #{tpu_custom_call.1} parent=1 // pred_check_branch
      %219 = sbr.rel (0) target = $region109
    $region108: #{tpu_custom_call.1} parent=1 // pred_region
      %221 = dma.done [#allocation23], 2048
    $region109: #{tpu_custom_call.1} parent=1 // pred_fallthru
      _
    %v222 = vld [vmem:[%s13] sm:$0xff]
    %v223 = vld [vmem:[%s13 + $0x8] sm:$0xff]
    %v224 = vld [vmem:[%s13 + $0x10] sm:$0xff]
    %v225 = vld [vmem:[%s13 + $0x18] sm:$0xff]
    %v226 = vld [vmem:[%s13 + $0x20] sm:$0xff]
    %v227 = vld [vmem:[%s13 + $0x28] sm:$0xff]
    %v228 = vld [vmem:[%s13 + $0x30] sm:$0xff]
    %v229 = vld [vmem:[%s13 + $0x38] sm:$0xff]
    %v230 = vld [vmem:[%s13 + $0x40] sm:$0xff]
    %v231 = vld [vmem:[%s13 + $0x48] sm:$0xff]
    %v232 = vld [vmem:[%s13 + $0x50] sm:$0xff]
    %v233 = vld [vmem:[%s13 + $0x58] sm:$0xff]
    %v234 = vld [vmem:[%s13 + $0x60] sm:$0xff]
    %v235 = vld [vmem:[%s13 + $0x68] sm:$0xff]
    %v236 = vld [vmem:[%s13 + $0x70] sm:$0xff]
    %v237 = vld [vmem:[%s13 + $0x78] sm:$0xff]
    %v238 = vld [vmem:[%s13 + $0x80] sm:$0xff]
    %v239 = vld [vmem:[%s13 + $0x88] sm:$0xff]
    %v240 = vld [vmem:[%s13 + $0x90] sm:$0xff]
    %v241 = vld [vmem:[%s13 + $0x98] sm:$0xff]
    %v242 = vld [vmem:[%s13 + $0xa0] sm:$0xff]
    %v243 = vld [vmem:[%s13 + $0xa8] sm:$0xff]
    %v244 = vld [vmem:[%s13 + $0xb0] sm:$0xff]
    %v245 = vld [vmem:[%s13 + $0xb8] sm:$0xff]
    %v246 = vld [vmem:[%s13 + $0xc0] sm:$0xff]
    %v247 = vld [vmem:[%s13 + $0xc8] sm:$0xff]
    %v248 = vld [vmem:[%s13 + $0xd0] sm:$0xff]
    %v249 = vld [vmem:[%s13 + $0xd8] sm:$0xff]
    %v250 = vld [vmem:[%s13 + $0xe0] sm:$0xff]
    %v251 = vld [vmem:[%s13 + $0xe8] sm:$0xff]
    %v252 = vld [vmem:[%s13 + $0xf0] sm:$0xff]
    %v253 = vld [vmem:[%s13 + $0xf8] sm:$0xff]
    %v254 = vld [vmem:[%s13 + $0x100] sm:$0xff]
    %v255 = vld [vmem:[%s13 + $0x108] sm:$0xff]
    %v256 = vld [vmem:[%s13 + $0x110] sm:$0xff]
    %v257 = vld [vmem:[%s13 + $0x118] sm:$0xff]
    %v258 = vld [vmem:[%s13 + $0x120] sm:$0xff]
    %v259 = vld [vmem:[%s13 + $0x128] sm:$0xff]
    %v260 = vld [vmem:[%s13 + $0x130] sm:$0xff]
    %v261 = vld [vmem:[%s13 + $0x138] sm:$0xff]
    %v262 = vld [vmem:[%s13 + $0x140] sm:$0xff]
    %v263 = vld [vmem:[%s13 + $0x148] sm:$0xff]
    %v264 = vld [vmem:[%s13 + $0x150] sm:$0xff]
    %v265 = vld [vmem:[%s13 + $0x158] sm:$0xff]
    %v266 = vld [vmem:[%s13 + $0x160] sm:$0xff]
    %v267 = vld [vmem:[%s13 + $0x168] sm:$0xff]
    %v268 = vld [vmem:[%s13 + $0x170] sm:$0xff]
    %v269 = vld [vmem:[%s13 + $0x178] sm:$0xff]
    %v270 = vld [vmem:[%s13 + $0x180] sm:$0xff]
    %v271 = vld [vmem:[%s13 + $0x188] sm:$0xff]
    %v272 = vld [vmem:[%s13 + $0x190] sm:$0xff]
    %v273 = vld [vmem:[%s13 + $0x198] sm:$0xff]
    %v274 = vld [vmem:[%s13 + $0x1a0] sm:$0xff]
    %v275 = vld [vmem:[%s13 + $0x1a8] sm:$0xff]
    %v276 = vld [vmem:[%s13 + $0x1b0] sm:$0xff]
    %v277 = vld [vmem:[%s13 + $0x1b8] sm:$0xff]
    %v278 = vld [vmem:[%s13 + $0x1c0] sm:$0xff]
    %v279 = vld [vmem:[%s13 + $0x1c8] sm:$0xff]
    %v280 = vld [vmem:[%s13 + $0x1d0] sm:$0xff]
    %v281 = vld [vmem:[%s13 + $0x1d8] sm:$0xff]
    %v282 = vld [vmem:[%s13 + $0x1e0] sm:$0xff]
    %v283 = vld [vmem:[%s13 + $0x1e8] sm:$0xff]
    %v284 = vld [vmem:[%s13 + $0x1f0] sm:$0xff]
    %v285 = vld [vmem:[%s13 + $0x1f8] sm:$0xff]
    %v286 = vld [vmem:[#allocation22] sm:$0xff]
    %v287 = vld [vmem:[#allocation22 + $0x8] sm:$0xff]
    %v288 = vld [vmem:[#allocation22 + $0x10] sm:$0xff]
    %v289 = vld [vmem:[#allocation22 + $0x18] sm:$0xff]
    %v290 = vld [vmem:[#allocation22 + $0x20] sm:$0xff]
    %v291 = vld [vmem:[#allocation22 + $0x28] sm:$0xff]
    %v292 = vld [vmem:[#allocation22 + $0x30] sm:$0xff]
    %v293 = vld [vmem:[#allocation22 + $0x38] sm:$0xff]
    %v294 = vld [vmem:[#allocation22 + $0x40] sm:$0xff]
    %v295 = vld [vmem:[#allocation22 + $0x48] sm:$0xff]
    %v296 = vld [vmem:[#allocation22 + $0x50] sm:$0xff]
    %v297 = vld [vmem:[#allocation22 + $0x58] sm:$0xff]
    %v298 = vld [vmem:[#allocation22 + $0x60] sm:$0xff]
    %v299 = vld [vmem:[#allocation22 + $0x68] sm:$0xff]
    %v300 = vld [vmem:[#allocation22 + $0x70] sm:$0xff]
    %v301 = vld [vmem:[#allocation22 + $0x78] sm:$0xff]
    %v302 = vld [vmem:[#allocation4] sm:$0xff]
    %v303 = vld [vmem:[#allocation4 + $0x8] sm:$0xff]
    %v304 = vld [vmem:[#allocation4 + $0x10] sm:$0xff]
    %v305 = vld [vmem:[#allocation4 + $0x18] sm:$0xff]
    %vm306 = vcmask 523264
    %307 = vst.msk [vmem:[#allocation2] sm:$0xff] %vm306, 0.0
    %308 = vst.msk [vmem:[#allocation2 + $0x8] sm:$0xff] %vm306, 0.0
    %vm309 = vcmask 517120
    %310 = vst.msk [vmem:[#allocation2 + $0x10] sm:$0x3] %vm309, 0.0
    %311 = vst.msk [vmem:[#allocation2 + $0x18] sm:$0xff] %vm306, 0.0
    %312 = vst.msk [vmem:[#allocation2 + $0x20] sm:$0xff] %vm306, 0.0
    %313 = vst.msk [vmem:[#allocation2 + $0x28] sm:$0x3] %vm309, 0.0
    %314 = vst.msk [vmem:[#allocation2 + $0x1] sm:$0xff] %vm306, %v302
    %315 = vst.msk [vmem:[#allocation2 + $0x9] sm:$0xff] %vm306, %v303
    %316 = vst.msk [vmem:[#allocation2 + $0x19] sm:$0xff] %vm306, %v304
    %317 = vst.msk [vmem:[#allocation2 + $0x21] sm:$0xff] %vm306, %v305
    %v318 = vld [vmem:[#allocation2] sm:$0xff]
    %v319 = vld [vmem:[#allocation2 + $0x8] sm:$0xff]
    %v320 = vld [vmem:[#allocation2 + $0x10] sm:$0x3]
    %v321 = vld [vmem:[#allocation2 + $0x18] sm:$0xff]
    %v322 = vld [vmem:[#allocation2 + $0x20] sm:$0xff]
    %v323 = vld [vmem:[#allocation2 + $0x28] sm:$0x3]
    %v324 = vld [vmem:[#allocation7] sm:$0xff]
    %v325 = vld [vmem:[#allocation7 + $0x8] sm:$0xff]
    %v326 = vld [vmem:[#allocation7 + $0x10] sm:$0xff]
    %v327 = vld [vmem:[#allocation7 + $0x18] sm:$0xff]
    %v328 = vld [vmem:[#allocation7 + $0x20] sm:$0xff]
    %v329 = vld [vmem:[#allocation7 + $0x28] sm:$0xff]
    %v330 = vld [vmem:[#allocation7 + $0x30] sm:$0xff]
    %v331 = vld [vmem:[#allocation7 + $0x38] sm:$0xff]
    %v332 = vld [vmem:[#allocation7 + $0x40] sm:$0xff]
    %v333 = vld [vmem:[#allocation7 + $0x48] sm:$0xff]
    %v334 = vld [vmem:[#allocation7 + $0x50] sm:$0xff]
    %v335 = vld [vmem:[#allocation7 + $0x58] sm:$0xff]
    %v336 = vld [vmem:[#allocation7 + $0x60] sm:$0xff]
    %v337 = vld [vmem:[#allocation7 + $0x68] sm:$0xff]
    %v338 = vld [vmem:[#allocation7 + $0x70] sm:$0xff]
    %v339 = vld [vmem:[#allocation7 + $0x78] sm:$0xff]
    %v340 = vld [vmem:[#allocation7 + $0x80] sm:$0xff]
    %v341 = vld [vmem:[#allocation7 + $0x88] sm:$0xff]
    %v342 = vld [vmem:[#allocation7 + $0x90] sm:$0xff]
    %v343 = vld [vmem:[#allocation7 + $0x98] sm:$0xff]
    %v344 = vld [vmem:[#allocation7 + $0xa0] sm:$0xff]
    %v345 = vld [vmem:[#allocation7 + $0xa8] sm:$0xff]
    %v346 = vld [vmem:[#allocation7 + $0xb0] sm:$0xff]
    %v347 = vld [vmem:[#allocation7 + $0xb8] sm:$0xff]
    %v348 = vld [vmem:[#allocation7 + $0xc0] sm:$0xff]
    %v349 = vld [vmem:[#allocation7 + $0xc8] sm:$0xff]
    %v350 = vld [vmem:[#allocation7 + $0xd0] sm:$0xff]
    %v351 = vld [vmem:[#allocation7 + $0xd8] sm:$0xff]
    %v352 = vld [vmem:[#allocation7 + $0xe0] sm:$0xff]
    %v353 = vld [vmem:[#allocation7 + $0xe8] sm:$0xff]
    %v354 = vld [vmem:[#allocation7 + $0xf0] sm:$0xff]
    %v355 = vld [vmem:[#allocation7 + $0xf8] sm:$0xff]
    %vm362 = vcmask 1046528
    %v363 = vrot.slane %v318, 1
    %v364 = vrot.slane %v319, 1
    %v365 = vsel %vm362, %v363, %v364
    %v366 = vrot.slane %v320, 1
    %v367 = vsel %vm362, %v364, %v366
    %v368 = vrot.slane %v321, 1
    %v369 = vrot.slane %v322, 1
    %v370 = vsel %vm362, %v368, %v369
    %v371 = vrot.slane %v323, 1
    %v372 = vsel %vm362, %v369, %v371
    %s373 = scalar_lea.vmem [#allocation7], 256
    %v374 = vld [vmem:[%s373] sm:$0xff]
    %v375 = vld [vmem:[%s373 + $0x8] sm:$0xff]
    %v376 = vld [vmem:[%s373 + $0x10] sm:$0xff]
    %v377 = vld [vmem:[%s373 + $0x18] sm:$0xff]
    %v378 = vld [vmem:[%s373 + $0x20] sm:$0xff]
    %v379 = vld [vmem:[%s373 + $0x28] sm:$0xff]
    %v380 = vld [vmem:[%s373 + $0x30] sm:$0xff]
    %v381 = vld [vmem:[%s373 + $0x38] sm:$0xff]
    %v382 = vld [vmem:[%s373 + $0x40] sm:$0xff]
    %v383 = vld [vmem:[%s373 + $0x48] sm:$0xff]
    %v384 = vld [vmem:[%s373 + $0x50] sm:$0xff]
    %v385 = vld [vmem:[%s373 + $0x58] sm:$0xff]
    %v386 = vld [vmem:[%s373 + $0x60] sm:$0xff]
    %v387 = vld [vmem:[%s373 + $0x68] sm:$0xff]
    %v388 = vld [vmem:[%s373 + $0x70] sm:$0xff]
    %v389 = vld [vmem:[%s373 + $0x78] sm:$0xff]
    %v390 = vld [vmem:[%s373 + $0x80] sm:$0xff]
    %v391 = vld [vmem:[%s373 + $0x88] sm:$0xff]
    %v392 = vld [vmem:[%s373 + $0x90] sm:$0xff]
    %v393 = vld [vmem:[%s373 + $0x98] sm:$0xff]
    %v394 = vld [vmem:[%s373 + $0xa0] sm:$0xff]
    %v395 = vld [vmem:[%s373 + $0xa8] sm:$0xff]
    %v396 = vld [vmem:[%s373 + $0xb0] sm:$0xff]
    %v397 = vld [vmem:[%s373 + $0xb8] sm:$0xff]
    %v398 = vld [vmem:[%s373 + $0xc0] sm:$0xff]
    %v399 = vld [vmem:[%s373 + $0xc8] sm:$0xff]
    %v400 = vld [vmem:[%s373 + $0xd0] sm:$0xff]
    %v401 = vld [vmem:[%s373 + $0xd8] sm:$0xff]
    %v402 = vld [vmem:[%s373 + $0xe0] sm:$0xff]
    %v403 = vld [vmem:[%s373 + $0xe8] sm:$0xff]
    %v404 = vld [vmem:[%s373 + $0xf0] sm:$0xff]
    %v405 = vld [vmem:[%s373 + $0xf8] sm:$0xff]
    %v406 = vsel %vm306, %v365, 0
    %v408 = vsel %vm306, %v367, 0
    %v410 = vsel %vm306, %v370, 0
    %v412 = vsel %vm306, %v372, 0
    %414 = vmatpush.msra.mxu0 0.0
    %415 = vmatpush.msra.mxu0 0.0
    %416 = vmatpush.msra.mxu0 0.0
    %417 = vmatpush.msra.mxu0 0.0
    %418 = vmatpush.msra.mxu0 0.0
    %419 = vmatpush.msra.mxu0 0.0
    %420 = vmatpush.msra.mxu0 0.0
    %421 = vmatpush.msra.mxu0 0.0
    %422 = vmatpush.msra.mxu0 %v402
    %423 = vmatpush.msra.mxu0 %v398
    %424 = vmatpush.msra.mxu0 %v394
    %425 = vmatpush.msra.mxu0 %v390
    %426 = vmatpush.msra.mxu0 %v386
    %427 = vmatpush.msra.mxu0 %v382
    %428 = vmatpush.msra.mxu0 %v378
    %429 = vmatpush.msra.mxu0 %v374
    %430 = vmatmul.f32.gmra.mxu0 %v406
    %v431 = vpop.f32.mrf.mxu0
    %v432 = vadd.f32 0.0, %v431
    %433 = vmatmul.f32.gmra.mxu0 %v408
    %v434 = vpop.f32.mrf.mxu0
    %v435 = vadd.f32 0.0, %v434
    %436 = vmatmul.f32.gmra.mxu0 %v410
    %v437 = vpop.f32.mrf.mxu0
    %v438 = vadd.f32 0.0, %v437
    %439 = vmatmul.f32.gmra.mxu0 %v412
    %v440 = vpop.f32.mrf.mxu0
    %v441 = vadd.f32 0.0, %v440
    %442 = vdwg.mxu0
    %443 = vmatpush.msra.mxu0 0.0
    %444 = vmatpush.msra.mxu0 0.0
    %445 = vmatpush.msra.mxu0 0.0
    %446 = vmatpush.msra.mxu0 0.0
    %447 = vmatpush.msra.mxu0 0.0
    %448 = vmatpush.msra.mxu0 0.0
    %449 = vmatpush.msra.mxu0 0.0
    %450 = vmatpush.msra.mxu0 0.0
    %451 = vmatpush.msra.mxu0 %v403
    %452 = vmatpush.msra.mxu0 %v399
    %453 = vmatpush.msra.mxu0 %v395
    %454 = vmatpush.msra.mxu0 %v391
    %455 = vmatpush.msra.mxu0 %v387
    %456 = vmatpush.msra.mxu0 %v383
    %457 = vmatpush.msra.mxu0 %v379
    %458 = vmatpush.msra.mxu0 %v375
    %459 = vmatmul.f32.gmra.mxu0 %v406
    %v460 = vpop.f32.mrf.mxu0
    %v461 = vadd.f32 0.0, %v460
    %462 = vmatmul.f32.gmra.mxu0 %v408
    %v463 = vpop.f32.mrf.mxu0
    %v464 = vadd.f32 0.0, %v463
    %465 = vmatmul.f32.gmra.mxu0 %v410
    %v466 = vpop.f32.mrf.mxu0
    %v467 = vadd.f32 0.0, %v466
    %468 = vmatmul.f32.gmra.mxu0 %v412
    %v469 = vpop.f32.mrf.mxu0
    %v470 = vadd.f32 0.0, %v469
    %471 = vdwg.mxu0
    %472 = vmatpush.msra.mxu0 0.0
    %473 = vmatpush.msra.mxu0 0.0
    %474 = vmatpush.msra.mxu0 0.0
    %475 = vmatpush.msra.mxu0 0.0
    %476 = vmatpush.msra.mxu0 0.0
    %477 = vmatpush.msra.mxu0 0.0
    %478 = vmatpush.msra.mxu0 0.0
    %479 = vmatpush.msra.mxu0 0.0
    %480 = vmatpush.msra.mxu0 %v404
    %481 = vmatpush.msra.mxu0 %v400
    %482 = vmatpush.msra.mxu0 %v396
    %483 = vmatpush.msra.mxu0 %v392
    %484 = vmatpush.msra.mxu0 %v388
    %485 = vmatpush.msra.mxu0 %v384
    %486 = vmatpush.msra.mxu0 %v380
    %487 = vmatpush.msra.mxu0 %v376
    %488 = vmatmul.f32.gmra.mxu0 %v406
    %v489 = vpop.f32.mrf.mxu0
    %v490 = vadd.f32 0.0, %v489
    %491 = vmatmul.f32.gmra.mxu0 %v408
    %v492 = vpop.f32.mrf.mxu0
    %v493 = vadd.f32 0.0, %v492
    %494 = vmatmul.f32.gmra.mxu0 %v410
    %v495 = vpop.f32.mrf.mxu0
    %v496 = vadd.f32 0.0, %v495
    %497 = vmatmul.f32.gmra.mxu0 %v412
    %v498 = vpop.f32.mrf.mxu0
    %v499 = vadd.f32 0.0, %v498
    %500 = vdwg.mxu0
    %501 = vmatpush.msra.mxu0 0.0
    %502 = vmatpush.msra.mxu0 0.0
    %503 = vmatpush.msra.mxu0 0.0
    %504 = vmatpush.msra.mxu0 0.0
    %505 = vmatpush.msra.mxu0 0.0
    %506 = vmatpush.msra.mxu0 0.0
    %507 = vmatpush.msra.mxu0 0.0
    %508 = vmatpush.msra.mxu0 0.0
    %509 = vmatpush.msra.mxu0 %v405
    %510 = vmatpush.msra.mxu0 %v401
    %511 = vmatpush.msra.mxu0 %v397
    %512 = vmatpush.msra.mxu0 %v393
    %513 = vmatpush.msra.mxu0 %v389
    %514 = vmatpush.msra.mxu0 %v385
    %515 = vmatpush.msra.mxu0 %v381
    %516 = vmatpush.msra.mxu0 %v377
    %517 = vmatmul.f32.gmra.mxu0 %v406
    %v518 = vpop.f32.mrf.mxu0
    %v519 = vadd.f32 0.0, %v518
    %520 = vmatmul.f32.gmra.mxu0 %v408
    %v521 = vpop.f32.mrf.mxu0
    %v522 = vadd.f32 0.0, %v521
    %523 = vmatmul.f32.gmra.mxu0 %v410
    %v524 = vpop.f32.mrf.mxu0
    %v525 = vadd.f32 0.0, %v524
    %526 = vmatmul.f32.gmra.mxu0 %v412
    %v527 = vpop.f32.mrf.mxu0
    %v528 = vadd.f32 0.0, %v527
    %529 = vdwg.mxu0
    %v530 = vsel %vm306, %v318, 0
    %v532 = vsel %vm306, %v319, 0
    %v534 = vsel %vm306, %v321, 0
    %v536 = vsel %vm306, %v322, 0
    %538 = vmatpush.msra.mxu0 0.0
    %539 = vmatpush.msra.mxu0 0.0
    %540 = vmatpush.msra.mxu0 0.0
    %541 = vmatpush.msra.mxu0 0.0
    %542 = vmatpush.msra.mxu0 0.0
    %543 = vmatpush.msra.mxu0 0.0
    %544 = vmatpush.msra.mxu0 0.0
    %545 = vmatpush.msra.mxu0 0.0
    %546 = vmatpush.msra.mxu0 %v352
    %547 = vmatpush.msra.mxu0 %v348
    %548 = vmatpush.msra.mxu0 %v344
    %549 = vmatpush.msra.mxu0 %v340
    %550 = vmatpush.msra.mxu0 %v336
    %551 = vmatpush.msra.mxu0 %v332
    %552 = vmatpush.msra.mxu0 %v328
    %553 = vmatpush.msra.mxu0 %v324
    %554 = vmatmul.f32.gmra.mxu0 %v530
    %v555 = vpop.f32.mrf.mxu0
    %v556 = vadd.f32 %v432, %v555
    %557 = vmatmul.f32.gmra.mxu0 %v532
    %v558 = vpop.f32.mrf.mxu0
    %v559 = vadd.f32 %v435, %v558
    %560 = vmatmul.f32.gmra.mxu0 %v534
    %v561 = vpop.f32.mrf.mxu0
    %v562 = vadd.f32 %v438, %v561
    %563 = vmatmul.f32.gmra.mxu0 %v536
    %v564 = vpop.f32.mrf.mxu0
    %v565 = vadd.f32 %v441, %v564
    %566 = vdwg.mxu0
    %567 = vmatpush.msra.mxu0 0.0
    %568 = vmatpush.msra.mxu0 0.0
    %569 = vmatpush.msra.mxu0 0.0
    %570 = vmatpush.msra.mxu0 0.0
    %571 = vmatpush.msra.mxu0 0.0
    %572 = vmatpush.msra.mxu0 0.0
    %573 = vmatpush.msra.mxu0 0.0
    %574 = vmatpush.msra.mxu0 0.0
    %575 = vmatpush.msra.mxu0 %v353
    %576 = vmatpush.msra.mxu0 %v349
    %577 = vmatpush.msra.mxu0 %v345
    %578 = vmatpush.msra.mxu0 %v341
    %579 = vmatpush.msra.mxu0 %v337
    %580 = vmatpush.msra.mxu0 %v333
    %581 = vmatpush.msra.mxu0 %v329
    %582 = vmatpush.msra.mxu0 %v325
    %583 = vmatmul.f32.gmra.mxu0 %v530
    %v584 = vpop.f32.mrf.mxu0
    %v585 = vadd.f32 %v461, %v584
    %586 = vmatmul.f32.gmra.mxu0 %v532
    %v587 = vpop.f32.mrf.mxu0
    %v588 = vadd.f32 %v464, %v587
    %589 = vmatmul.f32.gmra.mxu0 %v534
    %v590 = vpop.f32.mrf.mxu0
    %v591 = vadd.f32 %v467, %v590
    %592 = vmatmul.f32.gmra.mxu0 %v536
    %v593 = vpop.f32.mrf.mxu0
    %v594 = vadd.f32 %v470, %v593
    %595 = vdwg.mxu0
    %596 = vmatpush.msra.mxu0 0.0
    %597 = vmatpush.msra.mxu0 0.0
    %598 = vmatpush.msra.mxu0 0.0
    %599 = vmatpush.msra.mxu0 0.0
    %600 = vmatpush.msra.mxu0 0.0
    %601 = vmatpush.msra.mxu0 0.0
    %602 = vmatpush.msra.mxu0 0.0
    %603 = vmatpush.msra.mxu0 0.0
    %604 = vmatpush.msra.mxu0 %v354
    %605 = vmatpush.msra.mxu0 %v350
    %606 = vmatpush.msra.mxu0 %v346
    %607 = vmatpush.msra.mxu0 %v342
    %608 = vmatpush.msra.mxu0 %v338
    %609 = vmatpush.msra.mxu0 %v334
    %610 = vmatpush.msra.mxu0 %v330
    %611 = vmatpush.msra.mxu0 %v326
    %612 = vmatmul.f32.gmra.mxu0 %v530
    %v613 = vpop.f32.mrf.mxu0
    %v614 = vadd.f32 %v490, %v613
    %615 = vmatmul.f32.gmra.mxu0 %v532
    %v616 = vpop.f32.mrf.mxu0
    %v617 = vadd.f32 %v493, %v616
    %618 = vmatmul.f32.gmra.mxu0 %v534
    %v619 = vpop.f32.mrf.mxu0
    %v620 = vadd.f32 %v496, %v619
    %621 = vmatmul.f32.gmra.mxu0 %v536
    %v622 = vpop.f32.mrf.mxu0
    %v623 = vadd.f32 %v499, %v622
    %624 = vdwg.mxu0
    %625 = vmatpush.msra.mxu0 0.0
    %626 = vmatpush.msra.mxu0 0.0
    %627 = vmatpush.msra.mxu0 0.0
    %628 = vmatpush.msra.mxu0 0.0
    %629 = vmatpush.msra.mxu0 0.0
    %630 = vmatpush.msra.mxu0 0.0
    %631 = vmatpush.msra.mxu0 0.0
    %632 = vmatpush.msra.mxu0 0.0
    %633 = vmatpush.msra.mxu0 %v355
    %634 = vmatpush.msra.mxu0 %v351
    %635 = vmatpush.msra.mxu0 %v347
    %636 = vmatpush.msra.mxu0 %v343
    %637 = vmatpush.msra.mxu0 %v339
    %638 = vmatpush.msra.mxu0 %v335
    %639 = vmatpush.msra.mxu0 %v331
    %640 = vmatpush.msra.mxu0 %v327
    %641 = vmatmul.f32.gmra.mxu0 %v530
    %v642 = vpop.f32.mrf.mxu0
    %v643 = vadd.f32 %v519, %v642
    %644 = vmatmul.f32.gmra.mxu0 %v532
    %v645 = vpop.f32.mrf.mxu0
    %v646 = vadd.f32 %v522, %v645
    %647 = vmatmul.f32.gmra.mxu0 %v534
    %v648 = vpop.f32.mrf.mxu0
    %v649 = vadd.f32 %v525, %v648
    %650 = vmatmul.f32.gmra.mxu0 %v536
    %v651 = vpop.f32.mrf.mxu0
    %v652 = vadd.f32 %v528, %v651
    %653 = vdwg.mxu0
    %vm654 = vcmask 1045504
    %v655 = vrot.slane %v318, 2
    %v656 = vrot.slane %v319, 2
    %v657 = vsel %vm654, %v655, %v656
    %v658 = vrot.slane %v320, 2
    %v659 = vsel %vm654, %v656, %v658
    %v660 = vrot.slane %v321, 2
    %v661 = vrot.slane %v322, 2
    %v662 = vsel %vm654, %v660, %v661
    %v663 = vrot.slane %v323, 2
    %v664 = vsel %vm654, %v661, %v663
    %s665 = scalar_lea.vmem [#allocation7], 512
    %v666 = vld [vmem:[%s665] sm:$0xff]
    %v667 = vld [vmem:[%s665 + $0x8] sm:$0xff]
    %v668 = vld [vmem:[%s665 + $0x10] sm:$0xff]
    %v669 = vld [vmem:[%s665 + $0x18] sm:$0xff]
    %v670 = vld [vmem:[%s665 + $0x20] sm:$0xff]
    %v671 = vld [vmem:[%s665 + $0x28] sm:$0xff]
    %v672 = vld [vmem:[%s665 + $0x30] sm:$0xff]
    %v673 = vld [vmem:[%s665 + $0x38] sm:$0xff]
    %v674 = vld [vmem:[%s665 + $0x40] sm:$0xff]
    %v675 = vld [vmem:[%s665 + $0x48] sm:$0xff]
    %v676 = vld [vmem:[%s665 + $0x50] sm:$0xff]
    %v677 = vld [vmem:[%s665 + $0x58] sm:$0xff]
    %v678 = vld [vmem:[%s665 + $0x60] sm:$0xff]
    %v679 = vld [vmem:[%s665 + $0x68] sm:$0xff]
    %v680 = vld [vmem:[%s665 + $0x70] sm:$0xff]
    %v681 = vld [vmem:[%s665 + $0x78] sm:$0xff]
    %v682 = vld [vmem:[%s665 + $0x80] sm:$0xff]
    %v683 = vld [vmem:[%s665 + $0x88] sm:$0xff]
    %v684 = vld [vmem:[%s665 + $0x90] sm:$0xff]
    %v685 = vld [vmem:[%s665 + $0x98] sm:$0xff]
    %v686 = vld [vmem:[%s665 + $0xa0] sm:$0xff]
    %v687 = vld [vmem:[%s665 + $0xa8] sm:$0xff]
    %v688 = vld [vmem:[%s665 + $0xb0] sm:$0xff]
    %v689 = vld [vmem:[%s665 + $0xb8] sm:$0xff]
    %v690 = vld [vmem:[%s665 + $0xc0] sm:$0xff]
    %v691 = vld [vmem:[%s665 + $0xc8] sm:$0xff]
    %v692 = vld [vmem:[%s665 + $0xd0] sm:$0xff]
    %v693 = vld [vmem:[%s665 + $0xd8] sm:$0xff]
    %v694 = vld [vmem:[%s665 + $0xe0] sm:$0xff]
    %v695 = vld [vmem:[%s665 + $0xe8] sm:$0xff]
    %v696 = vld [vmem:[%s665 + $0xf0] sm:$0xff]
    %v697 = vld [vmem:[%s665 + $0xf8] sm:$0xff]
    %v698 = vsel %vm306, %v657, 0
    %v700 = vsel %vm306, %v659, 0
    %v702 = vsel %vm306, %v662, 0
    %v704 = vsel %vm306, %v664, 0
    %706 = vmatpush.msra.mxu0 0.0
    %707 = vmatpush.msra.mxu0 0.0
    %708 = vmatpush.msra.mxu0 0.0
    %709 = vmatpush.msra.mxu0 0.0
    %710 = vmatpush.msra.mxu0 0.0
    %711 = vmatpush.msra.mxu0 0.0
    %712 = vmatpush.msra.mxu0 0.0
    %713 = vmatpush.msra.mxu0 0.0
    %714 = vmatpush.msra.mxu0 %v694
    %715 = vmatpush.msra.mxu0 %v690
    %716 = vmatpush.msra.mxu0 %v686
    %717 = vmatpush.msra.mxu0 %v682
    %718 = vmatpush.msra.mxu0 %v678
    %719 = vmatpush.msra.mxu0 %v674
    %720 = vmatpush.msra.mxu0 %v670
    %721 = vmatpush.msra.mxu0 %v666
    %722 = vmatmul.f32.gmra.mxu0 %v698
    %v723 = vpop.f32.mrf.mxu0
    %v724 = vadd.f32 0.0, %v723
    %725 = vmatmul.f32.gmra.mxu0 %v700
    %v726 = vpop.f32.mrf.mxu0
    %v727 = vadd.f32 0.0, %v726
    %728 = vmatmul.f32.gmra.mxu0 %v702
    %v729 = vpop.f32.mrf.mxu0
    %v730 = vadd.f32 0.0, %v729
    %731 = vmatmul.f32.gmra.mxu0 %v704
    %v732 = vpop.f32.mrf.mxu0
    %v733 = vadd.f32 0.0, %v732
    %734 = vdwg.mxu0
    %735 = vmatpush.msra.mxu0 0.0
    %736 = vmatpush.msra.mxu0 0.0
    %737 = vmatpush.msra.mxu0 0.0
    %738 = vmatpush.msra.mxu0 0.0
    %739 = vmatpush.msra.mxu0 0.0
    %740 = vmatpush.msra.mxu0 0.0
    %741 = vmatpush.msra.mxu0 0.0
    %742 = vmatpush.msra.mxu0 0.0
    %743 = vmatpush.msra.mxu0 %v695
    %744 = vmatpush.msra.mxu0 %v691
    %745 = vmatpush.msra.mxu0 %v687
    %746 = vmatpush.msra.mxu0 %v683
    %747 = vmatpush.msra.mxu0 %v679
    %748 = vmatpush.msra.mxu0 %v675
    %749 = vmatpush.msra.mxu0 %v671
    %750 = vmatpush.msra.mxu0 %v667
    %751 = vmatmul.f32.gmra.mxu0 %v698
    %v752 = vpop.f32.mrf.mxu0
    %v753 = vadd.f32 0.0, %v752
    %754 = vmatmul.f32.gmra.mxu0 %v700
    %v755 = vpop.f32.mrf.mxu0
    %v756 = vadd.f32 0.0, %v755
    %757 = vmatmul.f32.gmra.mxu0 %v702
    %v758 = vpop.f32.mrf.mxu0
    %v759 = vadd.f32 0.0, %v758
    %760 = vmatmul.f32.gmra.mxu0 %v704
    %v761 = vpop.f32.mrf.mxu0
    %v762 = vadd.f32 0.0, %v761
    %763 = vdwg.mxu0
    %764 = vmatpush.msra.mxu0 0.0
    %765 = vmatpush.msra.mxu0 0.0
    %766 = vmatpush.msra.mxu0 0.0
    %767 = vmatpush.msra.mxu0 0.0
    %768 = vmatpush.msra.mxu0 0.0
    %769 = vmatpush.msra.mxu0 0.0
    %770 = vmatpush.msra.mxu0 0.0
    %771 = vmatpush.msra.mxu0 0.0
    %772 = vmatpush.msra.mxu0 %v696
    %773 = vmatpush.msra.mxu0 %v692
    %774 = vmatpush.msra.mxu0 %v688
    %775 = vmatpush.msra.mxu0 %v684
    %776 = vmatpush.msra.mxu0 %v680
    %777 = vmatpush.msra.mxu0 %v676
    %778 = vmatpush.msra.mxu0 %v672
    %779 = vmatpush.msra.mxu0 %v668
    %780 = vmatmul.f32.gmra.mxu0 %v698
    %v781 = vpop.f32.mrf.mxu0
    %v782 = vadd.f32 0.0, %v781
    %783 = vmatmul.f32.gmra.mxu0 %v700
    %v784 = vpop.f32.mrf.mxu0
    %v785 = vadd.f32 0.0, %v784
    %786 = vmatmul.f32.gmra.mxu0 %v702
    %v787 = vpop.f32.mrf.mxu0
    %v788 = vadd.f32 0.0, %v787
    %789 = vmatmul.f32.gmra.mxu0 %v704
    %v790 = vpop.f32.mrf.mxu0
    %v791 = vadd.f32 0.0, %v790
    %792 = vdwg.mxu0
    %793 = vmatpush.msra.mxu0 0.0
    %794 = vmatpush.msra.mxu0 0.0
    %795 = vmatpush.msra.mxu0 0.0
    %796 = vmatpush.msra.mxu0 0.0
    %797 = vmatpush.msra.mxu0 0.0
    %798 = vmatpush.msra.mxu0 0.0
    %799 = vmatpush.msra.mxu0 0.0
    %800 = vmatpush.msra.mxu0 0.0
    %801 = vmatpush.msra.mxu0 %v697
    %802 = vmatpush.msra.mxu0 %v693
    %803 = vmatpush.msra.mxu0 %v689
    %804 = vmatpush.msra.mxu0 %v685
    %805 = vmatpush.msra.mxu0 %v681
    %806 = vmatpush.msra.mxu0 %v677
    %807 = vmatpush.msra.mxu0 %v673
    %808 = vmatpush.msra.mxu0 %v669
    %809 = vmatmul.f32.gmra.mxu0 %v698
    %v810 = vpop.f32.mrf.mxu0
    %v811 = vadd.f32 0.0, %v810
    %812 = vmatmul.f32.gmra.mxu0 %v700
    %v813 = vpop.f32.mrf.mxu0
    %v814 = vadd.f32 0.0, %v813
    %815 = vmatmul.f32.gmra.mxu0 %v702
    %v816 = vpop.f32.mrf.mxu0
    %v817 = vadd.f32 0.0, %v816
    %818 = vmatmul.f32.gmra.mxu0 %v704
    %v819 = vpop.f32.mrf.mxu0
    %v820 = vadd.f32 0.0, %v819
    %821 = vdwg.mxu0
    %v822 = vadd.f32 %v556, %v724
    %v823 = vadd.f32 %v585, %v753
    %v824 = vadd.f32 %v614, %v782
    %v825 = vadd.f32 %v643, %v811
    %v826 = vadd.f32 %v559, %v727
    %v827 = vadd.f32 %v588, %v756
    %v828 = vadd.f32 %v617, %v785
    %v829 = vadd.f32 %v646, %v814
    %v830 = vadd.f32 %v562, %v730
    %v831 = vadd.f32 %v591, %v759
    %v832 = vadd.f32 %v620, %v788
    %v833 = vadd.f32 %v649, %v817
    %v834 = vadd.f32 %v565, %v733
    %v835 = vadd.f32 %v594, %v762
    %v836 = vadd.f32 %v623, %v791
    %v837 = vadd.f32 %v652, %v820
    %v838 = vld [vmem:[#allocation9] sm:$0xf]
    %v840 = vperm.slane %v838, 0
    %v841 = vperm.slane %v838, 1
    %v842 = vperm.slane %v838, 2
    %v843 = vperm.slane %v838, 3
    %v848 = vadd.f32 %v822, %v840
    %v849 = vadd.f32 %v823, %v841
    %v850 = vadd.f32 %v824, %v842
    %v851 = vadd.f32 %v825, %v843
    %v852 = vadd.f32 %v826, %v840
    %v853 = vadd.f32 %v827, %v841
    %v854 = vadd.f32 %v828, %v842
    %v855 = vadd.f32 %v829, %v843
    %v856 = vadd.f32 %v830, %v840
    %v857 = vadd.f32 %v831, %v841
    %v858 = vadd.f32 %v832, %v842
    %v859 = vadd.f32 %v833, %v843
    %v860 = vadd.f32 %v834, %v840
    %v861 = vadd.f32 %v835, %v841
    %v862 = vadd.f32 %v836, %v842
    %v863 = vadd.f32 %v837, %v843
    %v864 = vadd.f32 %v848, %v852
    %v865 = vadd.f32 %v864, %v856
    %v866 = vadd.f32 %v865, %v860
    %v867 = vrot.slane %v866, 4
    %v868 = vadd.f32 %v866, %v867
    %v869 = vrot.slane %v868, 2
    %v870 = vadd.f32 %v868, %v869
    %v871 = vrot.slane %v870, 1
    %v872 = vadd.f32 %v870, %v871
    %v873 = vadd.f32 %v849, %v853
    %v874 = vadd.f32 %v873, %v857
    %v875 = vadd.f32 %v874, %v861
    %v876 = vrot.slane %v875, 4
    %v877 = vadd.f32 %v875, %v876
    %v878 = vrot.slane %v877, 2
    %v879 = vadd.f32 %v877, %v878
    %v880 = vrot.slane %v879, 1
    %v881 = vadd.f32 %v879, %v880
    %v882 = vadd.f32 %v850, %v854
    %v883 = vadd.f32 %v882, %v858
    %v884 = vadd.f32 %v883, %v862
    %v885 = vrot.slane %v884, 4
    %v886 = vadd.f32 %v884, %v885
    %v887 = vrot.slane %v886, 2
    %v888 = vadd.f32 %v886, %v887
    %v889 = vrot.slane %v888, 1
    %v890 = vadd.f32 %v888, %v889
    %v891 = vadd.f32 %v851, %v855
    %v892 = vadd.f32 %v891, %v859
    %v893 = vadd.f32 %v892, %v863
    %v894 = vrot.slane %v893, 4
    %v895 = vadd.f32 %v893, %v894
    %v896 = vrot.slane %v895, 2
    %v897 = vadd.f32 %v895, %v896
    %v898 = vrot.slane %v897, 1
    %v899 = vadd.f32 %v897, %v898
    %v900 = vmul.f32 %v848, %v848
    %v901 = vmul.f32 %v849, %v849
    %v902 = vmul.f32 %v850, %v850
    %v903 = vmul.f32 %v851, %v851
    %v904 = vmul.f32 %v852, %v852
    %v905 = vmul.f32 %v853, %v853
    %v906 = vmul.f32 %v854, %v854
    %v907 = vmul.f32 %v855, %v855
    %v908 = vmul.f32 %v856, %v856
    %v909 = vmul.f32 %v857, %v857
    %v910 = vmul.f32 %v858, %v858
    %v911 = vmul.f32 %v859, %v859
    %v912 = vmul.f32 %v860, %v860
    %v913 = vmul.f32 %v861, %v861
    %v914 = vmul.f32 %v862, %v862
    %v915 = vmul.f32 %v863, %v863
    %v916 = vadd.f32 %v900, %v904
    %v917 = vadd.f32 %v916, %v908
    %v918 = vadd.f32 %v917, %v912
    %v919 = vrot.slane %v918, 4
    %v920 = vadd.f32 %v918, %v919
    %v921 = vrot.slane %v920, 2
    %v922 = vadd.f32 %v920, %v921
    %v923 = vrot.slane %v922, 1
    %v924 = vadd.f32 %v922, %v923
    %v925 = vadd.f32 %v901, %v905
    %v926 = vadd.f32 %v925, %v909
    %v927 = vadd.f32 %v926, %v913
    %v928 = vrot.slane %v927, 4
    %v929 = vadd.f32 %v927, %v928
    %v930 = vrot.slane %v929, 2
    %v931 = vadd.f32 %v929, %v930
    %v932 = vrot.slane %v931, 1
    %v933 = vadd.f32 %v931, %v932
    %v934 = vadd.f32 %v902, %v906
    %v935 = vadd.f32 %v934, %v910
    %v936 = vadd.f32 %v935, %v914
    %v937 = vrot.slane %v936, 4
    %v938 = vadd.f32 %v936, %v937
    %v939 = vrot.slane %v938, 2
    %v940 = vadd.f32 %v938, %v939
    %v941 = vrot.slane %v940, 1
    %v942 = vadd.f32 %v940, %v941
    %v943 = vadd.f32 %v903, %v907
    %v944 = vadd.f32 %v943, %v911
    %v945 = vadd.f32 %v944, %v915
    %v946 = vrot.slane %v945, 4
    %v947 = vadd.f32 %v945, %v946
    %v948 = vrot.slane %v947, 2
    %v949 = vadd.f32 %v947, %v948
    %v950 = vrot.slane %v949, 1
    %v951 = vadd.f32 %v949, %v950
    %952 = vmatpush.msra.mxu0 %v237
    %953 = vmatpush.msra.mxu0 %v236
    %954 = vmatpush.msra.mxu0 %v235
    %955 = vmatpush.msra.mxu0 %v234
    %956 = vmatpush.msra.mxu0 %v233
    %957 = vmatpush.msra.mxu0 %v232
    %958 = vmatpush.msra.mxu0 %v231
    %959 = vmatpush.msra.mxu0 %v230
    %960 = vmatpush.msra.mxu0 %v229
    %961 = vmatpush.msra.mxu0 %v228
    %962 = vmatpush.msra.mxu0 %v227
    %963 = vmatpush.msra.mxu0 %v226
    %964 = vmatpush.msra.mxu0 %v225
    %965 = vmatpush.msra.mxu0 %v224
    %966 = vmatpush.msra.mxu0 %v223
    %967 = vmatpush.msra.mxu0 %v222
    %968 = vmatmul.f32.gmra.mxu0 %v872
    %v969 = vpop.f32.mrf.mxu0
    %v970 = vadd.f32 0.0, %v969
    %971 = vdwg.mxu0
    %972 = vmatpush.msra.mxu0 %v253
    %973 = vmatpush.msra.mxu0 %v252
    %974 = vmatpush.msra.mxu0 %v251
    %975 = vmatpush.msra.mxu0 %v250
    %976 = vmatpush.msra.mxu0 %v249
    %977 = vmatpush.msra.mxu0 %v248
    %978 = vmatpush.msra.mxu0 %v247
    %979 = vmatpush.msra.mxu0 %v246
    %980 = vmatpush.msra.mxu0 %v245
    %981 = vmatpush.msra.mxu0 %v244
    %982 = vmatpush.msra.mxu0 %v243
    %983 = vmatpush.msra.mxu0 %v242
    %984 = vmatpush.msra.mxu0 %v241
    %985 = vmatpush.msra.mxu0 %v240
    %986 = vmatpush.msra.mxu0 %v239
    %987 = vmatpush.msra.mxu0 %v238
    %988 = vmatmul.f32.gmra.mxu0 %v881
    %v989 = vpop.f32.mrf.mxu0
    %v990 = vadd.f32 %v970, %v989
    %991 = vdwg.mxu0
    %992 = vmatpush.msra.mxu0 %v269
    %993 = vmatpush.msra.mxu0 %v268
    %994 = vmatpush.msra.mxu0 %v267
    %995 = vmatpush.msra.mxu0 %v266
    %996 = vmatpush.msra.mxu0 %v265
    %997 = vmatpush.msra.mxu0 %v264
    %998 = vmatpush.msra.mxu0 %v263
    %999 = vmatpush.msra.mxu0 %v262
    %1000 = vmatpush.msra.mxu0 %v261
    %1001 = vmatpush.msra.mxu0 %v260
    %1002 = vmatpush.msra.mxu0 %v259
    %1003 = vmatpush.msra.mxu0 %v258
    %1004 = vmatpush.msra.mxu0 %v257
    %1005 = vmatpush.msra.mxu0 %v256
    %1006 = vmatpush.msra.mxu0 %v255
    %1007 = vmatpush.msra.mxu0 %v254
    %1008 = vmatmul.f32.gmra.mxu0 %v890
    %v1009 = vpop.f32.mrf.mxu0
    %v1010 = vadd.f32 %v990, %v1009
    %1011 = vdwg.mxu0
    %1012 = vmatpush.msra.mxu0 %v285
    %1013 = vmatpush.msra.mxu0 %v284
    %1014 = vmatpush.msra.mxu0 %v283
    %1015 = vmatpush.msra.mxu0 %v282
    %1016 = vmatpush.msra.mxu0 %v281
    %1017 = vmatpush.msra.mxu0 %v280
    %1018 = vmatpush.msra.mxu0 %v279
    %1019 = vmatpush.msra.mxu0 %v278
    %1020 = vmatpush.msra.mxu0 %v277
    %1021 = vmatpush.msra.mxu0 %v276
    %1022 = vmatpush.msra.mxu0 %v275
    %1023 = vmatpush.msra.mxu0 %v274
    %1024 = vmatpush.msra.mxu0 %v273
    %1025 = vmatpush.msra.mxu0 %v272
    %1026 = vmatpush.msra.mxu0 %v271
    %1027 = vmatpush.msra.mxu0 %v270
    %1028 = vmatmul.f32.gmra.mxu0 %v899
    %v1029 = vpop.f32.mrf.mxu0
    %v1030 = vadd.f32 %v1010, %v1029
    %1031 = vdwg.mxu0
    %v1032 = vmul.f32 %v1030, 0.001953125
    %1033 = vmatpush.msra.mxu0 %v237
    %1034 = vmatpush.msra.mxu0 %v236
    %1035 = vmatpush.msra.mxu0 %v235
    %1036 = vmatpush.msra.mxu0 %v234
    %1037 = vmatpush.msra.mxu0 %v233
    %1038 = vmatpush.msra.mxu0 %v232
    %1039 = vmatpush.msra.mxu0 %v231
    %1040 = vmatpush.msra.mxu0 %v230
    %1041 = vmatpush.msra.mxu0 %v229
    %1042 = vmatpush.msra.mxu0 %v228
    %1043 = vmatpush.msra.mxu0 %v227
    %1044 = vmatpush.msra.mxu0 %v226
    %1045 = vmatpush.msra.mxu0 %v225
    %1046 = vmatpush.msra.mxu0 %v224
    %1047 = vmatpush.msra.mxu0 %v223
    %1048 = vmatpush.msra.mxu0 %v222
    %1049 = vmatmul.f32.gmra.mxu0 %v924
    %v1050 = vpop.f32.mrf.mxu0
    %v1051 = vadd.f32 0.0, %v1050
    %1052 = vdwg.mxu0
    %1053 = vmatpush.msra.mxu0 %v253
    %1054 = vmatpush.msra.mxu0 %v252
    %1055 = vmatpush.msra.mxu0 %v251
    %1056 = vmatpush.msra.mxu0 %v250
    %1057 = vmatpush.msra.mxu0 %v249
    %1058 = vmatpush.msra.mxu0 %v248
    %1059 = vmatpush.msra.mxu0 %v247
    %1060 = vmatpush.msra.mxu0 %v246
    %1061 = vmatpush.msra.mxu0 %v245
    %1062 = vmatpush.msra.mxu0 %v244
    %1063 = vmatpush.msra.mxu0 %v243
    %1064 = vmatpush.msra.mxu0 %v242
    %1065 = vmatpush.msra.mxu0 %v241
    %1066 = vmatpush.msra.mxu0 %v240
    %1067 = vmatpush.msra.mxu0 %v239
    %1068 = vmatpush.msra.mxu0 %v238
    %1069 = vmatmul.f32.gmra.mxu0 %v933
    %v1070 = vpop.f32.mrf.mxu0
    %v1071 = vadd.f32 %v1051, %v1070
    %1072 = vdwg.mxu0
    %1073 = vmatpush.msra.mxu0 %v269
    %1074 = vmatpush.msra.mxu0 %v268
    %1075 = vmatpush.msra.mxu0 %v267
    %1076 = vmatpush.msra.mxu0 %v266
    %1077 = vmatpush.msra.mxu0 %v265
    %1078 = vmatpush.msra.mxu0 %v264
    %1079 = vmatpush.msra.mxu0 %v263
    %1080 = vmatpush.msra.mxu0 %v262
    %1081 = vmatpush.msra.mxu0 %v261
    %1082 = vmatpush.msra.mxu0 %v260
    %1083 = vmatpush.msra.mxu0 %v259
    %1084 = vmatpush.msra.mxu0 %v258
    %1085 = vmatpush.msra.mxu0 %v257
    %1086 = vmatpush.msra.mxu0 %v256
    %1087 = vmatpush.msra.mxu0 %v255
    %1088 = vmatpush.msra.mxu0 %v254
    %1089 = vmatmul.f32.gmra.mxu0 %v942
    %v1090 = vpop.f32.mrf.mxu0
    %v1091 = vadd.f32 %v1071, %v1090
    %1092 = vdwg.mxu0
    %1093 = vmatpush.msra.mxu0 %v285
    %1094 = vmatpush.msra.mxu0 %v284
    %1095 = vmatpush.msra.mxu0 %v283
    %1096 = vmatpush.msra.mxu0 %v282
    %1097 = vmatpush.msra.mxu0 %v281
    %1098 = vmatpush.msra.mxu0 %v280
    %1099 = vmatpush.msra.mxu0 %v279
    %1100 = vmatpush.msra.mxu0 %v278
    %1101 = vmatpush.msra.mxu0 %v277
    %1102 = vmatpush.msra.mxu0 %v276
    %1103 = vmatpush.msra.mxu0 %v275
    %1104 = vmatpush.msra.mxu0 %v274
    %1105 = vmatpush.msra.mxu0 %v273
    %1106 = vmatpush.msra.mxu0 %v272
    %1107 = vmatpush.msra.mxu0 %v271
    %1108 = vmatpush.msra.mxu0 %v270
    %1109 = vmatmul.f32.gmra.mxu0 %v951
    %v1110 = vpop.f32.mrf.mxu0
    %v1111 = vadd.f32 %v1091, %v1110
    %1112 = vdwg.mxu0
    %v1113 = vmul.f32 %v1111, 0.001953125
    %v1114 = vmul.f32 %v1032, %v1032
    %v1115 = vsub.f32 %v1113, %v1114
    %v1116 = vld [vmem:[#allocation10] sm:$0x1]
    %v1117 = vadd.f32 %v1115, 1e-05
    %v1118 = vrsqrt.pop %v1117
    %v1119 = vmul.f32 %v1118, %v1117
    %v1120 = vmul.f32 %v1119, %v1118
    %v1121 = vmul.f32 0.5, %v1120
    %v1122 = vsub.f32 1.5, %v1121
    %v1123 = vmul.f32 %v1118, %v1122
    %vm1124 = vweird.f32 %v1117
    %vm1125 = vweird.f32 %v1118
    %vm1126 = vmor %vm1124, %vm1125
    %v1127 = vsel %vm1126, %v1118, %v1123
    %v1128 = vmul.f32 %v1116, %v1127
    %v1129 = vld [vmem:[#allocation12] sm:$0x1]
    %v1130 = vmul.f32 %v1032, %v1128
    %v1131 = vsub.f32 %v1129, %v1130
    %vm1132 = vcmask 261120
    %v1134 = vsel %vm1132, %v1128, 0
    %1136 = vmatpush.msra.mxu0 0.0
    %1137 = vmatpush.msra.mxu0 0.0
    %1138 = vmatpush.msra.mxu0 0.0
    %1139 = vmatpush.msra.mxu0 0.0
    %1140 = vmatpush.msra.mxu0 0.0
    %1141 = vmatpush.msra.mxu0 0.0
    %1142 = vmatpush.msra.mxu0 0.0
    %1143 = vmatpush.msra.mxu0 0.0
    %1144 = vmatpush.msra.mxu0 0.0
    %1145 = vmatpush.msra.mxu0 0.0
    %1146 = vmatpush.msra.mxu0 0.0
    %1147 = vmatpush.msra.mxu0 0.0
    %1148 = vmatpush.msra.mxu0 %v298
    %1149 = vmatpush.msra.mxu0 %v294
    %1150 = vmatpush.msra.mxu0 %v290
    %1151 = vmatpush.msra.mxu0 %v286
    %1152 = vmatmul.f32.gmra.mxu0 %v1134
    %v1153 = vpop.f32.mrf.mxu0
    %v1154 = vadd.f32 0.0, %v1153
    %1155 = vdwg.mxu0
    %1156 = vmatpush.msra.mxu0 0.0
    %1157 = vmatpush.msra.mxu0 0.0
    %1158 = vmatpush.msra.mxu0 0.0
    %1159 = vmatpush.msra.mxu0 0.0
    %1160 = vmatpush.msra.mxu0 0.0
    %1161 = vmatpush.msra.mxu0 0.0
    %1162 = vmatpush.msra.mxu0 0.0
    %1163 = vmatpush.msra.mxu0 0.0
    %1164 = vmatpush.msra.mxu0 0.0
    %1165 = vmatpush.msra.mxu0 0.0
    %1166 = vmatpush.msra.mxu0 0.0
    %1167 = vmatpush.msra.mxu0 0.0
    %1168 = vmatpush.msra.mxu0 %v299
    %1169 = vmatpush.msra.mxu0 %v295
    %1170 = vmatpush.msra.mxu0 %v291
    %1171 = vmatpush.msra.mxu0 %v287
    %1172 = vmatmul.f32.gmra.mxu0 %v1134
    %v1173 = vpop.f32.mrf.mxu0
    %v1174 = vadd.f32 0.0, %v1173
    %1175 = vdwg.mxu0
    %1176 = vmatpush.msra.mxu0 0.0
    %1177 = vmatpush.msra.mxu0 0.0
    %1178 = vmatpush.msra.mxu0 0.0
    %1179 = vmatpush.msra.mxu0 0.0
    %1180 = vmatpush.msra.mxu0 0.0
    %1181 = vmatpush.msra.mxu0 0.0
    %1182 = vmatpush.msra.mxu0 0.0
    %1183 = vmatpush.msra.mxu0 0.0
    %1184 = vmatpush.msra.mxu0 0.0
    %1185 = vmatpush.msra.mxu0 0.0
    %1186 = vmatpush.msra.mxu0 0.0
    %1187 = vmatpush.msra.mxu0 0.0
    %1188 = vmatpush.msra.mxu0 %v300
    %1189 = vmatpush.msra.mxu0 %v296
    %1190 = vmatpush.msra.mxu0 %v292
    %1191 = vmatpush.msra.mxu0 %v288
    %1192 = vmatmul.f32.gmra.mxu0 %v1134
    %v1193 = vpop.f32.mrf.mxu0
    %v1194 = vadd.f32 0.0, %v1193
    %1195 = vdwg.mxu0
    %1196 = vmatpush.msra.mxu0 0.0
    %1197 = vmatpush.msra.mxu0 0.0
    %1198 = vmatpush.msra.mxu0 0.0
    %1199 = vmatpush.msra.mxu0 0.0
    %1200 = vmatpush.msra.mxu0 0.0
    %1201 = vmatpush.msra.mxu0 0.0
    %1202 = vmatpush.msra.mxu0 0.0
    %1203 = vmatpush.msra.mxu0 0.0
    %1204 = vmatpush.msra.mxu0 0.0
    %1205 = vmatpush.msra.mxu0 0.0
    %1206 = vmatpush.msra.mxu0 0.0
    %1207 = vmatpush.msra.mxu0 0.0
    %1208 = vmatpush.msra.mxu0 %v301
    %1209 = vmatpush.msra.mxu0 %v297
    %1210 = vmatpush.msra.mxu0 %v293
    %1211 = vmatpush.msra.mxu0 %v289
    %1212 = vmatmul.f32.gmra.mxu0 %v1134
    %v1213 = vpop.f32.mrf.mxu0
    %v1214 = vadd.f32 0.0, %v1213
    %1215 = vdwg.mxu0
    %v1217 = vsel %vm1132, %v1131, 0
    %1219 = vmatpush.msra.mxu0 0.0
    %1220 = vmatpush.msra.mxu0 0.0
    %1221 = vmatpush.msra.mxu0 0.0
    %1222 = vmatpush.msra.mxu0 0.0
    %1223 = vmatpush.msra.mxu0 0.0
    %1224 = vmatpush.msra.mxu0 0.0
    %1225 = vmatpush.msra.mxu0 0.0
    %1226 = vmatpush.msra.mxu0 0.0
    %1227 = vmatpush.msra.mxu0 0.0
    %1228 = vmatpush.msra.mxu0 0.0
    %1229 = vmatpush.msra.mxu0 0.0
    %1230 = vmatpush.msra.mxu0 0.0
    %1231 = vmatpush.msra.mxu0 %v298
    %1232 = vmatpush.msra.mxu0 %v294
    %1233 = vmatpush.msra.mxu0 %v290
    %1234 = vmatpush.msra.mxu0 %v286
    %1235 = vmatmul.f32.gmra.mxu0 %v1217
    %v1236 = vpop.f32.mrf.mxu0
    %v1237 = vadd.f32 0.0, %v1236
    %1238 = vdwg.mxu0
    %1239 = vmatpush.msra.mxu0 0.0
    %1240 = vmatpush.msra.mxu0 0.0
    %1241 = vmatpush.msra.mxu0 0.0
    %1242 = vmatpush.msra.mxu0 0.0
    %1243 = vmatpush.msra.mxu0 0.0
    %1244 = vmatpush.msra.mxu0 0.0
    %1245 = vmatpush.msra.mxu0 0.0
    %1246 = vmatpush.msra.mxu0 0.0
    %1247 = vmatpush.msra.mxu0 0.0
    %1248 = vmatpush.msra.mxu0 0.0
    %1249 = vmatpush.msra.mxu0 0.0
    %1250 = vmatpush.msra.mxu0 0.0
    %1251 = vmatpush.msra.mxu0 %v299
    %1252 = vmatpush.msra.mxu0 %v295
    %1253 = vmatpush.msra.mxu0 %v291
    %1254 = vmatpush.msra.mxu0 %v287
    %1255 = vmatmul.f32.gmra.mxu0 %v1217
    %v1256 = vpop.f32.mrf.mxu0
    %v1257 = vadd.f32 0.0, %v1256
    %1258 = vdwg.mxu0
    %1259 = vmatpush.msra.mxu0 0.0
    %1260 = vmatpush.msra.mxu0 0.0
    %1261 = vmatpush.msra.mxu0 0.0
    %1262 = vmatpush.msra.mxu0 0.0
    %1263 = vmatpush.msra.mxu0 0.0
    %1264 = vmatpush.msra.mxu0 0.0
    %1265 = vmatpush.msra.mxu0 0.0
    %1266 = vmatpush.msra.mxu0 0.0
    %1267 = vmatpush.msra.mxu0 0.0
    %1268 = vmatpush.msra.mxu0 0.0
    %1269 = vmatpush.msra.mxu0 0.0
    %1270 = vmatpush.msra.mxu0 0.0
    %1271 = vmatpush.msra.mxu0 %v300
    %1272 = vmatpush.msra.mxu0 %v296
    %1273 = vmatpush.msra.mxu0 %v292
    %1274 = vmatpush.msra.mxu0 %v288
    %1275 = vmatmul.f32.gmra.mxu0 %v1217
    %v1276 = vpop.f32.mrf.mxu0
    %v1277 = vadd.f32 0.0, %v1276
    %1278 = vdwg.mxu0
    %1279 = vmatpush.msra.mxu0 0.0
    %1280 = vmatpush.msra.mxu0 0.0
    %1281 = vmatpush.msra.mxu0 0.0
    %1282 = vmatpush.msra.mxu0 0.0
    %1283 = vmatpush.msra.mxu0 0.0
    %1284 = vmatpush.msra.mxu0 0.0
    %1285 = vmatpush.msra.mxu0 0.0
    %1286 = vmatpush.msra.mxu0 0.0
    %1287 = vmatpush.msra.mxu0 0.0
    %1288 = vmatpush.msra.mxu0 0.0
    %1289 = vmatpush.msra.mxu0 0.0
    %1290 = vmatpush.msra.mxu0 0.0
    %1291 = vmatpush.msra.mxu0 %v301
    %1292 = vmatpush.msra.mxu0 %v297
    %1293 = vmatpush.msra.mxu0 %v293
    %1294 = vmatpush.msra.mxu0 %v289
    %1295 = vmatmul.f32.gmra.mxu0 %v1217
    %v1296 = vpop.f32.mrf.mxu0
    %v1297 = vadd.f32 0.0, %v1296
    %1298 = vdwg.mxu0
    %v1299 = vperm.slane %v1154, 0
    %v1300 = vperm.slane %v1174, 0
    %v1301 = vperm.slane %v1194, 0
    %v1302 = vperm.slane %v1214, 0
    %v1303 = vmul.f32 %v848, %v1299
    %v1304 = vmul.f32 %v849, %v1300
    %v1305 = vmul.f32 %v850, %v1301
    %v1306 = vmul.f32 %v851, %v1302
    %v1307 = vmul.f32 %v852, %v1299
    %v1308 = vmul.f32 %v853, %v1300
    %v1309 = vmul.f32 %v854, %v1301
    %v1310 = vmul.f32 %v855, %v1302
    %v1311 = vmul.f32 %v856, %v1299
    %v1312 = vmul.f32 %v857, %v1300
    %v1313 = vmul.f32 %v858, %v1301
    %v1314 = vmul.f32 %v859, %v1302
    %v1315 = vmul.f32 %v860, %v1299
    %v1316 = vmul.f32 %v861, %v1300
    %v1317 = vmul.f32 %v862, %v1301
    %v1318 = vmul.f32 %v863, %v1302
    %v1319 = vperm.slane %v1237, 0
    %v1320 = vperm.slane %v1257, 0
    %v1321 = vperm.slane %v1277, 0
    %v1322 = vperm.slane %v1297, 0
    %v1323 = vadd.f32 %v1303, %v1319
    %v1324 = vadd.f32 %v1304, %v1320
    %v1325 = vadd.f32 %v1305, %v1321
    %v1326 = vadd.f32 %v1306, %v1322
    %v1327 = vadd.f32 %v1307, %v1319
    %v1328 = vadd.f32 %v1308, %v1320
    %v1329 = vadd.f32 %v1309, %v1321
    %v1330 = vadd.f32 %v1310, %v1322
    %v1331 = vadd.f32 %v1311, %v1319
    %v1332 = vadd.f32 %v1312, %v1320
    %v1333 = vadd.f32 %v1313, %v1321
    %v1334 = vadd.f32 %v1314, %v1322
    %v1335 = vadd.f32 %v1315, %v1319
    %v1336 = vadd.f32 %v1316, %v1320
    %v1337 = vadd.f32 %v1317, %v1321
    %v1338 = vadd.f32 %v1318, %v1322
    %v1339 = vmax.f32 %v1323, 0.0
    %v1340 = vmax.f32 %v1324, 0.0
    %v1341 = vmax.f32 %v1325, 0.0
    %v1342 = vmax.f32 %v1326, 0.0
    %v1343 = vmax.f32 %v1327, 0.0
    %v1344 = vmax.f32 %v1328, 0.0
    %v1345 = vmax.f32 %v1329, 0.0
    %v1346 = vmax.f32 %v1330, 0.0
    %v1347 = vmax.f32 %v1331, 0.0
    %v1348 = vmax.f32 %v1332, 0.0
    %v1349 = vmax.f32 %v1333, 0.0
    %v1350 = vmax.f32 %v1334, 0.0
    %v1351 = vmax.f32 %v1335, 0.0
    %v1352 = vmax.f32 %v1336, 0.0
    %v1353 = vmax.f32 %v1337, 0.0
    %v1354 = vmax.f32 %v1338, 0.0
    %v1355 = vadd.f32 %v1339, %v1343
    %v1356 = vrot.slane %v1355, 4
    %v1357 = vadd.f32 %v1355, %v1356
    %v1358 = vrot.slane %v1357, 2
    %v1359 = vadd.f32 %v1357, %v1358
    %v1360 = vrot.slane %v1359, 1
    %v1361 = vadd.f32 %v1359, %v1360
    %v1362 = vadd.f32 %v1340, %v1344
    %v1363 = vrot.slane %v1362, 4
    %v1364 = vadd.f32 %v1362, %v1363
    %v1365 = vrot.slane %v1364, 2
    %v1366 = vadd.f32 %v1364, %v1365
    %v1367 = vrot.slane %v1366, 1
    %v1368 = vadd.f32 %v1366, %v1367
    %v1369 = vadd.f32 %v1341, %v1345
    %v1370 = vrot.slane %v1369, 4
    %v1371 = vadd.f32 %v1369, %v1370
    %v1372 = vrot.slane %v1371, 2
    %v1373 = vadd.f32 %v1371, %v1372
    %v1374 = vrot.slane %v1373, 1
    %v1375 = vadd.f32 %v1373, %v1374
    %v1376 = vadd.f32 %v1342, %v1346
    %v1377 = vrot.slane %v1376, 4
    %v1378 = vadd.f32 %v1376, %v1377
    %v1379 = vrot.slane %v1378, 2
    %v1380 = vadd.f32 %v1378, %v1379
    %v1381 = vrot.slane %v1380, 1
    %v1382 = vadd.f32 %v1380, %v1381
    %v1383 = vadd.f32 %v1347, %v1351
    %v1384 = vrot.slane %v1383, 4
    %v1385 = vadd.f32 %v1383, %v1384
    %v1386 = vrot.slane %v1385, 2
    %v1387 = vadd.f32 %v1385, %v1386
    %v1388 = vrot.slane %v1387, 1
    %v1389 = vadd.f32 %v1387, %v1388
    %v1390 = vadd.f32 %v1348, %v1352
    %v1391 = vrot.slane %v1390, 4
    %v1392 = vadd.f32 %v1390, %v1391
    %v1393 = vrot.slane %v1392, 2
    %v1394 = vadd.f32 %v1392, %v1393
    %v1395 = vrot.slane %v1394, 1
    %v1396 = vadd.f32 %v1394, %v1395
    %v1397 = vadd.f32 %v1349, %v1353
    %v1398 = vrot.slane %v1397, 4
    %v1399 = vadd.f32 %v1397, %v1398
    %v1400 = vrot.slane %v1399, 2
    %v1401 = vadd.f32 %v1399, %v1400
    %v1402 = vrot.slane %v1401, 1
    %v1403 = vadd.f32 %v1401, %v1402
    %v1404 = vadd.f32 %v1350, %v1354
    %v1405 = vrot.slane %v1404, 4
    %v1406 = vadd.f32 %v1404, %v1405
    %v1407 = vrot.slane %v1406, 2
    %v1408 = vadd.f32 %v1406, %v1407
    %v1409 = vrot.slane %v1408, 1
    %v1410 = vadd.f32 %v1408, %v1409
    %vm1419 = vcmask 1041409
    %v1420 = vsel %vm1419, %v1389, %v1361
    %v1421 = vsel %vm1419, %v1396, %v1368
    %v1422 = vsel %vm1419, %v1403, %v1375
    %v1423 = vsel %vm1419, %v1410, %v1382
    %1428 = vmatpush.msra.mxu0 %v237
    %1429 = vmatpush.msra.mxu0 %v236
    %1430 = vmatpush.msra.mxu0 %v235
    %1431 = vmatpush.msra.mxu0 %v234
    %1432 = vmatpush.msra.mxu0 %v233
    %1433 = vmatpush.msra.mxu0 %v232
    %1434 = vmatpush.msra.mxu0 %v231
    %1435 = vmatpush.msra.mxu0 %v230
    %1436 = vmatpush.msra.mxu0 %v229
    %1437 = vmatpush.msra.mxu0 %v228
    %1438 = vmatpush.msra.mxu0 %v227
    %1439 = vmatpush.msra.mxu0 %v226
    %1440 = vmatpush.msra.mxu0 %v225
    %1441 = vmatpush.msra.mxu0 %v224
    %1442 = vmatpush.msra.mxu0 %v223
    %1443 = vmatpush.msra.mxu0 %v222
    %1444 = vmatmul.f32.gmra.mxu0 %v1420
    %v1445 = vpop.f32.mrf.mxu0
    %v1446 = vadd.f32 0.0, %v1445
    %1447 = vdwg.mxu0
    %1448 = vmatpush.msra.mxu0 %v253
    %1449 = vmatpush.msra.mxu0 %v252
    %1450 = vmatpush.msra.mxu0 %v251
    %1451 = vmatpush.msra.mxu0 %v250
    %1452 = vmatpush.msra.mxu0 %v249
    %1453 = vmatpush.msra.mxu0 %v248
    %1454 = vmatpush.msra.mxu0 %v247
    %1455 = vmatpush.msra.mxu0 %v246
    %1456 = vmatpush.msra.mxu0 %v245
    %1457 = vmatpush.msra.mxu0 %v244
    %1458 = vmatpush.msra.mxu0 %v243
    %1459 = vmatpush.msra.mxu0 %v242
    %1460 = vmatpush.msra.mxu0 %v241
    %1461 = vmatpush.msra.mxu0 %v240
    %1462 = vmatpush.msra.mxu0 %v239
    %1463 = vmatpush.msra.mxu0 %v238
    %1464 = vmatmul.f32.gmra.mxu0 %v1421
    %v1465 = vpop.f32.mrf.mxu0
    %v1466 = vadd.f32 %v1446, %v1465
    %1467 = vdwg.mxu0
    %1468 = vmatpush.msra.mxu0 %v269
    %1469 = vmatpush.msra.mxu0 %v268
    %1470 = vmatpush.msra.mxu0 %v267
    %1471 = vmatpush.msra.mxu0 %v266
    %1472 = vmatpush.msra.mxu0 %v265
    %1473 = vmatpush.msra.mxu0 %v264
    %1474 = vmatpush.msra.mxu0 %v263
    %1475 = vmatpush.msra.mxu0 %v262
    %1476 = vmatpush.msra.mxu0 %v261
    %1477 = vmatpush.msra.mxu0 %v260
    %1478 = vmatpush.msra.mxu0 %v259
    %1479 = vmatpush.msra.mxu0 %v258
    %1480 = vmatpush.msra.mxu0 %v257
    %1481 = vmatpush.msra.mxu0 %v256
    %1482 = vmatpush.msra.mxu0 %v255
    %1483 = vmatpush.msra.mxu0 %v254
    %1484 = vmatmul.f32.gmra.mxu0 %v1422
    %v1485 = vpop.f32.mrf.mxu0
    %v1486 = vadd.f32 %v1466, %v1485
    %1487 = vdwg.mxu0
    %1488 = vmatpush.msra.mxu0 %v285
    %1489 = vmatpush.msra.mxu0 %v284
    %1490 = vmatpush.msra.mxu0 %v283
    %1491 = vmatpush.msra.mxu0 %v282
    %1492 = vmatpush.msra.mxu0 %v281
    %1493 = vmatpush.msra.mxu0 %v280
    %1494 = vmatpush.msra.mxu0 %v279
    %1495 = vmatpush.msra.mxu0 %v278
    %1496 = vmatpush.msra.mxu0 %v277
    %1497 = vmatpush.msra.mxu0 %v276
    %1498 = vmatpush.msra.mxu0 %v275
    %1499 = vmatpush.msra.mxu0 %v274
    %1500 = vmatpush.msra.mxu0 %v273
    %1501 = vmatpush.msra.mxu0 %v272
    %1502 = vmatpush.msra.mxu0 %v271
    %1503 = vmatpush.msra.mxu0 %v270
    %1504 = vmatmul.f32.gmra.mxu0 %v1423
    %v1505 = vpop.f32.mrf.mxu0
    %v1506 = vadd.f32 %v1486, %v1505
    %1507 = vdwg.mxu0
    %v1508 = vmul.f32 %v1506, 0.00390625
    %v1509 = vld [vmem:[%s5] sm:$0xff]
    %v1510 = vld [vmem:[%s5 + $0x8] sm:$0xff]
    %v1511 = vld [vmem:[%s5 + $0x10] sm:$0xff]
    %v1512 = vld [vmem:[%s5 + $0x18] sm:$0xff]
    %v1514 = vsel %vm1132, %v1508, 0
    %1516 = vmatpush.msra.mxu0 0.0
    %1517 = vmatpush.msra.mxu0 0.0
    %1518 = vmatpush.msra.mxu0 0.0
    %1519 = vmatpush.msra.mxu0 0.0
    %1520 = vmatpush.msra.mxu0 0.0
    %1521 = vmatpush.msra.mxu0 0.0
    %1522 = vmatpush.msra.mxu0 0.0
    %1523 = vmatpush.msra.mxu0 0.0
    %1524 = vmatpush.msra.mxu0 0.0
    %1525 = vmatpush.msra.mxu0 0.0
    %1526 = vmatpush.msra.mxu0 0.0
    %1527 = vmatpush.msra.mxu0 0.0
    %1528 = vmatpush.msra.mxu0 %v1512
    %1529 = vmatpush.msra.mxu0 %v1511
    %1530 = vmatpush.msra.mxu0 %v1510
    %1531 = vmatpush.msra.mxu0 %v1509
    %1532 = vmatmul.f32.gmra.mxu0 %v1514
    %v1533 = vpop.f32.mrf.mxu0
    %v1534 = vadd.f32 0.0, %v1533
    %1535 = vdwg.mxu0
    %v1536 = vmax.f32 %v1534, 0.0
    %v1537 = vld [vmem:[#allocation13] sm:$0x3]
    %vm1538 = vcmask 15360
    %v1540 = vsel %vm1538, %v1536, 0
    %vm1542 = vcmask 1041408
    %v1544 = vsel %vm1542, %v1537, 0
    %1546 = vmatpush.msra.mxu0 0.0
    %1547 = vmatpush.msra.mxu0 0.0
    %1548 = vmatpush.msra.mxu0 0.0
    %1549 = vmatpush.msra.mxu0 0.0
    %1550 = vmatpush.msra.mxu0 0.0
    %1551 = vmatpush.msra.mxu0 0.0
    %1552 = vmatpush.msra.mxu0 0.0
    %1553 = vmatpush.msra.mxu0 0.0
    %1554 = vmatpush.msra.mxu0 0.0
    %1555 = vmatpush.msra.mxu0 0.0
    %1556 = vmatpush.msra.mxu0 0.0
    %1557 = vmatpush.msra.mxu0 0.0
    %1558 = vmatpush.msra.mxu0 0.0
    %1559 = vmatpush.msra.mxu0 0.0
    %1560 = vmatpush.msra.mxu0 0.0
    %1561 = vmatpush.msra.mxu0 %v1544
    %1562 = vmatmul.f32.gmra.mxu0 %v1540
    %v1563 = vpop.f32.mrf.mxu0
    %v1564 = vadd.f32 0.0, %v1563
    %1565 = vdwg.mxu0
    %v1566 = vxor.u32 %v1564, 2147483648
    %v1567 = vmul.f32 %v1566, 1.442695
    %v1568 = vpow.pop %v1567
    %v1569 = vadd.f32 %v1568, 1.0
    %v1570 = vrcp.pop %v1569
    %v1571 = vmul.f32 %v1569, %v1570
    %v1572 = vsub.f32 1.0, %v1571
    %v1573 = vmul.f32 %v1570, %v1572
    %v1574 = vadd.f32 %v1570, %v1573
    %vm1575 = vweird.f32 %v1569
    %vm1576 = vweird.f32 %v1570
    %vm1577 = vmor %vm1575, %vm1576
    %v1578 = vsel %vm1577, %v1570, %v1574
    %v1579 = vand.u32 2147483647, %v1569
    %vm1580 = vcmp.eq.f32.partialorder %v1579, 8.507059e+37
    %v1581 = vand.u32 %v1569, 2147483648
    %v1582 = vor.u32 1.1754944e-38, %v1581
    %v1583 = vsel %vm1580, %v1582, %v1578
    %v1584 = vmul.f32 1.0, %v1583
    %v1586 = vsel %vm1132, %v1584, 0
    %1588 = vmatpush.msra.mxu0 0.0
    %1589 = vmatpush.msra.mxu0 0.0
    %1590 = vmatpush.msra.mxu0 0.0
    %1591 = vmatpush.msra.mxu0 0.0
    %1592 = vmatpush.msra.mxu0 0.0
    %1593 = vmatpush.msra.mxu0 0.0
    %1594 = vmatpush.msra.mxu0 0.0
    %1595 = vmatpush.msra.mxu0 0.0
    %1596 = vmatpush.msra.mxu0 0.0
    %1597 = vmatpush.msra.mxu0 0.0
    %1598 = vmatpush.msra.mxu0 0.0
    %1599 = vmatpush.msra.mxu0 0.0
    %1600 = vmatpush.msra.mxu0 %v298
    %1601 = vmatpush.msra.mxu0 %v294
    %1602 = vmatpush.msra.mxu0 %v290
    %1603 = vmatpush.msra.mxu0 %v286
    %1604 = vmatmul.f32.gmra.mxu0 %v1586
    %v1605 = vpop.f32.mrf.mxu0
    %v1606 = vadd.f32 0.0, %v1605
    %1607 = vdwg.mxu0
    %1608 = vmatpush.msra.mxu0 0.0
    %1609 = vmatpush.msra.mxu0 0.0
    %1610 = vmatpush.msra.mxu0 0.0
    %1611 = vmatpush.msra.mxu0 0.0
    %1612 = vmatpush.msra.mxu0 0.0
    %1613 = vmatpush.msra.mxu0 0.0
    %1614 = vmatpush.msra.mxu0 0.0
    %1615 = vmatpush.msra.mxu0 0.0
    %1616 = vmatpush.msra.mxu0 0.0
    %1617 = vmatpush.msra.mxu0 0.0
    %1618 = vmatpush.msra.mxu0 0.0
    %1619 = vmatpush.msra.mxu0 0.0
    %1620 = vmatpush.msra.mxu0 %v299
    %1621 = vmatpush.msra.mxu0 %v295
    %1622 = vmatpush.msra.mxu0 %v291
    %1623 = vmatpush.msra.mxu0 %v287
    %1624 = vmatmul.f32.gmra.mxu0 %v1586
    %v1625 = vpop.f32.mrf.mxu0
    %v1626 = vadd.f32 0.0, %v1625
    %1627 = vdwg.mxu0
    %1628 = vmatpush.msra.mxu0 0.0
    %1629 = vmatpush.msra.mxu0 0.0
    %1630 = vmatpush.msra.mxu0 0.0
    %1631 = vmatpush.msra.mxu0 0.0
    %1632 = vmatpush.msra.mxu0 0.0
    %1633 = vmatpush.msra.mxu0 0.0
    %1634 = vmatpush.msra.mxu0 0.0
    %1635 = vmatpush.msra.mxu0 0.0
    %1636 = vmatpush.msra.mxu0 0.0
    %1637 = vmatpush.msra.mxu0 0.0
    %1638 = vmatpush.msra.mxu0 0.0
    %1639 = vmatpush.msra.mxu0 0.0
    %1640 = vmatpush.msra.mxu0 %v300
    %1641 = vmatpush.msra.mxu0 %v296
    %1642 = vmatpush.msra.mxu0 %v292
    %1643 = vmatpush.msra.mxu0 %v288
    %1644 = vmatmul.f32.gmra.mxu0 %v1586
    %v1645 = vpop.f32.mrf.mxu0
    %v1646 = vadd.f32 0.0, %v1645
    %1647 = vdwg.mxu0
    %1648 = vmatpush.msra.mxu0 0.0
    %1649 = vmatpush.msra.mxu0 0.0
    %1650 = vmatpush.msra.mxu0 0.0
    %1651 = vmatpush.msra.mxu0 0.0
    %1652 = vmatpush.msra.mxu0 0.0
    %1653 = vmatpush.msra.mxu0 0.0
    %1654 = vmatpush.msra.mxu0 0.0
    %1655 = vmatpush.msra.mxu0 0.0
    %1656 = vmatpush.msra.mxu0 0.0
    %1657 = vmatpush.msra.mxu0 0.0
    %1658 = vmatpush.msra.mxu0 0.0
    %1659 = vmatpush.msra.mxu0 0.0
    %1660 = vmatpush.msra.mxu0 %v301
    %1661 = vmatpush.msra.mxu0 %v297
    %1662 = vmatpush.msra.mxu0 %v293
    %1663 = vmatpush.msra.mxu0 %v289
    %1664 = vmatmul.f32.gmra.mxu0 %v1586
    %v1665 = vpop.f32.mrf.mxu0
    %v1666 = vadd.f32 0.0, %v1665
    %1667 = vdwg.mxu0
    %v1672 = vrot.slane %v1626, 7
    %v1673 = vrot.slane %v1646, 6
    %v1674 = vrot.slane %v1666, 5
    %vm1675 = vcmask 1040384
    %v1676 = vsel %vm1675, %v1606, %v1672
    %vm1677 = vcmask 1042434
    %v1678 = vsel %vm1677, %v1673, %v1674
    %v1679 = vsel %vm1542, %v1676, %v1678
    %v1680 = vsel %vm1419, %v1606, %v1672
    %vm1681 = vcmask 1043459
    %v1682 = vsel %vm1681, %v1673, %v1674
    %vm1683 = vcmask 1042433
    %v1684 = vsel %vm1683, %v1680, %v1682
    %v1685 = vrot.slane %v1684, 1
    %v1686 = vperm.slane %v1679, 0
    %v1687 = vperm.slane %v1679, 1
    %v1688 = vperm.slane %v1679, 2
    %v1689 = vperm.slane %v1679, 3
    %v1690 = vperm.slane %v1685, 0
    %v1691 = vperm.slane %v1685, 1
    %v1692 = vperm.slane %v1685, 2
    %v1693 = vperm.slane %v1685, 3
    %v1702 = vmul.f32 %v1339, %v1686
    %v1703 = vmul.f32 %v1340, %v1687
    %v1704 = vmul.f32 %v1341, %v1688
    %v1705 = vmul.f32 %v1342, %v1689
    %v1706 = vmul.f32 %v1343, %v1686
    %v1707 = vmul.f32 %v1344, %v1687
    %v1708 = vmul.f32 %v1345, %v1688
    %v1709 = vmul.f32 %v1346, %v1689
    %v1710 = vmul.f32 %v1347, %v1690
    %v1711 = vmul.f32 %v1348, %v1691
    %v1712 = vmul.f32 %v1349, %v1692
    %v1713 = vmul.f32 %v1350, %v1693
    %v1714 = vmul.f32 %v1351, %v1690
    %v1715 = vmul.f32 %v1352, %v1691
    %v1716 = vmul.f32 %v1353, %v1692
    %v1717 = vmul.f32 %v1354, %v1693
    %1718 = vst [vmem:[#allocation3] sm:$0xff] 0.0
    %1719 = vst [vmem:[#allocation3 + $0x8] sm:$0xff] 0.0
    %1720 = vst [vmem:[#allocation3 + $0x10] sm:$0xff] 0.0
    %1721 = vst [vmem:[#allocation3 + $0x18] sm:$0xff] 0.0
    %1722 = vst [vmem:[#allocation3 + $0x20] sm:$0xff] 0.0
    %1723 = vst [vmem:[#allocation3 + $0x28] sm:$0xff] 0.0
    %1724 = vst [vmem:[#allocation3 + $0x30] sm:$0xff] 0.0
    %1725 = vst [vmem:[#allocation3 + $0x38] sm:$0xff] 0.0
    %1726 = vst [vmem:[#allocation3 + $0x40] sm:$0x3] 0.0
    %1727 = vst [vmem:[#allocation3 + $0x48] sm:$0x3] 0.0
    %1728 = vst [vmem:[#allocation3 + $0x50] sm:$0x3] 0.0
    %1729 = vst [vmem:[#allocation3 + $0x58] sm:$0x3] 0.0
    %1730 = vst [vmem:[#allocation3 + $0x60] sm:$0xff] 0.0
    %1731 = vst [vmem:[#allocation3 + $0x68] sm:$0xff] 0.0
    %1732 = vst [vmem:[#allocation3 + $0x70] sm:$0xff] 0.0
    %1733 = vst [vmem:[#allocation3 + $0x78] sm:$0xff] 0.0
    %1734 = vst [vmem:[#allocation3 + $0x80] sm:$0xff] 0.0
    %1735 = vst [vmem:[#allocation3 + $0x88] sm:$0xff] 0.0
    %1736 = vst [vmem:[#allocation3 + $0x90] sm:$0xff] 0.0
    %1737 = vst [vmem:[#allocation3 + $0x98] sm:$0xff] 0.0
    %1738 = vst [vmem:[#allocation3 + $0xa0] sm:$0x3] 0.0
    %1739 = vst [vmem:[#allocation3 + $0xa8] sm:$0x3] 0.0
    %1740 = vst [vmem:[#allocation3 + $0xb0] sm:$0x3] 0.0
    %1741 = vst [vmem:[#allocation3 + $0xb8] sm:$0x3] 0.0
    %v1758 = vrot.slane %v1702, 7
    %v1759 = vrot.slane %v1703, 7
    %v1760 = vrot.slane %v1704, 7
    %v1761 = vrot.slane %v1705, 7
    %v1762 = vrot.slane %v1706, 7
    %v1763 = vsel %vm1675, %v1758, %v1762
    %v1764 = vrot.slane %v1707, 7
    %v1765 = vsel %vm1675, %v1759, %v1764
    %v1766 = vrot.slane %v1708, 7
    %v1767 = vsel %vm1675, %v1760, %v1766
    %v1768 = vrot.slane %v1709, 7
    %v1769 = vsel %vm1675, %v1761, %v1768
    %v1770 = vrot.slane %v1710, 7
    %v1771 = vrot.slane %v1711, 7
    %v1772 = vrot.slane %v1712, 7
    %v1773 = vrot.slane %v1713, 7
    %v1774 = vrot.slane %v1714, 7
    %v1775 = vsel %vm1675, %v1770, %v1774
    %v1776 = vrot.slane %v1715, 7
    %v1777 = vsel %vm1675, %v1771, %v1776
    %v1778 = vrot.slane %v1716, 7
    %v1779 = vsel %vm1675, %v1772, %v1778
    %v1780 = vrot.slane %v1717, 7
    %v1781 = vsel %vm1675, %v1773, %v1780
    %1806 = vst [vmem:[#allocation3] sm:$0xfe] %v1758
    %1807 = vst [vmem:[#allocation3 + $0x8] sm:$0xfe] %v1759
    %1808 = vst [vmem:[#allocation3 + $0x10] sm:$0xfe] %v1760
    %1809 = vst [vmem:[#allocation3 + $0x18] sm:$0xfe] %v1761
    %1810 = vst [vmem:[#allocation3 + $0x20] sm:$0xff] %v1763
    %1811 = vst [vmem:[#allocation3 + $0x28] sm:$0xff] %v1765
    %1812 = vst [vmem:[#allocation3 + $0x30] sm:$0xff] %v1767
    %1813 = vst [vmem:[#allocation3 + $0x38] sm:$0xff] %v1769
    %1814 = vst [vmem:[#allocation3 + $0x40] sm:$0x1] %v1762
    %1815 = vst [vmem:[#allocation3 + $0x48] sm:$0x1] %v1764
    %1816 = vst [vmem:[#allocation3 + $0x50] sm:$0x1] %v1766
    %1817 = vst [vmem:[#allocation3 + $0x58] sm:$0x1] %v1768
    %1818 = vst [vmem:[#allocation3 + $0x60] sm:$0xfe] %v1770
    %1819 = vst [vmem:[#allocation3 + $0x68] sm:$0xfe] %v1771
    %1820 = vst [vmem:[#allocation3 + $0x70] sm:$0xfe] %v1772
    %1821 = vst [vmem:[#allocation3 + $0x78] sm:$0xfe] %v1773
    %1822 = vst [vmem:[#allocation3 + $0x80] sm:$0xff] %v1775
    %1823 = vst [vmem:[#allocation3 + $0x88] sm:$0xff] %v1777
    %1824 = vst [vmem:[#allocation3 + $0x90] sm:$0xff] %v1779
    %1825 = vst [vmem:[#allocation3 + $0x98] sm:$0xff] %v1781
    %1826 = vst [vmem:[#allocation3 + $0xa0] sm:$0x1] %v1774
    %1827 = vst [vmem:[#allocation3 + $0xa8] sm:$0x1] %v1776
    %1828 = vst [vmem:[#allocation3 + $0xb0] sm:$0x1] %v1778
    %1829 = vst [vmem:[#allocation3 + $0xb8] sm:$0x1] %v1780
    %v1830 = vld [vmem:[#allocation3] sm:$0xff]
    %v1831 = vld [vmem:[#allocation3 + $0x8] sm:$0xff]
    %v1832 = vld [vmem:[#allocation3 + $0x10] sm:$0xff]
    %v1833 = vld [vmem:[#allocation3 + $0x18] sm:$0xff]
    %v1834 = vld [vmem:[#allocation3 + $0x20] sm:$0xff]
    %v1835 = vld [vmem:[#allocation3 + $0x28] sm:$0xff]
    %v1836 = vld [vmem:[#allocation3 + $0x30] sm:$0xff]
    %v1837 = vld [vmem:[#allocation3 + $0x38] sm:$0xff]
    %v1838 = vld [vmem:[#allocation3 + $0x40] sm:$0x3]
    %v1839 = vld [vmem:[#allocation3 + $0x48] sm:$0x3]
    %v1840 = vld [vmem:[#allocation3 + $0x50] sm:$0x3]
    %v1841 = vld [vmem:[#allocation3 + $0x58] sm:$0x3]
    %v1842 = vld [vmem:[#allocation3 + $0x60] sm:$0xff]
    %v1843 = vld [vmem:[#allocation3 + $0x68] sm:$0xff]
    %v1844 = vld [vmem:[#allocation3 + $0x70] sm:$0xff]
    %v1845 = vld [vmem:[#allocation3 + $0x78] sm:$0xff]
    %v1846 = vld [vmem:[#allocation3 + $0x80] sm:$0xff]
    %v1847 = vld [vmem:[#allocation3 + $0x88] sm:$0xff]
    %v1848 = vld [vmem:[#allocation3 + $0x90] sm:$0xff]
    %v1849 = vld [vmem:[#allocation3 + $0x98] sm:$0xff]
    %v1850 = vld [vmem:[#allocation3 + $0xa0] sm:$0x3]
    %v1851 = vld [vmem:[#allocation3 + $0xa8] sm:$0x3]
    %v1852 = vld [vmem:[#allocation3 + $0xb0] sm:$0x3]
    %v1853 = vld [vmem:[#allocation3 + $0xb8] sm:$0x3]
    %v1854 = vld [vmem:[#allocation15] sm:$0xff]
    %v1855 = vld [vmem:[#allocation15 + $0x8] sm:$0xff]
    %v1856 = vld [vmem:[#allocation15 + $0x10] sm:$0xff]
    %v1857 = vld [vmem:[#allocation15 + $0x18] sm:$0xff]
    %v1858 = vld [vmem:[#allocation15 + $0x20] sm:$0xff]
    %v1859 = vld [vmem:[#allocation15 + $0x28] sm:$0xff]
    %v1860 = vld [vmem:[#allocation15 + $0x30] sm:$0xff]
    %v1861 = vld [vmem:[#allocation15 + $0x38] sm:$0xff]
    %v1862 = vld [vmem:[#allocation15 + $0x40] sm:$0xff]
    %v1863 = vld [vmem:[#allocation15 + $0x48] sm:$0xff]
    %v1864 = vld [vmem:[#allocation15 + $0x50] sm:$0xff]
    %v1865 = vld [vmem:[#allocation15 + $0x58] sm:$0xff]
    %v1866 = vld [vmem:[#allocation15 + $0x60] sm:$0xff]
    %v1867 = vld [vmem:[#allocation15 + $0x68] sm:$0xff]
    %v1868 = vld [vmem:[#allocation15 + $0x70] sm:$0xff]
    %v1869 = vld [vmem:[#allocation15 + $0x78] sm:$0xff]
    %v1870 = vld [vmem:[#allocation15 + $0x80] sm:$0xff]
    %v1871 = vld [vmem:[#allocation15 + $0x88] sm:$0xff]
    %v1872 = vld [vmem:[#allocation15 + $0x90] sm:$0xff]
    %v1873 = vld [vmem:[#allocation15 + $0x98] sm:$0xff]
    %v1874 = vld [vmem:[#allocation15 + $0xa0] sm:$0xff]
    %v1875 = vld [vmem:[#allocation15 + $0xa8] sm:$0xff]
    %v1876 = vld [vmem:[#allocation15 + $0xb0] sm:$0xff]
    %v1877 = vld [vmem:[#allocation15 + $0xb8] sm:$0xff]
    %v1878 = vld [vmem:[#allocation15 + $0xc0] sm:$0xff]
    %v1879 = vld [vmem:[#allocation15 + $0xc8] sm:$0xff]
    %v1880 = vld [vmem:[#allocation15 + $0xd0] sm:$0xff]
    %v1881 = vld [vmem:[#allocation15 + $0xd8] sm:$0xff]
    %v1882 = vld [vmem:[#allocation15 + $0xe0] sm:$0xff]
    %v1883 = vld [vmem:[#allocation15 + $0xe8] sm:$0xff]
    %v1884 = vld [vmem:[#allocation15 + $0xf0] sm:$0xff]
    %v1885 = vld [vmem:[#allocation15 + $0xf8] sm:$0xff]
    %v1886 = vld [vmem:[#allocation15 + $0x100] sm:$0xff]
    %v1887 = vld [vmem:[#allocation15 + $0x108] sm:$0xff]
    %v1888 = vld [vmem:[#allocation15 + $0x110] sm:$0xff]
    %v1889 = vld [vmem:[#allocation15 + $0x118] sm:$0xff]
    %v1890 = vld [vmem:[#allocation15 + $0x120] sm:$0xff]
    %v1891 = vld [vmem:[#allocation15 + $0x128] sm:$0xff]
    %v1892 = vld [vmem:[#allocation15 + $0x130] sm:$0xff]
    %v1893 = vld [vmem:[#allocation15 + $0x138] sm:$0xff]
    %v1894 = vld [vmem:[#allocation15 + $0x140] sm:$0xff]
    %v1895 = vld [vmem:[#allocation15 + $0x148] sm:$0xff]
    %v1896 = vld [vmem:[#allocation15 + $0x150] sm:$0xff]
    %v1897 = vld [vmem:[#allocation15 + $0x158] sm:$0xff]
    %v1898 = vld [vmem:[#allocation15 + $0x160] sm:$0xff]
    %v1899 = vld [vmem:[#allocation15 + $0x168] sm:$0xff]
    %v1900 = vld [vmem:[#allocation15 + $0x170] sm:$0xff]
    %v1901 = vld [vmem:[#allocation15 + $0x178] sm:$0xff]
    %v1902 = vld [vmem:[#allocation15 + $0x180] sm:$0xff]
    %v1903 = vld [vmem:[#allocation15 + $0x188] sm:$0xff]
    %v1904 = vld [vmem:[#allocation15 + $0x190] sm:$0xff]
    %v1905 = vld [vmem:[#allocation15 + $0x198] sm:$0xff]
    %v1906 = vld [vmem:[#allocation15 + $0x1a0] sm:$0xff]
    %v1907 = vld [vmem:[#allocation15 + $0x1a8] sm:$0xff]
    %v1908 = vld [vmem:[#allocation15 + $0x1b0] sm:$0xff]
    %v1909 = vld [vmem:[#allocation15 + $0x1b8] sm:$0xff]
    %v1910 = vld [vmem:[#allocation15 + $0x1c0] sm:$0xff]
    %v1911 = vld [vmem:[#allocation15 + $0x1c8] sm:$0xff]
    %v1912 = vld [vmem:[#allocation15 + $0x1d0] sm:$0xff]
    %v1913 = vld [vmem:[#allocation15 + $0x1d8] sm:$0xff]
    %v1914 = vld [vmem:[#allocation15 + $0x1e0] sm:$0xff]
    %v1915 = vld [vmem:[#allocation15 + $0x1e8] sm:$0xff]
    %v1916 = vld [vmem:[#allocation15 + $0x1f0] sm:$0xff]
    %v1917 = vld [vmem:[#allocation15 + $0x1f8] sm:$0xff]
    %v1918 = vld [vmem:[#allocation15 + $0x200] sm:$0xff]
    %v1919 = vld [vmem:[#allocation15 + $0x208] sm:$0xff]
    %v1920 = vld [vmem:[#allocation15 + $0x210] sm:$0xff]
    %v1921 = vld [vmem:[#allocation15 + $0x218] sm:$0xff]
    %v1922 = vld [vmem:[#allocation15 + $0x220] sm:$0xff]
    %v1923 = vld [vmem:[#allocation15 + $0x228] sm:$0xff]
    %v1924 = vld [vmem:[#allocation15 + $0x230] sm:$0xff]
    %v1925 = vld [vmem:[#allocation15 + $0x238] sm:$0xff]
    %v1926 = vld [vmem:[#allocation15 + $0x240] sm:$0xff]
    %v1927 = vld [vmem:[#allocation15 + $0x248] sm:$0xff]
    %v1928 = vld [vmem:[#allocation15 + $0x250] sm:$0xff]
    %v1929 = vld [vmem:[#allocation15 + $0x258] sm:$0xff]
    %v1930 = vld [vmem:[#allocation15 + $0x260] sm:$0xff]
    %v1931 = vld [vmem:[#allocation15 + $0x268] sm:$0xff]
    %v1932 = vld [vmem:[#allocation15 + $0x270] sm:$0xff]
    %v1933 = vld [vmem:[#allocation15 + $0x278] sm:$0xff]
    %v1934 = vld [vmem:[#allocation15 + $0x280] sm:$0xff]
    %v1935 = vld [vmem:[#allocation15 + $0x288] sm:$0xff]
    %v1936 = vld [vmem:[#allocation15 + $0x290] sm:$0xff]
    %v1937 = vld [vmem:[#allocation15 + $0x298] sm:$0xff]
    %v1938 = vld [vmem:[#allocation15 + $0x2a0] sm:$0xff]
    %v1939 = vld [vmem:[#allocation15 + $0x2a8] sm:$0xff]
    %v1940 = vld [vmem:[#allocation15 + $0x2b0] sm:$0xff]
    %v1941 = vld [vmem:[#allocation15 + $0x2b8] sm:$0xff]
    %v1942 = vld [vmem:[#allocation15 + $0x2c0] sm:$0xff]
    %v1943 = vld [vmem:[#allocation15 + $0x2c8] sm:$0xff]
    %v1944 = vld [vmem:[#allocation15 + $0x2d0] sm:$0xff]
    %v1945 = vld [vmem:[#allocation15 + $0x2d8] sm:$0xff]
    %v1946 = vld [vmem:[#allocation15 + $0x2e0] sm:$0xff]
    %v1947 = vld [vmem:[#allocation15 + $0x2e8] sm:$0xff]
    %v1948 = vld [vmem:[#allocation15 + $0x2f0] sm:$0xff]
    %v1949 = vld [vmem:[#allocation15 + $0x2f8] sm:$0xff]
    %v1950 = vld [vmem:[#allocation15 + $0x300] sm:$0xff]
    %v1951 = vld [vmem:[#allocation15 + $0x308] sm:$0xff]
    %v1952 = vld [vmem:[#allocation15 + $0x310] sm:$0xff]
    %v1953 = vld [vmem:[#allocation15 + $0x318] sm:$0xff]
    %v1954 = vld [vmem:[#allocation15 + $0x320] sm:$0xff]
    %v1955 = vld [vmem:[#allocation15 + $0x328] sm:$0xff]
    %v1956 = vld [vmem:[#allocation15 + $0x330] sm:$0xff]
    %v1957 = vld [vmem:[#allocation15 + $0x338] sm:$0xff]
    %v1958 = vld [vmem:[#allocation15 + $0x340] sm:$0xff]
    %v1959 = vld [vmem:[#allocation15 + $0x348] sm:$0xff]
    %v1960 = vld [vmem:[#allocation15 + $0x350] sm:$0xff]
    %v1961 = vld [vmem:[#allocation15 + $0x358] sm:$0xff]
    %v1962 = vld [vmem:[#allocation15 + $0x360] sm:$0xff]
    %v1963 = vld [vmem:[#allocation15 + $0x368] sm:$0xff]
    %v1964 = vld [vmem:[#allocation15 + $0x370] sm:$0xff]
    %v1965 = vld [vmem:[#allocation15 + $0x378] sm:$0xff]
    %v1966 = vld [vmem:[#allocation15 + $0x380] sm:$0xff]
    %v1967 = vld [vmem:[#allocation15 + $0x388] sm:$0xff]
    %v1968 = vld [vmem:[#allocation15 + $0x390] sm:$0xff]
    %v1969 = vld [vmem:[#allocation15 + $0x398] sm:$0xff]
    %v1970 = vld [vmem:[#allocation15 + $0x3a0] sm:$0xff]
    %v1971 = vld [vmem:[#allocation15 + $0x3a8] sm:$0xff]
    %v1972 = vld [vmem:[#allocation15 + $0x3b0] sm:$0xff]
    %v1973 = vld [vmem:[#allocation15 + $0x3b8] sm:$0xff]
    %v1974 = vld [vmem:[#allocation15 + $0x3c0] sm:$0xff]
    %v1975 = vld [vmem:[#allocation15 + $0x3c8] sm:$0xff]
    %v1976 = vld [vmem:[#allocation15 + $0x3d0] sm:$0xff]
    %v1977 = vld [vmem:[#allocation15 + $0x3d8] sm:$0xff]
    %v1978 = vld [vmem:[#allocation15 + $0x3e0] sm:$0xff]
    %v1979 = vld [vmem:[#allocation15 + $0x3e8] sm:$0xff]
    %v1980 = vld [vmem:[#allocation15 + $0x3f0] sm:$0xff]
    %v1981 = vld [vmem:[#allocation15 + $0x3f8] sm:$0xff]
    %v1982 = vld [vmem:[#allocation15 + $0x400] sm:$0xff]
    %v1983 = vld [vmem:[#allocation15 + $0x408] sm:$0xff]
    %v1984 = vld [vmem:[#allocation15 + $0x410] sm:$0xff]
    %v1985 = vld [vmem:[#allocation15 + $0x418] sm:$0xff]
    %v1986 = vld [vmem:[#allocation15 + $0x420] sm:$0xff]
    %v1987 = vld [vmem:[#allocation15 + $0x428] sm:$0xff]
    %v1988 = vld [vmem:[#allocation15 + $0x430] sm:$0xff]
    %v1989 = vld [vmem:[#allocation15 + $0x438] sm:$0xff]
    %v1990 = vld [vmem:[#allocation15 + $0x440] sm:$0xff]
    %v1991 = vld [vmem:[#allocation15 + $0x448] sm:$0xff]
    %v1992 = vld [vmem:[#allocation15 + $0x450] sm:$0xff]
    %v1993 = vld [vmem:[#allocation15 + $0x458] sm:$0xff]
    %v1994 = vld [vmem:[#allocation15 + $0x460] sm:$0xff]
    %v1995 = vld [vmem:[#allocation15 + $0x468] sm:$0xff]
    %v1996 = vld [vmem:[#allocation15 + $0x470] sm:$0xff]
    %v1997 = vld [vmem:[#allocation15 + $0x478] sm:$0xff]
    %v1998 = vld [vmem:[#allocation15 + $0x480] sm:$0xff]
    %v1999 = vld [vmem:[#allocation15 + $0x488] sm:$0xff]
    %v2000 = vld [vmem:[#allocation15 + $0x490] sm:$0xff]
    %v2001 = vld [vmem:[#allocation15 + $0x498] sm:$0xff]
    %v2002 = vld [vmem:[#allocation15 + $0x4a0] sm:$0xff]
    %v2003 = vld [vmem:[#allocation15 + $0x4a8] sm:$0xff]
    %v2004 = vld [vmem:[#allocation15 + $0x4b0] sm:$0xff]
    %v2005 = vld [vmem:[#allocation15 + $0x4b8] sm:$0xff]
    %v2006 = vld [vmem:[#allocation15 + $0x4c0] sm:$0xff]
    %v2007 = vld [vmem:[#allocation15 + $0x4c8] sm:$0xff]
    %v2008 = vld [vmem:[#allocation15 + $0x4d0] sm:$0xff]
    %v2009 = vld [vmem:[#allocation15 + $0x4d8] sm:$0xff]
    %v2010 = vld [vmem:[#allocation15 + $0x4e0] sm:$0xff]
    %v2011 = vld [vmem:[#allocation15 + $0x4e8] sm:$0xff]
    %v2012 = vld [vmem:[#allocation15 + $0x4f0] sm:$0xff]
    %v2013 = vld [vmem:[#allocation15 + $0x4f8] sm:$0xff]
    %v2014 = vld [vmem:[#allocation15 + $0x500] sm:$0xff]
    %v2015 = vld [vmem:[#allocation15 + $0x508] sm:$0xff]
    %v2016 = vld [vmem:[#allocation15 + $0x510] sm:$0xff]
    %v2017 = vld [vmem:[#allocation15 + $0x518] sm:$0xff]
    %v2018 = vld [vmem:[#allocation15 + $0x520] sm:$0xff]
    %v2019 = vld [vmem:[#allocation15 + $0x528] sm:$0xff]
    %v2020 = vld [vmem:[#allocation15 + $0x530] sm:$0xff]
    %v2021 = vld [vmem:[#allocation15 + $0x538] sm:$0xff]
    %v2022 = vld [vmem:[#allocation15 + $0x540] sm:$0xff]
    %v2023 = vld [vmem:[#allocation15 + $0x548] sm:$0xff]
    %v2024 = vld [vmem:[#allocation15 + $0x550] sm:$0xff]
    %v2025 = vld [vmem:[#allocation15 + $0x558] sm:$0xff]
    %v2026 = vld [vmem:[#allocation15 + $0x560] sm:$0xff]
    %v2027 = vld [vmem:[#allocation15 + $0x568] sm:$0xff]
    %v2028 = vld [vmem:[#allocation15 + $0x570] sm:$0xff]
    %v2029 = vld [vmem:[#allocation15 + $0x578] sm:$0xff]
    %v2030 = vld [vmem:[#allocation15 + $0x580] sm:$0xff]
    %v2031 = vld [vmem:[#allocation15 + $0x588] sm:$0xff]
    %v2032 = vld [vmem:[#allocation15 + $0x590] sm:$0xff]
    %v2033 = vld [vmem:[#allocation15 + $0x598] sm:$0xff]
    %v2034 = vld [vmem:[#allocation15 + $0x5a0] sm:$0xff]
    %v2035 = vld [vmem:[#allocation15 + $0x5a8] sm:$0xff]
    %v2036 = vld [vmem:[#allocation15 + $0x5b0] sm:$0xff]
    %v2037 = vld [vmem:[#allocation15 + $0x5b8] sm:$0xff]
    %v2038 = vld [vmem:[#allocation15 + $0x5c0] sm:$0xff]
    %v2039 = vld [vmem:[#allocation15 + $0x5c8] sm:$0xff]
    %v2040 = vld [vmem:[#allocation15 + $0x5d0] sm:$0xff]
    %v2041 = vld [vmem:[#allocation15 + $0x5d8] sm:$0xff]
    %v2042 = vld [vmem:[#allocation15 + $0x5e0] sm:$0xff]
    %v2043 = vld [vmem:[#allocation15 + $0x5e8] sm:$0xff]
    %v2044 = vld [vmem:[#allocation15 + $0x5f0] sm:$0xff]
    %v2045 = vld [vmem:[#allocation15 + $0x5f8] sm:$0xff]
    %v2046 = vld [vmem:[#allocation15 + $0x600] sm:$0xff]
    %v2047 = vld [vmem:[#allocation15 + $0x608] sm:$0xff]
    %v2048 = vld [vmem:[#allocation15 + $0x610] sm:$0xff]
    %v2049 = vld [vmem:[#allocation15 + $0x618] sm:$0xff]
    %v2050 = vld [vmem:[#allocation15 + $0x620] sm:$0xff]
    %v2051 = vld [vmem:[#allocation15 + $0x628] sm:$0xff]
    %v2052 = vld [vmem:[#allocation15 + $0x630] sm:$0xff]
    %v2053 = vld [vmem:[#allocation15 + $0x638] sm:$0xff]
    %v2054 = vld [vmem:[#allocation15 + $0x640] sm:$0xff]
    %v2055 = vld [vmem:[#allocation15 + $0x648] sm:$0xff]
    %v2056 = vld [vmem:[#allocation15 + $0x650] sm:$0xff]
    %v2057 = vld [vmem:[#allocation15 + $0x658] sm:$0xff]
    %v2058 = vld [vmem:[#allocation15 + $0x660] sm:$0xff]
    %v2059 = vld [vmem:[#allocation15 + $0x668] sm:$0xff]
    %v2060 = vld [vmem:[#allocation15 + $0x670] sm:$0xff]
    %v2061 = vld [vmem:[#allocation15 + $0x678] sm:$0xff]
    %v2062 = vld [vmem:[#allocation15 + $0x680] sm:$0xff]
    %v2063 = vld [vmem:[#allocation15 + $0x688] sm:$0xff]
    %v2064 = vld [vmem:[#allocation15 + $0x690] sm:$0xff]
    %v2065 = vld [vmem:[#allocation15 + $0x698] sm:$0xff]
    %v2066 = vld [vmem:[#allocation15 + $0x6a0] sm:$0xff]
    %v2067 = vld [vmem:[#allocation15 + $0x6a8] sm:$0xff]
    %v2068 = vld [vmem:[#allocation15 + $0x6b0] sm:$0xff]
    %v2069 = vld [vmem:[#allocation15 + $0x6b8] sm:$0xff]
    %v2070 = vld [vmem:[#allocation15 + $0x6c0] sm:$0xff]
    %v2071 = vld [vmem:[#allocation15 + $0x6c8] sm:$0xff]
    %v2072 = vld [vmem:[#allocation15 + $0x6d0] sm:$0xff]
    %v2073 = vld [vmem:[#allocation15 + $0x6d8] sm:$0xff]
    %v2074 = vld [vmem:[#allocation15 + $0x6e0] sm:$0xff]
    %v2075 = vld [vmem:[#allocation15 + $0x6e8] sm:$0xff]
    %v2076 = vld [vmem:[#allocation15 + $0x6f0] sm:$0xff]
    %v2077 = vld [vmem:[#allocation15 + $0x6f8] sm:$0xff]
    %v2078 = vld [vmem:[#allocation15 + $0x700] sm:$0xff]
    %v2079 = vld [vmem:[#allocation15 + $0x708] sm:$0xff]
    %v2080 = vld [vmem:[#allocation15 + $0x710] sm:$0xff]
    %v2081 = vld [vmem:[#allocation15 + $0x718] sm:$0xff]
    %v2082 = vld [vmem:[#allocation15 + $0x720] sm:$0xff]
    %v2083 = vld [vmem:[#allocation15 + $0x728] sm:$0xff]
    %v2084 = vld [vmem:[#allocation15 + $0x730] sm:$0xff]
    %v2085 = vld [vmem:[#allocation15 + $0x738] sm:$0xff]
    %v2086 = vld [vmem:[#allocation15 + $0x740] sm:$0xff]
    %v2087 = vld [vmem:[#allocation15 + $0x748] sm:$0xff]
    %v2088 = vld [vmem:[#allocation15 + $0x750] sm:$0xff]
    %v2089 = vld [vmem:[#allocation15 + $0x758] sm:$0xff]
    %v2090 = vld [vmem:[#allocation15 + $0x760] sm:$0xff]
    %v2091 = vld [vmem:[#allocation15 + $0x768] sm:$0xff]
    %v2092 = vld [vmem:[#allocation15 + $0x770] sm:$0xff]
    %v2093 = vld [vmem:[#allocation15 + $0x778] sm:$0xff]
    %v2094 = vld [vmem:[#allocation15 + $0x780] sm:$0xff]
    %v2095 = vld [vmem:[#allocation15 + $0x788] sm:$0xff]
    %v2096 = vld [vmem:[#allocation15 + $0x790] sm:$0xff]
    %v2097 = vld [vmem:[#allocation15 + $0x798] sm:$0xff]
    %v2098 = vld [vmem:[#allocation15 + $0x7a0] sm:$0xff]
    %v2099 = vld [vmem:[#allocation15 + $0x7a8] sm:$0xff]
    %v2100 = vld [vmem:[#allocation15 + $0x7b0] sm:$0xff]
    %v2101 = vld [vmem:[#allocation15 + $0x7b8] sm:$0xff]
    %v2102 = vld [vmem:[#allocation15 + $0x7c0] sm:$0xff]
    %v2103 = vld [vmem:[#allocation15 + $0x7c8] sm:$0xff]
    %v2104 = vld [vmem:[#allocation15 + $0x7d0] sm:$0xff]
    %v2105 = vld [vmem:[#allocation15 + $0x7d8] sm:$0xff]
    %v2106 = vld [vmem:[#allocation15 + $0x7e0] sm:$0xff]
    %v2107 = vld [vmem:[#allocation15 + $0x7e8] sm:$0xff]
    %v2108 = vld [vmem:[#allocation15 + $0x7f0] sm:$0xff]
    %v2109 = vld [vmem:[#allocation15 + $0x7f8] sm:$0xff]
    %v2134 = vrot.slane %v1830, 1
    %v2135 = vrot.slane %v1834, 1
    %v2136 = vsel %vm362, %v2134, %v2135
    %v2137 = vrot.slane %v1831, 1
    %v2138 = vrot.slane %v1835, 1
    %v2139 = vsel %vm362, %v2137, %v2138
    %v2140 = vrot.slane %v1832, 1
    %v2141 = vrot.slane %v1836, 1
    %v2142 = vsel %vm362, %v2140, %v2141
    %v2143 = vrot.slane %v1833, 1
    %v2144 = vrot.slane %v1837, 1
    %v2145 = vsel %vm362, %v2143, %v2144
    %v2146 = vrot.slane %v1838, 1
    %v2147 = vsel %vm362, %v2135, %v2146
    %v2148 = vrot.slane %v1839, 1
    %v2149 = vsel %vm362, %v2138, %v2148
    %v2150 = vrot.slane %v1840, 1
    %v2151 = vsel %vm362, %v2141, %v2150
    %v2152 = vrot.slane %v1841, 1
    %v2153 = vsel %vm362, %v2144, %v2152
    %v2154 = vrot.slane %v1842, 1
    %v2155 = vrot.slane %v1846, 1
    %v2156 = vsel %vm362, %v2154, %v2155
    %v2157 = vrot.slane %v1843, 1
    %v2158 = vrot.slane %v1847, 1
    %v2159 = vsel %vm362, %v2157, %v2158
    %v2160 = vrot.slane %v1844, 1
    %v2161 = vrot.slane %v1848, 1
    %v2162 = vsel %vm362, %v2160, %v2161
    %v2163 = vrot.slane %v1845, 1
    %v2164 = vrot.slane %v1849, 1
    %v2165 = vsel %vm362, %v2163, %v2164
    %v2166 = vrot.slane %v1850, 1
    %v2167 = vsel %vm362, %v2155, %v2166
    %v2168 = vrot.slane %v1851, 1
    %v2169 = vsel %vm362, %v2158, %v2168
    %v2170 = vrot.slane %v1852, 1
    %v2171 = vsel %vm362, %v2161, %v2170
    %v2172 = vrot.slane %v1853, 1
    %v2173 = vsel %vm362, %v2164, %v2172
    %s2190 = scalar_lea.vmem [#allocation15], 2048
    %v2191 = vld [vmem:[%s2190] sm:$0xff]
    %v2192 = vld [vmem:[%s2190 + $0x8] sm:$0xff]
    %v2193 = vld [vmem:[%s2190 + $0x10] sm:$0xff]
    %v2194 = vld [vmem:[%s2190 + $0x18] sm:$0xff]
    %v2195 = vld [vmem:[%s2190 + $0x20] sm:$0xff]
    %v2196 = vld [vmem:[%s2190 + $0x28] sm:$0xff]
    %v2197 = vld [vmem:[%s2190 + $0x30] sm:$0xff]
    %v2198 = vld [vmem:[%s2190 + $0x38] sm:$0xff]
    %v2199 = vld [vmem:[%s2190 + $0x40] sm:$0xff]
    %v2200 = vld [vmem:[%s2190 + $0x48] sm:$0xff]
    %v2201 = vld [vmem:[%s2190 + $0x50] sm:$0xff]
    %v2202 = vld [vmem:[%s2190 + $0x58] sm:$0xff]
    %v2203 = vld [vmem:[%s2190 + $0x60] sm:$0xff]
    %v2204 = vld [vmem:[%s2190 + $0x68] sm:$0xff]
    %v2205 = vld [vmem:[%s2190 + $0x70] sm:$0xff]
    %v2206 = vld [vmem:[%s2190 + $0x78] sm:$0xff]
    %v2207 = vld [vmem:[%s2190 + $0x80] sm:$0xff]
    %v2208 = vld [vmem:[%s2190 + $0x88] sm:$0xff]
    %v2209 = vld [vmem:[%s2190 + $0x90] sm:$0xff]
    %v2210 = vld [vmem:[%s2190 + $0x98] sm:$0xff]
    %v2211 = vld [vmem:[%s2190 + $0xa0] sm:$0xff]
    %v2212 = vld [vmem:[%s2190 + $0xa8] sm:$0xff]
    %v2213 = vld [vmem:[%s2190 + $0xb0] sm:$0xff]
    %v2214 = vld [vmem:[%s2190 + $0xb8] sm:$0xff]
    %v2215 = vld [vmem:[%s2190 + $0xc0] sm:$0xff]
    %v2216 = vld [vmem:[%s2190 + $0xc8] sm:$0xff]
    %v2217 = vld [vmem:[%s2190 + $0xd0] sm:$0xff]
    %v2218 = vld [vmem:[%s2190 + $0xd8] sm:$0xff]
    %v2219 = vld [vmem:[%s2190 + $0xe0] sm:$0xff]
    %v2220 = vld [vmem:[%s2190 + $0xe8] sm:$0xff]
    %v2221 = vld [vmem:[%s2190 + $0xf0] sm:$0xff]
    %v2222 = vld [vmem:[%s2190 + $0xf8] sm:$0xff]
    %v2223 = vld [vmem:[%s2190 + $0x100] sm:$0xff]
    %v2224 = vld [vmem:[%s2190 + $0x108] sm:$0xff]
    %v2225 = vld [vmem:[%s2190 + $0x110] sm:$0xff]
    %v2226 = vld [vmem:[%s2190 + $0x118] sm:$0xff]
    %v2227 = vld [vmem:[%s2190 + $0x120] sm:$0xff]
    %v2228 = vld [vmem:[%s2190 + $0x128] sm:$0xff]
    %v2229 = vld [vmem:[%s2190 + $0x130] sm:$0xff]
    %v2230 = vld [vmem:[%s2190 + $0x138] sm:$0xff]
    %v2231 = vld [vmem:[%s2190 + $0x140] sm:$0xff]
    %v2232 = vld [vmem:[%s2190 + $0x148] sm:$0xff]
    %v2233 = vld [vmem:[%s2190 + $0x150] sm:$0xff]
    %v2234 = vld [vmem:[%s2190 + $0x158] sm:$0xff]
    %v2235 = vld [vmem:[%s2190 + $0x160] sm:$0xff]
    %v2236 = vld [vmem:[%s2190 + $0x168] sm:$0xff]
    %v2237 = vld [vmem:[%s2190 + $0x170] sm:$0xff]
    %v2238 = vld [vmem:[%s2190 + $0x178] sm:$0xff]
    %v2239 = vld [vmem:[%s2190 + $0x180] sm:$0xff]
    %v2240 = vld [vmem:[%s2190 + $0x188] sm:$0xff]
    %v2241 = vld [vmem:[%s2190 + $0x190] sm:$0xff]
    %v2242 = vld [vmem:[%s2190 + $0x198] sm:$0xff]
    %v2243 = vld [vmem:[%s2190 + $0x1a0] sm:$0xff]
    %v2244 = vld [vmem:[%s2190 + $0x1a8] sm:$0xff]
    %v2245 = vld [vmem:[%s2190 + $0x1b0] sm:$0xff]
    %v2246 = vld [vmem:[%s2190 + $0x1b8] sm:$0xff]
    %v2247 = vld [vmem:[%s2190 + $0x1c0] sm:$0xff]
    %v2248 = vld [vmem:[%s2190 + $0x1c8] sm:$0xff]
    %v2249 = vld [vmem:[%s2190 + $0x1d0] sm:$0xff]
    %v2250 = vld [vmem:[%s2190 + $0x1d8] sm:$0xff]
    %v2251 = vld [vmem:[%s2190 + $0x1e0] sm:$0xff]
    %v2252 = vld [vmem:[%s2190 + $0x1e8] sm:$0xff]
    %v2253 = vld [vmem:[%s2190 + $0x1f0] sm:$0xff]
    %v2254 = vld [vmem:[%s2190 + $0x1f8] sm:$0xff]
    %v2255 = vld [vmem:[%s2190 + $0x200] sm:$0xff]
    %v2256 = vld [vmem:[%s2190 + $0x208] sm:$0xff]
    %v2257 = vld [vmem:[%s2190 + $0x210] sm:$0xff]
    %v2258 = vld [vmem:[%s2190 + $0x218] sm:$0xff]
    %v2259 = vld [vmem:[%s2190 + $0x220] sm:$0xff]
    %v2260 = vld [vmem:[%s2190 + $0x228] sm:$0xff]
    %v2261 = vld [vmem:[%s2190 + $0x230] sm:$0xff]
    %v2262 = vld [vmem:[%s2190 + $0x238] sm:$0xff]
    %v2263 = vld [vmem:[%s2190 + $0x240] sm:$0xff]
    %v2264 = vld [vmem:[%s2190 + $0x248] sm:$0xff]
    %v2265 = vld [vmem:[%s2190 + $0x250] sm:$0xff]
    %v2266 = vld [vmem:[%s2190 + $0x258] sm:$0xff]
    %v2267 = vld [vmem:[%s2190 + $0x260] sm:$0xff]
    %v2268 = vld [vmem:[%s2190 + $0x268] sm:$0xff]
    %v2269 = vld [vmem:[%s2190 + $0x270] sm:$0xff]
    %v2270 = vld [vmem:[%s2190 + $0x278] sm:$0xff]
    %v2271 = vld [vmem:[%s2190 + $0x280] sm:$0xff]
    %v2272 = vld [vmem:[%s2190 + $0x288] sm:$0xff]
    %v2273 = vld [vmem:[%s2190 + $0x290] sm:$0xff]
    %v2274 = vld [vmem:[%s2190 + $0x298] sm:$0xff]
    %v2275 = vld [vmem:[%s2190 + $0x2a0] sm:$0xff]
    %v2276 = vld [vmem:[%s2190 + $0x2a8] sm:$0xff]
    %v2277 = vld [vmem:[%s2190 + $0x2b0] sm:$0xff]
    %v2278 = vld [vmem:[%s2190 + $0x2b8] sm:$0xff]
    %v2279 = vld [vmem:[%s2190 + $0x2c0] sm:$0xff]
    %v2280 = vld [vmem:[%s2190 + $0x2c8] sm:$0xff]
    %v2281 = vld [vmem:[%s2190 + $0x2d0] sm:$0xff]
    %v2282 = vld [vmem:[%s2190 + $0x2d8] sm:$0xff]
    %v2283 = vld [vmem:[%s2190 + $0x2e0] sm:$0xff]
    %v2284 = vld [vmem:[%s2190 + $0x2e8] sm:$0xff]
    %v2285 = vld [vmem:[%s2190 + $0x2f0] sm:$0xff]
    %v2286 = vld [vmem:[%s2190 + $0x2f8] sm:$0xff]
    %v2287 = vld [vmem:[%s2190 + $0x300] sm:$0xff]
    %v2288 = vld [vmem:[%s2190 + $0x308] sm:$0xff]
    %v2289 = vld [vmem:[%s2190 + $0x310] sm:$0xff]
    %v2290 = vld [vmem:[%s2190 + $0x318] sm:$0xff]
    %v2291 = vld [vmem:[%s2190 + $0x320] sm:$0xff]
    %v2292 = vld [vmem:[%s2190 + $0x328] sm:$0xff]
    %v2293 = vld [vmem:[%s2190 + $0x330] sm:$0xff]
    %v2294 = vld [vmem:[%s2190 + $0x338] sm:$0xff]
    %v2295 = vld [vmem:[%s2190 + $0x340] sm:$0xff]
    %v2296 = vld [vmem:[%s2190 + $0x348] sm:$0xff]
    %v2297 = vld [vmem:[%s2190 + $0x350] sm:$0xff]
    %v2298 = vld [vmem:[%s2190 + $0x358] sm:$0xff]
    %v2299 = vld [vmem:[%s2190 + $0x360] sm:$0xff]
    %v2300 = vld [vmem:[%s2190 + $0x368] sm:$0xff]
    %v2301 = vld [vmem:[%s2190 + $0x370] sm:$0xff]
    %v2302 = vld [vmem:[%s2190 + $0x378] sm:$0xff]
    %v2303 = vld [vmem:[%s2190 + $0x380] sm:$0xff]
    %v2304 = vld [vmem:[%s2190 + $0x388] sm:$0xff]
    %v2305 = vld [vmem:[%s2190 + $0x390] sm:$0xff]
    %v2306 = vld [vmem:[%s2190 + $0x398] sm:$0xff]
    %v2307 = vld [vmem:[%s2190 + $0x3a0] sm:$0xff]
    %v2308 = vld [vmem:[%s2190 + $0x3a8] sm:$0xff]
    %v2309 = vld [vmem:[%s2190 + $0x3b0] sm:$0xff]
    %v2310 = vld [vmem:[%s2190 + $0x3b8] sm:$0xff]
    %v2311 = vld [vmem:[%s2190 + $0x3c0] sm:$0xff]
    %v2312 = vld [vmem:[%s2190 + $0x3c8] sm:$0xff]
    %v2313 = vld [vmem:[%s2190 + $0x3d0] sm:$0xff]
    %v2314 = vld [vmem:[%s2190 + $0x3d8] sm:$0xff]
    %v2315 = vld [vmem:[%s2190 + $0x3e0] sm:$0xff]
    %v2316 = vld [vmem:[%s2190 + $0x3e8] sm:$0xff]
    %v2317 = vld [vmem:[%s2190 + $0x3f0] sm:$0xff]
    %v2318 = vld [vmem:[%s2190 + $0x3f8] sm:$0xff]
    %v2319 = vld [vmem:[%s2190 + $0x400] sm:$0xff]
    %v2320 = vld [vmem:[%s2190 + $0x408] sm:$0xff]
    %v2321 = vld [vmem:[%s2190 + $0x410] sm:$0xff]
    %v2322 = vld [vmem:[%s2190 + $0x418] sm:$0xff]
    %v2323 = vld [vmem:[%s2190 + $0x420] sm:$0xff]
    %v2324 = vld [vmem:[%s2190 + $0x428] sm:$0xff]
    %v2325 = vld [vmem:[%s2190 + $0x430] sm:$0xff]
    %v2326 = vld [vmem:[%s2190 + $0x438] sm:$0xff]
    %v2327 = vld [vmem:[%s2190 + $0x440] sm:$0xff]
    %v2328 = vld [vmem:[%s2190 + $0x448] sm:$0xff]
    %v2329 = vld [vmem:[%s2190 + $0x450] sm:$0xff]
    %v2330 = vld [vmem:[%s2190 + $0x458] sm:$0xff]
    %v2331 = vld [vmem:[%s2190 + $0x460] sm:$0xff]
    %v2332 = vld [vmem:[%s2190 + $0x468] sm:$0xff]
    %v2333 = vld [vmem:[%s2190 + $0x470] sm:$0xff]
    %v2334 = vld [vmem:[%s2190 + $0x478] sm:$0xff]
    %v2335 = vld [vmem:[%s2190 + $0x480] sm:$0xff]
    %v2336 = vld [vmem:[%s2190 + $0x488] sm:$0xff]
    %v2337 = vld [vmem:[%s2190 + $0x490] sm:$0xff]
    %v2338 = vld [vmem:[%s2190 + $0x498] sm:$0xff]
    %v2339 = vld [vmem:[%s2190 + $0x4a0] sm:$0xff]
    %v2340 = vld [vmem:[%s2190 + $0x4a8] sm:$0xff]
    %v2341 = vld [vmem:[%s2190 + $0x4b0] sm:$0xff]
    %v2342 = vld [vmem:[%s2190 + $0x4b8] sm:$0xff]
    %v2343 = vld [vmem:[%s2190 + $0x4c0] sm:$0xff]
    %v2344 = vld [vmem:[%s2190 + $0x4c8] sm:$0xff]
    %v2345 = vld [vmem:[%s2190 + $0x4d0] sm:$0xff]
    %v2346 = vld [vmem:[%s2190 + $0x4d8] sm:$0xff]
    %v2347 = vld [vmem:[%s2190 + $0x4e0] sm:$0xff]
    %v2348 = vld [vmem:[%s2190 + $0x4e8] sm:$0xff]
    %v2349 = vld [vmem:[%s2190 + $0x4f0] sm:$0xff]
    %v2350 = vld [vmem:[%s2190 + $0x4f8] sm:$0xff]
    %v2351 = vld [vmem:[%s2190 + $0x500] sm:$0xff]
    %v2352 = vld [vmem:[%s2190 + $0x508] sm:$0xff]
    %v2353 = vld [vmem:[%s2190 + $0x510] sm:$0xff]
    %v2354 = vld [vmem:[%s2190 + $0x518] sm:$0xff]
    %v2355 = vld [vmem:[%s2190 + $0x520] sm:$0xff]
    %v2356 = vld [vmem:[%s2190 + $0x528] sm:$0xff]
    %v2357 = vld [vmem:[%s2190 + $0x530] sm:$0xff]
    %v2358 = vld [vmem:[%s2190 + $0x538] sm:$0xff]
    %v2359 = vld [vmem:[%s2190 + $0x540] sm:$0xff]
    %v2360 = vld [vmem:[%s2190 + $0x548] sm:$0xff]
    %v2361 = vld [vmem:[%s2190 + $0x550] sm:$0xff]
    %v2362 = vld [vmem:[%s2190 + $0x558] sm:$0xff]
    %v2363 = vld [vmem:[%s2190 + $0x560] sm:$0xff]
    %v2364 = vld [vmem:[%s2190 + $0x568] sm:$0xff]
    %v2365 = vld [vmem:[%s2190 + $0x570] sm:$0xff]
    %v2366 = vld [vmem:[%s2190 + $0x578] sm:$0xff]
    %v2367 = vld [vmem:[%s2190 + $0x580] sm:$0xff]
    %v2368 = vld [vmem:[%s2190 + $0x588] sm:$0xff]
    %v2369 = vld [vmem:[%s2190 + $0x590] sm:$0xff]
    %v2370 = vld [vmem:[%s2190 + $0x598] sm:$0xff]
    %v2371 = vld [vmem:[%s2190 + $0x5a0] sm:$0xff]
    %v2372 = vld [vmem:[%s2190 + $0x5a8] sm:$0xff]
    %v2373 = vld [vmem:[%s2190 + $0x5b0] sm:$0xff]
    %v2374 = vld [vmem:[%s2190 + $0x5b8] sm:$0xff]
    %v2375 = vld [vmem:[%s2190 + $0x5c0] sm:$0xff]
    %v2376 = vld [vmem:[%s2190 + $0x5c8] sm:$0xff]
    %v2377 = vld [vmem:[%s2190 + $0x5d0] sm:$0xff]
    %v2378 = vld [vmem:[%s2190 + $0x5d8] sm:$0xff]
    %v2379 = vld [vmem:[%s2190 + $0x5e0] sm:$0xff]
    %v2380 = vld [vmem:[%s2190 + $0x5e8] sm:$0xff]
    %v2381 = vld [vmem:[%s2190 + $0x5f0] sm:$0xff]
    %v2382 = vld [vmem:[%s2190 + $0x5f8] sm:$0xff]
    %v2383 = vld [vmem:[%s2190 + $0x600] sm:$0xff]
    %v2384 = vld [vmem:[%s2190 + $0x608] sm:$0xff]
    %v2385 = vld [vmem:[%s2190 + $0x610] sm:$0xff]
    %v2386 = vld [vmem:[%s2190 + $0x618] sm:$0xff]
    %v2387 = vld [vmem:[%s2190 + $0x620] sm:$0xff]
    %v2388 = vld [vmem:[%s2190 + $0x628] sm:$0xff]
    %v2389 = vld [vmem:[%s2190 + $0x630] sm:$0xff]
    %v2390 = vld [vmem:[%s2190 + $0x638] sm:$0xff]
    %v2391 = vld [vmem:[%s2190 + $0x640] sm:$0xff]
    %v2392 = vld [vmem:[%s2190 + $0x648] sm:$0xff]
    %v2393 = vld [vmem:[%s2190 + $0x650] sm:$0xff]
    %v2394 = vld [vmem:[%s2190 + $0x658] sm:$0xff]
    %v2395 = vld [vmem:[%s2190 + $0x660] sm:$0xff]
    %v2396 = vld [vmem:[%s2190 + $0x668] sm:$0xff]
    %v2397 = vld [vmem:[%s2190 + $0x670] sm:$0xff]
    %v2398 = vld [vmem:[%s2190 + $0x678] sm:$0xff]
    %v2399 = vld [vmem:[%s2190 + $0x680] sm:$0xff]
    %v2400 = vld [vmem:[%s2190 + $0x688] sm:$0xff]
    %v2401 = vld [vmem:[%s2190 + $0x690] sm:$0xff]
    %v2402 = vld [vmem:[%s2190 + $0x698] sm:$0xff]
    %v2403 = vld [vmem:[%s2190 + $0x6a0] sm:$0xff]
    %v2404 = vld [vmem:[%s2190 + $0x6a8] sm:$0xff]
    %v2405 = vld [vmem:[%s2190 + $0x6b0] sm:$0xff]
    %v2406 = vld [vmem:[%s2190 + $0x6b8] sm:$0xff]
    %v2407 = vld [vmem:[%s2190 + $0x6c0] sm:$0xff]
    %v2408 = vld [vmem:[%s2190 + $0x6c8] sm:$0xff]
    %v2409 = vld [vmem:[%s2190 + $0x6d0] sm:$0xff]
    %v2410 = vld [vmem:[%s2190 + $0x6d8] sm:$0xff]
    %v2411 = vld [vmem:[%s2190 + $0x6e0] sm:$0xff]
    %v2412 = vld [vmem:[%s2190 + $0x6e8] sm:$0xff]
    %v2413 = vld [vmem:[%s2190 + $0x6f0] sm:$0xff]
    %v2414 = vld [vmem:[%s2190 + $0x6f8] sm:$0xff]
    %v2415 = vld [vmem:[%s2190 + $0x700] sm:$0xff]
    %v2416 = vld [vmem:[%s2190 + $0x708] sm:$0xff]
    %v2417 = vld [vmem:[%s2190 + $0x710] sm:$0xff]
    %v2418 = vld [vmem:[%s2190 + $0x718] sm:$0xff]
    %v2419 = vld [vmem:[%s2190 + $0x720] sm:$0xff]
    %v2420 = vld [vmem:[%s2190 + $0x728] sm:$0xff]
    %v2421 = vld [vmem:[%s2190 + $0x730] sm:$0xff]
    %v2422 = vld [vmem:[%s2190 + $0x738] sm:$0xff]
    %v2423 = vld [vmem:[%s2190 + $0x740] sm:$0xff]
    %v2424 = vld [vmem:[%s2190 + $0x748] sm:$0xff]
    %v2425 = vld [vmem:[%s2190 + $0x750] sm:$0xff]
    %v2426 = vld [vmem:[%s2190 + $0x758] sm:$0xff]
    %v2427 = vld [vmem:[%s2190 + $0x760] sm:$0xff]
    %v2428 = vld [vmem:[%s2190 + $0x768] sm:$0xff]
    %v2429 = vld [vmem:[%s2190 + $0x770] sm:$0xff]
    %v2430 = vld [vmem:[%s2190 + $0x778] sm:$0xff]
    %v2431 = vld [vmem:[%s2190 + $0x780] sm:$0xff]
    %v2432 = vld [vmem:[%s2190 + $0x788] sm:$0xff]
    %v2433 = vld [vmem:[%s2190 + $0x790] sm:$0xff]
    %v2434 = vld [vmem:[%s2190 + $0x798] sm:$0xff]
    %v2435 = vld [vmem:[%s2190 + $0x7a0] sm:$0xff]
    %v2436 = vld [vmem:[%s2190 + $0x7a8] sm:$0xff]
    %v2437 = vld [vmem:[%s2190 + $0x7b0] sm:$0xff]
    %v2438 = vld [vmem:[%s2190 + $0x7b8] sm:$0xff]
    %v2439 = vld [vmem:[%s2190 + $0x7c0] sm:$0xff]
    %v2440 = vld [vmem:[%s2190 + $0x7c8] sm:$0xff]
    %v2441 = vld [vmem:[%s2190 + $0x7d0] sm:$0xff]
    %v2442 = vld [vmem:[%s2190 + $0x7d8] sm:$0xff]
    %v2443 = vld [vmem:[%s2190 + $0x7e0] sm:$0xff]
    %v2444 = vld [vmem:[%s2190 + $0x7e8] sm:$0xff]
    %v2445 = vld [vmem:[%s2190 + $0x7f0] sm:$0xff]
    %v2446 = vld [vmem:[%s2190 + $0x7f8] sm:$0xff]
    %2447 = vmatpush.msra.mxu0 %v2251
    %2448 = vmatpush.msra.mxu0 %v2247
    %2449 = vmatpush.msra.mxu0 %v2243
    %2450 = vmatpush.msra.mxu0 %v2239
    %2451 = vmatpush.msra.mxu0 %v2235
    %2452 = vmatpush.msra.mxu0 %v2231
    %2453 = vmatpush.msra.mxu0 %v2227
    %2454 = vmatpush.msra.mxu0 %v2223
    %2455 = vmatpush.msra.mxu0 %v2219
    %2456 = vmatpush.msra.mxu0 %v2215
    %2457 = vmatpush.msra.mxu0 %v2211
    %2458 = vmatpush.msra.mxu0 %v2207
    %2459 = vmatpush.msra.mxu0 %v2203
    %2460 = vmatpush.msra.mxu0 %v2199
    %2461 = vmatpush.msra.mxu0 %v2195
    %2462 = vmatpush.msra.mxu0 %v2191
    %2463 = vmatmul.f32.gmra.mxu0 %v2136
    %v2464 = vpop.f32.mrf.mxu0
    %v2465 = vadd.f32 0.0, %v2464
    %2466 = vmatmul.f32.gmra.mxu0 %v2147
    %v2467 = vpop.f32.mrf.mxu0
    %v2468 = vadd.f32 0.0, %v2467
    %2469 = vmatmul.f32.gmra.mxu0 %v2156
    %v2470 = vpop.f32.mrf.mxu0
    %v2471 = vadd.f32 0.0, %v2470
    %2472 = vmatmul.f32.gmra.mxu0 %v2167
    %v2473 = vpop.f32.mrf.mxu0
    %v2474 = vadd.f32 0.0, %v2473
    %2475 = vdwg.mxu0
    %2476 = vmatpush.msra.mxu0 %v2315
    %2477 = vmatpush.msra.mxu0 %v2311
    %2478 = vmatpush.msra.mxu0 %v2307
    %2479 = vmatpush.msra.mxu0 %v2303
    %2480 = vmatpush.msra.mxu0 %v2299
    %2481 = vmatpush.msra.mxu0 %v2295
    %2482 = vmatpush.msra.mxu0 %v2291
    %2483 = vmatpush.msra.mxu0 %v2287
    %2484 = vmatpush.msra.mxu0 %v2283
    %2485 = vmatpush.msra.mxu0 %v2279
    %2486 = vmatpush.msra.mxu0 %v2275
    %2487 = vmatpush.msra.mxu0 %v2271
    %2488 = vmatpush.msra.mxu0 %v2267
    %2489 = vmatpush.msra.mxu0 %v2263
    %2490 = vmatpush.msra.mxu0 %v2259
    %2491 = vmatpush.msra.mxu0 %v2255
    %2492 = vmatmul.f32.gmra.mxu0 %v2139
    %v2493 = vpop.f32.mrf.mxu0
    %v2494 = vadd.f32 %v2465, %v2493
    %2495 = vmatmul.f32.gmra.mxu0 %v2149
    %v2496 = vpop.f32.mrf.mxu0
    %v2497 = vadd.f32 %v2468, %v2496
    %2498 = vmatmul.f32.gmra.mxu0 %v2159
    %v2499 = vpop.f32.mrf.mxu0
    %v2500 = vadd.f32 %v2471, %v2499
    %2501 = vmatmul.f32.gmra.mxu0 %v2169
    %v2502 = vpop.f32.mrf.mxu0
    %v2503 = vadd.f32 %v2474, %v2502
    %2504 = vdwg.mxu0
    %2505 = vmatpush.msra.mxu0 %v2379
    %2506 = vmatpush.msra.mxu0 %v2375
    %2507 = vmatpush.msra.mxu0 %v2371
    %2508 = vmatpush.msra.mxu0 %v2367
    %2509 = vmatpush.msra.mxu0 %v2363
    %2510 = vmatpush.msra.mxu0 %v2359
    %2511 = vmatpush.msra.mxu0 %v2355
    %2512 = vmatpush.msra.mxu0 %v2351
    %2513 = vmatpush.msra.mxu0 %v2347
    %2514 = vmatpush.msra.mxu0 %v2343
    %2515 = vmatpush.msra.mxu0 %v2339
    %2516 = vmatpush.msra.mxu0 %v2335
    %2517 = vmatpush.msra.mxu0 %v2331
    %2518 = vmatpush.msra.mxu0 %v2327
    %2519 = vmatpush.msra.mxu0 %v2323
    %2520 = vmatpush.msra.mxu0 %v2319
    %2521 = vmatmul.f32.gmra.mxu0 %v2142
    %v2522 = vpop.f32.mrf.mxu0
    %v2523 = vadd.f32 %v2494, %v2522
    %2524 = vmatmul.f32.gmra.mxu0 %v2151
    %v2525 = vpop.f32.mrf.mxu0
    %v2526 = vadd.f32 %v2497, %v2525
    %2527 = vmatmul.f32.gmra.mxu0 %v2162
    %v2528 = vpop.f32.mrf.mxu0
    %v2529 = vadd.f32 %v2500, %v2528
    %2530 = vmatmul.f32.gmra.mxu0 %v2171
    %v2531 = vpop.f32.mrf.mxu0
    %v2532 = vadd.f32 %v2503, %v2531
    %2533 = vdwg.mxu0
    %2534 = vmatpush.msra.mxu0 %v2443
    %2535 = vmatpush.msra.mxu0 %v2439
    %2536 = vmatpush.msra.mxu0 %v2435
    %2537 = vmatpush.msra.mxu0 %v2431
    %2538 = vmatpush.msra.mxu0 %v2427
    %2539 = vmatpush.msra.mxu0 %v2423
    %2540 = vmatpush.msra.mxu0 %v2419
    %2541 = vmatpush.msra.mxu0 %v2415
    %2542 = vmatpush.msra.mxu0 %v2411
    %2543 = vmatpush.msra.mxu0 %v2407
    %2544 = vmatpush.msra.mxu0 %v2403
    %2545 = vmatpush.msra.mxu0 %v2399
    %2546 = vmatpush.msra.mxu0 %v2395
    %2547 = vmatpush.msra.mxu0 %v2391
    %2548 = vmatpush.msra.mxu0 %v2387
    %2549 = vmatpush.msra.mxu0 %v2383
    %2550 = vmatmul.f32.gmra.mxu0 %v2145
    %v2551 = vpop.f32.mrf.mxu0
    %v2552 = vadd.f32 %v2523, %v2551
    %2553 = vmatmul.f32.gmra.mxu0 %v2153
    %v2554 = vpop.f32.mrf.mxu0
    %v2555 = vadd.f32 %v2526, %v2554
    %2556 = vmatmul.f32.gmra.mxu0 %v2165
    %v2557 = vpop.f32.mrf.mxu0
    %v2558 = vadd.f32 %v2529, %v2557
    %2559 = vmatmul.f32.gmra.mxu0 %v2173
    %v2560 = vpop.f32.mrf.mxu0
    %v2561 = vadd.f32 %v2532, %v2560
    %2562 = vdwg.mxu0
    %2563 = vmatpush.msra.mxu0 %v2252
    %2564 = vmatpush.msra.mxu0 %v2248
    %2565 = vmatpush.msra.mxu0 %v2244
    %2566 = vmatpush.msra.mxu0 %v2240
    %2567 = vmatpush.msra.mxu0 %v2236
    %2568 = vmatpush.msra.mxu0 %v2232
    %2569 = vmatpush.msra.mxu0 %v2228
    %2570 = vmatpush.msra.mxu0 %v2224
    %2571 = vmatpush.msra.mxu0 %v2220
    %2572 = vmatpush.msra.mxu0 %v2216
    %2573 = vmatpush.msra.mxu0 %v2212
    %2574 = vmatpush.msra.mxu0 %v2208
    %2575 = vmatpush.msra.mxu0 %v2204
    %2576 = vmatpush.msra.mxu0 %v2200
    %2577 = vmatpush.msra.mxu0 %v2196
    %2578 = vmatpush.msra.mxu0 %v2192
    %2579 = vmatmul.f32.gmra.mxu0 %v2136
    %v2580 = vpop.f32.mrf.mxu0
    %v2581 = vadd.f32 0.0, %v2580
    %2582 = vmatmul.f32.gmra.mxu0 %v2147
    %v2583 = vpop.f32.mrf.mxu0
    %v2584 = vadd.f32 0.0, %v2583
    %2585 = vmatmul.f32.gmra.mxu0 %v2156
    %v2586 = vpop.f32.mrf.mxu0
    %v2587 = vadd.f32 0.0, %v2586
    %2588 = vmatmul.f32.gmra.mxu0 %v2167
    %v2589 = vpop.f32.mrf.mxu0
    %v2590 = vadd.f32 0.0, %v2589
    %2591 = vdwg.mxu0
    %2592 = vmatpush.msra.mxu0 %v2316
    %2593 = vmatpush.msra.mxu0 %v2312
    %2594 = vmatpush.msra.mxu0 %v2308
    %2595 = vmatpush.msra.mxu0 %v2304
    %2596 = vmatpush.msra.mxu0 %v2300
    %2597 = vmatpush.msra.mxu0 %v2296
    %2598 = vmatpush.msra.mxu0 %v2292
    %2599 = vmatpush.msra.mxu0 %v2288
    %2600 = vmatpush.msra.mxu0 %v2284
    %2601 = vmatpush.msra.mxu0 %v2280
    %2602 = vmatpush.msra.mxu0 %v2276
    %2603 = vmatpush.msra.mxu0 %v2272
    %2604 = vmatpush.msra.mxu0 %v2268
    %2605 = vmatpush.msra.mxu0 %v2264
    %2606 = vmatpush.msra.mxu0 %v2260
    %2607 = vmatpush.msra.mxu0 %v2256
    %2608 = vmatmul.f32.gmra.mxu0 %v2139
    %v2609 = vpop.f32.mrf.mxu0
    %v2610 = vadd.f32 %v2581, %v2609
    %2611 = vmatmul.f32.gmra.mxu0 %v2149
    %v2612 = vpop.f32.mrf.mxu0
    %v2613 = vadd.f32 %v2584, %v2612
    %2614 = vmatmul.f32.gmra.mxu0 %v2159
    %v2615 = vpop.f32.mrf.mxu0
    %v2616 = vadd.f32 %v2587, %v2615
    %2617 = vmatmul.f32.gmra.mxu0 %v2169
    %v2618 = vpop.f32.mrf.mxu0
    %v2619 = vadd.f32 %v2590, %v2618
    %2620 = vdwg.mxu0
    %2621 = vmatpush.msra.mxu0 %v2380
    %2622 = vmatpush.msra.mxu0 %v2376
    %2623 = vmatpush.msra.mxu0 %v2372
    %2624 = vmatpush.msra.mxu0 %v2368
    %2625 = vmatpush.msra.mxu0 %v2364
    %2626 = vmatpush.msra.mxu0 %v2360
    %2627 = vmatpush.msra.mxu0 %v2356
    %2628 = vmatpush.msra.mxu0 %v2352
    %2629 = vmatpush.msra.mxu0 %v2348
    %2630 = vmatpush.msra.mxu0 %v2344
    %2631 = vmatpush.msra.mxu0 %v2340
    %2632 = vmatpush.msra.mxu0 %v2336
    %2633 = vmatpush.msra.mxu0 %v2332
    %2634 = vmatpush.msra.mxu0 %v2328
    %2635 = vmatpush.msra.mxu0 %v2324
    %2636 = vmatpush.msra.mxu0 %v2320
    %2637 = vmatmul.f32.gmra.mxu0 %v2142
    %v2638 = vpop.f32.mrf.mxu0
    %v2639 = vadd.f32 %v2610, %v2638
    %2640 = vmatmul.f32.gmra.mxu0 %v2151
    %v2641 = vpop.f32.mrf.mxu0
    %v2642 = vadd.f32 %v2613, %v2641
    %2643 = vmatmul.f32.gmra.mxu0 %v2162
    %v2644 = vpop.f32.mrf.mxu0
    %v2645 = vadd.f32 %v2616, %v2644
    %2646 = vmatmul.f32.gmra.mxu0 %v2171
    %v2647 = vpop.f32.mrf.mxu0
    %v2648 = vadd.f32 %v2619, %v2647
    %2649 = vdwg.mxu0
    %2650 = vmatpush.msra.mxu0 %v2444
    %2651 = vmatpush.msra.mxu0 %v2440
    %2652 = vmatpush.msra.mxu0 %v2436
    %2653 = vmatpush.msra.mxu0 %v2432
    %2654 = vmatpush.msra.mxu0 %v2428
    %2655 = vmatpush.msra.mxu0 %v2424
    %2656 = vmatpush.msra.mxu0 %v2420
    %2657 = vmatpush.msra.mxu0 %v2416
    %2658 = vmatpush.msra.mxu0 %v2412
    %2659 = vmatpush.msra.mxu0 %v2408
    %2660 = vmatpush.msra.mxu0 %v2404
    %2661 = vmatpush.msra.mxu0 %v2400
    %2662 = vmatpush.msra.mxu0 %v2396
    %2663 = vmatpush.msra.mxu0 %v2392
    %2664 = vmatpush.msra.mxu0 %v2388
    %2665 = vmatpush.msra.mxu0 %v2384
    %2666 = vmatmul.f32.gmra.mxu0 %v2145
    %v2667 = vpop.f32.mrf.mxu0
    %v2668 = vadd.f32 %v2639, %v2667
    %2669 = vmatmul.f32.gmra.mxu0 %v2153
    %v2670 = vpop.f32.mrf.mxu0
    %v2671 = vadd.f32 %v2642, %v2670
    %2672 = vmatmul.f32.gmra.mxu0 %v2165
    %v2673 = vpop.f32.mrf.mxu0
    %v2674 = vadd.f32 %v2645, %v2673
    %2675 = vmatmul.f32.gmra.mxu0 %v2173
    %v2676 = vpop.f32.mrf.mxu0
    %v2677 = vadd.f32 %v2648, %v2676
    %2678 = vdwg.mxu0
    %2679 = vmatpush.msra.mxu0 %v2253
    %2680 = vmatpush.msra.mxu0 %v2249
    %2681 = vmatpush.msra.mxu0 %v2245
    %2682 = vmatpush.msra.mxu0 %v2241
    %2683 = vmatpush.msra.mxu0 %v2237
    %2684 = vmatpush.msra.mxu0 %v2233
    %2685 = vmatpush.msra.mxu0 %v2229
    %2686 = vmatpush.msra.mxu0 %v2225
    %2687 = vmatpush.msra.mxu0 %v2221
    %2688 = vmatpush.msra.mxu0 %v2217
    %2689 = vmatpush.msra.mxu0 %v2213
    %2690 = vmatpush.msra.mxu0 %v2209
    %2691 = vmatpush.msra.mxu0 %v2205
    %2692 = vmatpush.msra.mxu0 %v2201
    %2693 = vmatpush.msra.mxu0 %v2197
    %2694 = vmatpush.msra.mxu0 %v2193
    %2695 = vmatmul.f32.gmra.mxu0 %v2136
    %v2696 = vpop.f32.mrf.mxu0
    %v2697 = vadd.f32 0.0, %v2696
    %2698 = vmatmul.f32.gmra.mxu0 %v2147
    %v2699 = vpop.f32.mrf.mxu0
    %v2700 = vadd.f32 0.0, %v2699
    %2701 = vmatmul.f32.gmra.mxu0 %v2156
    %v2702 = vpop.f32.mrf.mxu0
    %v2703 = vadd.f32 0.0, %v2702
    %2704 = vmatmul.f32.gmra.mxu0 %v2167
    %v2705 = vpop.f32.mrf.mxu0
    %v2706 = vadd.f32 0.0, %v2705
    %2707 = vdwg.mxu0
    %2708 = vmatpush.msra.mxu0 %v2317
    %2709 = vmatpush.msra.mxu0 %v2313
    %2710 = vmatpush.msra.mxu0 %v2309
    %2711 = vmatpush.msra.mxu0 %v2305
    %2712 = vmatpush.msra.mxu0 %v2301
    %2713 = vmatpush.msra.mxu0 %v2297
    %2714 = vmatpush.msra.mxu0 %v2293
    %2715 = vmatpush.msra.mxu0 %v2289
    %2716 = vmatpush.msra.mxu0 %v2285
    %2717 = vmatpush.msra.mxu0 %v2281
    %2718 = vmatpush.msra.mxu0 %v2277
    %2719 = vmatpush.msra.mxu0 %v2273
    %2720 = vmatpush.msra.mxu0 %v2269
    %2721 = vmatpush.msra.mxu0 %v2265
    %2722 = vmatpush.msra.mxu0 %v2261
    %2723 = vmatpush.msra.mxu0 %v2257
    %2724 = vmatmul.f32.gmra.mxu0 %v2139
    %v2725 = vpop.f32.mrf.mxu0
    %v2726 = vadd.f32 %v2697, %v2725
    %2727 = vmatmul.f32.gmra.mxu0 %v2149
    %v2728 = vpop.f32.mrf.mxu0
    %v2729 = vadd.f32 %v2700, %v2728
    %2730 = vmatmul.f32.gmra.mxu0 %v2159
    %v2731 = vpop.f32.mrf.mxu0
    %v2732 = vadd.f32 %v2703, %v2731
    %2733 = vmatmul.f32.gmra.mxu0 %v2169
    %v2734 = vpop.f32.mrf.mxu0
    %v2735 = vadd.f32 %v2706, %v2734
    %2736 = vdwg.mxu0
    %2737 = vmatpush.msra.mxu0 %v2381
    %2738 = vmatpush.msra.mxu0 %v2377
    %2739 = vmatpush.msra.mxu0 %v2373
    %2740 = vmatpush.msra.mxu0 %v2369
    %2741 = vmatpush.msra.mxu0 %v2365
    %2742 = vmatpush.msra.mxu0 %v2361
    %2743 = vmatpush.msra.mxu0 %v2357
    %2744 = vmatpush.msra.mxu0 %v2353
    %2745 = vmatpush.msra.mxu0 %v2349
    %2746 = vmatpush.msra.mxu0 %v2345
    %2747 = vmatpush.msra.mxu0 %v2341
    %2748 = vmatpush.msra.mxu0 %v2337
    %2749 = vmatpush.msra.mxu0 %v2333
    %2750 = vmatpush.msra.mxu0 %v2329
    %2751 = vmatpush.msra.mxu0 %v2325
    %2752 = vmatpush.msra.mxu0 %v2321
    %2753 = vmatmul.f32.gmra.mxu0 %v2142
    %v2754 = vpop.f32.mrf.mxu0
    %v2755 = vadd.f32 %v2726, %v2754
    %2756 = vmatmul.f32.gmra.mxu0 %v2151
    %v2757 = vpop.f32.mrf.mxu0
    %v2758 = vadd.f32 %v2729, %v2757
    %2759 = vmatmul.f32.gmra.mxu0 %v2162
    %v2760 = vpop.f32.mrf.mxu0
    %v2761 = vadd.f32 %v2732, %v2760
    %2762 = vmatmul.f32.gmra.mxu0 %v2171
    %v2763 = vpop.f32.mrf.mxu0
    %v2764 = vadd.f32 %v2735, %v2763
    %2765 = vdwg.mxu0
    %2766 = vmatpush.msra.mxu0 %v2445
    %2767 = vmatpush.msra.mxu0 %v2441
    %2768 = vmatpush.msra.mxu0 %v2437
    %2769 = vmatpush.msra.mxu0 %v2433
    %2770 = vmatpush.msra.mxu0 %v2429
    %2771 = vmatpush.msra.mxu0 %v2425
    %2772 = vmatpush.msra.mxu0 %v2421
    %2773 = vmatpush.msra.mxu0 %v2417
    %2774 = vmatpush.msra.mxu0 %v2413
    %2775 = vmatpush.msra.mxu0 %v2409
    %2776 = vmatpush.msra.mxu0 %v2405
    %2777 = vmatpush.msra.mxu0 %v2401
    %2778 = vmatpush.msra.mxu0 %v2397
    %2779 = vmatpush.msra.mxu0 %v2393
    %2780 = vmatpush.msra.mxu0 %v2389
    %2781 = vmatpush.msra.mxu0 %v2385
    %2782 = vmatmul.f32.gmra.mxu0 %v2145
    %v2783 = vpop.f32.mrf.mxu0
    %v2784 = vadd.f32 %v2755, %v2783
    %2785 = vmatmul.f32.gmra.mxu0 %v2153
    %v2786 = vpop.f32.mrf.mxu0
    %v2787 = vadd.f32 %v2758, %v2786
    %2788 = vmatmul.f32.gmra.mxu0 %v2165
    %v2789 = vpop.f32.mrf.mxu0
    %v2790 = vadd.f32 %v2761, %v2789
    %2791 = vmatmul.f32.gmra.mxu0 %v2173
    %v2792 = vpop.f32.mrf.mxu0
    %v2793 = vadd.f32 %v2764, %v2792
    %2794 = vdwg.mxu0
    %2795 = vmatpush.msra.mxu0 %v2254
    %2796 = vmatpush.msra.mxu0 %v2250
    %2797 = vmatpush.msra.mxu0 %v2246
    %2798 = vmatpush.msra.mxu0 %v2242
    %2799 = vmatpush.msra.mxu0 %v2238
    %2800 = vmatpush.msra.mxu0 %v2234
    %2801 = vmatpush.msra.mxu0 %v2230
    %2802 = vmatpush.msra.mxu0 %v2226
    %2803 = vmatpush.msra.mxu0 %v2222
    %2804 = vmatpush.msra.mxu0 %v2218
    %2805 = vmatpush.msra.mxu0 %v2214
    %2806 = vmatpush.msra.mxu0 %v2210
    %2807 = vmatpush.msra.mxu0 %v2206
    %2808 = vmatpush.msra.mxu0 %v2202
    %2809 = vmatpush.msra.mxu0 %v2198
    %2810 = vmatpush.msra.mxu0 %v2194
    %2811 = vmatmul.f32.gmra.mxu0 %v2136
    %v2812 = vpop.f32.mrf.mxu0
    %v2813 = vadd.f32 0.0, %v2812
    %2814 = vmatmul.f32.gmra.mxu0 %v2147
    %v2815 = vpop.f32.mrf.mxu0
    %v2816 = vadd.f32 0.0, %v2815
    %2817 = vmatmul.f32.gmra.mxu0 %v2156
    %v2818 = vpop.f32.mrf.mxu0
    %v2819 = vadd.f32 0.0, %v2818
    %2820 = vmatmul.f32.gmra.mxu0 %v2167
    %v2821 = vpop.f32.mrf.mxu0
    %v2822 = vadd.f32 0.0, %v2821
    %2823 = vdwg.mxu0
    %2824 = vmatpush.msra.mxu0 %v2318
    %2825 = vmatpush.msra.mxu0 %v2314
    %2826 = vmatpush.msra.mxu0 %v2310
    %2827 = vmatpush.msra.mxu0 %v2306
    %2828 = vmatpush.msra.mxu0 %v2302
    %2829 = vmatpush.msra.mxu0 %v2298
    %2830 = vmatpush.msra.mxu0 %v2294
    %2831 = vmatpush.msra.mxu0 %v2290
    %2832 = vmatpush.msra.mxu0 %v2286
    %2833 = vmatpush.msra.mxu0 %v2282
    %2834 = vmatpush.msra.mxu0 %v2278
    %2835 = vmatpush.msra.mxu0 %v2274
    %2836 = vmatpush.msra.mxu0 %v2270
    %2837 = vmatpush.msra.mxu0 %v2266
    %2838 = vmatpush.msra.mxu0 %v2262
    %2839 = vmatpush.msra.mxu0 %v2258
    %2840 = vmatmul.f32.gmra.mxu0 %v2139
    %v2841 = vpop.f32.mrf.mxu0
    %v2842 = vadd.f32 %v2813, %v2841
    %2843 = vmatmul.f32.gmra.mxu0 %v2149
    %v2844 = vpop.f32.mrf.mxu0
    %v2845 = vadd.f32 %v2816, %v2844
    %2846 = vmatmul.f32.gmra.mxu0 %v2159
    %v2847 = vpop.f32.mrf.mxu0
    %v2848 = vadd.f32 %v2819, %v2847
    %2849 = vmatmul.f32.gmra.mxu0 %v2169
    %v2850 = vpop.f32.mrf.mxu0
    %v2851 = vadd.f32 %v2822, %v2850
    %2852 = vdwg.mxu0
    %2853 = vmatpush.msra.mxu0 %v2382
    %2854 = vmatpush.msra.mxu0 %v2378
    %2855 = vmatpush.msra.mxu0 %v2374
    %2856 = vmatpush.msra.mxu0 %v2370
    %2857 = vmatpush.msra.mxu0 %v2366
    %2858 = vmatpush.msra.mxu0 %v2362
    %2859 = vmatpush.msra.mxu0 %v2358
    %2860 = vmatpush.msra.mxu0 %v2354
    %2861 = vmatpush.msra.mxu0 %v2350
    %2862 = vmatpush.msra.mxu0 %v2346
    %2863 = vmatpush.msra.mxu0 %v2342
    %2864 = vmatpush.msra.mxu0 %v2338
    %2865 = vmatpush.msra.mxu0 %v2334
    %2866 = vmatpush.msra.mxu0 %v2330
    %2867 = vmatpush.msra.mxu0 %v2326
    %2868 = vmatpush.msra.mxu0 %v2322
    %2869 = vmatmul.f32.gmra.mxu0 %v2142
    %v2870 = vpop.f32.mrf.mxu0
    %v2871 = vadd.f32 %v2842, %v2870
    %2872 = vmatmul.f32.gmra.mxu0 %v2151
    %v2873 = vpop.f32.mrf.mxu0
    %v2874 = vadd.f32 %v2845, %v2873
    %2875 = vmatmul.f32.gmra.mxu0 %v2162
    %v2876 = vpop.f32.mrf.mxu0
    %v2877 = vadd.f32 %v2848, %v2876
    %2878 = vmatmul.f32.gmra.mxu0 %v2171
    %v2879 = vpop.f32.mrf.mxu0
    %v2880 = vadd.f32 %v2851, %v2879
    %2881 = vdwg.mxu0
    %2882 = vmatpush.msra.mxu0 %v2446
    %2883 = vmatpush.msra.mxu0 %v2442
    %2884 = vmatpush.msra.mxu0 %v2438
    %2885 = vmatpush.msra.mxu0 %v2434
    %2886 = vmatpush.msra.mxu0 %v2430
    %2887 = vmatpush.msra.mxu0 %v2426
    %2888 = vmatpush.msra.mxu0 %v2422
    %2889 = vmatpush.msra.mxu0 %v2418
    %2890 = vmatpush.msra.mxu0 %v2414
    %2891 = vmatpush.msra.mxu0 %v2410
    %2892 = vmatpush.msra.mxu0 %v2406
    %2893 = vmatpush.msra.mxu0 %v2402
    %2894 = vmatpush.msra.mxu0 %v2398
    %2895 = vmatpush.msra.mxu0 %v2394
    %2896 = vmatpush.msra.mxu0 %v2390
    %2897 = vmatpush.msra.mxu0 %v2386
    %2898 = vmatmul.f32.gmra.mxu0 %v2145
    %v2899 = vpop.f32.mrf.mxu0
    %v2900 = vadd.f32 %v2871, %v2899
    %2901 = vmatmul.f32.gmra.mxu0 %v2153
    %v2902 = vpop.f32.mrf.mxu0
    %v2903 = vadd.f32 %v2874, %v2902
    %2904 = vmatmul.f32.gmra.mxu0 %v2165
    %v2905 = vpop.f32.mrf.mxu0
    %v2906 = vadd.f32 %v2877, %v2905
    %2907 = vmatmul.f32.gmra.mxu0 %v2173
    %v2908 = vpop.f32.mrf.mxu0
    %v2909 = vadd.f32 %v2880, %v2908
    %2910 = vdwg.mxu0
    %2911 = vmatpush.msra.mxu0 %v1914
    %2912 = vmatpush.msra.mxu0 %v1910
    %2913 = vmatpush.msra.mxu0 %v1906
    %2914 = vmatpush.msra.mxu0 %v1902
    %2915 = vmatpush.msra.mxu0 %v1898
    %2916 = vmatpush.msra.mxu0 %v1894
    %2917 = vmatpush.msra.mxu0 %v1890
    %2918 = vmatpush.msra.mxu0 %v1886
    %2919 = vmatpush.msra.mxu0 %v1882
    %2920 = vmatpush.msra.mxu0 %v1878
    %2921 = vmatpush.msra.mxu0 %v1874
    %2922 = vmatpush.msra.mxu0 %v1870
    %2923 = vmatpush.msra.mxu0 %v1866
    %2924 = vmatpush.msra.mxu0 %v1862
    %2925 = vmatpush.msra.mxu0 %v1858
    %2926 = vmatpush.msra.mxu0 %v1854
    %2927 = vmatmul.f32.gmra.mxu0 %v1830
    %v2928 = vpop.f32.mrf.mxu0
    %v2929 = vadd.f32 %v2552, %v2928
    %2930 = vmatmul.f32.gmra.mxu0 %v1834
    %v2931 = vpop.f32.mrf.mxu0
    %v2932 = vadd.f32 %v2555, %v2931
    %2933 = vmatmul.f32.gmra.mxu0 %v1842
    %v2934 = vpop.f32.mrf.mxu0
    %v2935 = vadd.f32 %v2558, %v2934
    %2936 = vmatmul.f32.gmra.mxu0 %v1846
    %v2937 = vpop.f32.mrf.mxu0
    %v2938 = vadd.f32 %v2561, %v2937
    %2939 = vdwg.mxu0
    %2940 = vmatpush.msra.mxu0 %v1978
    %2941 = vmatpush.msra.mxu0 %v1974
    %2942 = vmatpush.msra.mxu0 %v1970
    %2943 = vmatpush.msra.mxu0 %v1966
    %2944 = vmatpush.msra.mxu0 %v1962
    %2945 = vmatpush.msra.mxu0 %v1958
    %2946 = vmatpush.msra.mxu0 %v1954
    %2947 = vmatpush.msra.mxu0 %v1950
    %2948 = vmatpush.msra.mxu0 %v1946
    %2949 = vmatpush.msra.mxu0 %v1942
    %2950 = vmatpush.msra.mxu0 %v1938
    %2951 = vmatpush.msra.mxu0 %v1934
    %2952 = vmatpush.msra.mxu0 %v1930
    %2953 = vmatpush.msra.mxu0 %v1926
    %2954 = vmatpush.msra.mxu0 %v1922
    %2955 = vmatpush.msra.mxu0 %v1918
    %2956 = vmatmul.f32.gmra.mxu0 %v1831
    %v2957 = vpop.f32.mrf.mxu0
    %v2958 = vadd.f32 %v2929, %v2957
    %2959 = vmatmul.f32.gmra.mxu0 %v1835
    %v2960 = vpop.f32.mrf.mxu0
    %v2961 = vadd.f32 %v2932, %v2960
    %2962 = vmatmul.f32.gmra.mxu0 %v1843
    %v2963 = vpop.f32.mrf.mxu0
    %v2964 = vadd.f32 %v2935, %v2963
    %2965 = vmatmul.f32.gmra.mxu0 %v1847
    %v2966 = vpop.f32.mrf.mxu0
    %v2967 = vadd.f32 %v2938, %v2966
    %2968 = vdwg.mxu0
    %2969 = vmatpush.msra.mxu0 %v2042
    %2970 = vmatpush.msra.mxu0 %v2038
    %2971 = vmatpush.msra.mxu0 %v2034
    %2972 = vmatpush.msra.mxu0 %v2030
    %2973 = vmatpush.msra.mxu0 %v2026
    %2974 = vmatpush.msra.mxu0 %v2022
    %2975 = vmatpush.msra.mxu0 %v2018
    %2976 = vmatpush.msra.mxu0 %v2014
    %2977 = vmatpush.msra.mxu0 %v2010
    %2978 = vmatpush.msra.mxu0 %v2006
    %2979 = vmatpush.msra.mxu0 %v2002
    %2980 = vmatpush.msra.mxu0 %v1998
    %2981 = vmatpush.msra.mxu0 %v1994
    %2982 = vmatpush.msra.mxu0 %v1990
    %2983 = vmatpush.msra.mxu0 %v1986
    %2984 = vmatpush.msra.mxu0 %v1982
    %2985 = vmatmul.f32.gmra.mxu0 %v1832
    %v2986 = vpop.f32.mrf.mxu0
    %v2987 = vadd.f32 %v2958, %v2986
    %2988 = vmatmul.f32.gmra.mxu0 %v1836
    %v2989 = vpop.f32.mrf.mxu0
    %v2990 = vadd.f32 %v2961, %v2989
    %2991 = vmatmul.f32.gmra.mxu0 %v1844
    %v2992 = vpop.f32.mrf.mxu0
    %v2993 = vadd.f32 %v2964, %v2992
    %2994 = vmatmul.f32.gmra.mxu0 %v1848
    %v2995 = vpop.f32.mrf.mxu0
    %v2996 = vadd.f32 %v2967, %v2995
    %2997 = vdwg.mxu0
    %2998 = vmatpush.msra.mxu0 %v2106
    %2999 = vmatpush.msra.mxu0 %v2102
    %3000 = vmatpush.msra.mxu0 %v2098
    %3001 = vmatpush.msra.mxu0 %v2094
    %3002 = vmatpush.msra.mxu0 %v2090
    %3003 = vmatpush.msra.mxu0 %v2086
    %3004 = vmatpush.msra.mxu0 %v2082
    %3005 = vmatpush.msra.mxu0 %v2078
    %3006 = vmatpush.msra.mxu0 %v2074
    %3007 = vmatpush.msra.mxu0 %v2070
    %3008 = vmatpush.msra.mxu0 %v2066
    %3009 = vmatpush.msra.mxu0 %v2062
    %3010 = vmatpush.msra.mxu0 %v2058
    %3011 = vmatpush.msra.mxu0 %v2054
    %3012 = vmatpush.msra.mxu0 %v2050
    %3013 = vmatpush.msra.mxu0 %v2046
    %3014 = vmatmul.f32.gmra.mxu0 %v1833
    %v3015 = vpop.f32.mrf.mxu0
    %v3016 = vadd.f32 %v2987, %v3015
    %3017 = vmatmul.f32.gmra.mxu0 %v1837
    %v3018 = vpop.f32.mrf.mxu0
    %v3019 = vadd.f32 %v2990, %v3018
    %3020 = vmatmul.f32.gmra.mxu0 %v1845
    %v3021 = vpop.f32.mrf.mxu0
    %v3022 = vadd.f32 %v2993, %v3021
    %3023 = vmatmul.f32.gmra.mxu0 %v1849
    %v3024 = vpop.f32.mrf.mxu0
    %v3025 = vadd.f32 %v2996, %v3024
    %3026 = vdwg.mxu0
    %3027 = vmatpush.msra.mxu0 %v1915
    %3028 = vmatpush.msra.mxu0 %v1911
    %3029 = vmatpush.msra.mxu0 %v1907
    %3030 = vmatpush.msra.mxu0 %v1903
    %3031 = vmatpush.msra.mxu0 %v1899
    %3032 = vmatpush.msra.mxu0 %v1895
    %3033 = vmatpush.msra.mxu0 %v1891
    %3034 = vmatpush.msra.mxu0 %v1887
    %3035 = vmatpush.msra.mxu0 %v1883
    %3036 = vmatpush.msra.mxu0 %v1879
    %3037 = vmatpush.msra.mxu0 %v1875
    %3038 = vmatpush.msra.mxu0 %v1871
    %3039 = vmatpush.msra.mxu0 %v1867
    %3040 = vmatpush.msra.mxu0 %v1863
    %3041 = vmatpush.msra.mxu0 %v1859
    %3042 = vmatpush.msra.mxu0 %v1855
    %3043 = vmatmul.f32.gmra.mxu0 %v1830
    %v3044 = vpop.f32.mrf.mxu0
    %v3045 = vadd.f32 %v2668, %v3044
    %3046 = vmatmul.f32.gmra.mxu0 %v1834
    %v3047 = vpop.f32.mrf.mxu0
    %v3048 = vadd.f32 %v2671, %v3047
    %3049 = vmatmul.f32.gmra.mxu0 %v1842
    %v3050 = vpop.f32.mrf.mxu0
    %v3051 = vadd.f32 %v2674, %v3050
    %3052 = vmatmul.f32.gmra.mxu0 %v1846
    %v3053 = vpop.f32.mrf.mxu0
    %v3054 = vadd.f32 %v2677, %v3053
    %3055 = vdwg.mxu0
    %3056 = vmatpush.msra.mxu0 %v1979
    %3057 = vmatpush.msra.mxu0 %v1975
    %3058 = vmatpush.msra.mxu0 %v1971
    %3059 = vmatpush.msra.mxu0 %v1967
    %3060 = vmatpush.msra.mxu0 %v1963
    %3061 = vmatpush.msra.mxu0 %v1959
    %3062 = vmatpush.msra.mxu0 %v1955
    %3063 = vmatpush.msra.mxu0 %v1951
    %3064 = vmatpush.msra.mxu0 %v1947
    %3065 = vmatpush.msra.mxu0 %v1943
    %3066 = vmatpush.msra.mxu0 %v1939
    %3067 = vmatpush.msra.mxu0 %v1935
    %3068 = vmatpush.msra.mxu0 %v1931
    %3069 = vmatpush.msra.mxu0 %v1927
    %3070 = vmatpush.msra.mxu0 %v1923
    %3071 = vmatpush.msra.mxu0 %v1919
    %3072 = vmatmul.f32.gmra.mxu0 %v1831
    %v3073 = vpop.f32.mrf.mxu0
    %v3074 = vadd.f32 %v3045, %v3073
    %3075 = vmatmul.f32.gmra.mxu0 %v1835
    %v3076 = vpop.f32.mrf.mxu0
    %v3077 = vadd.f32 %v3048, %v3076
    %3078 = vmatmul.f32.gmra.mxu0 %v1843
    %v3079 = vpop.f32.mrf.mxu0
    %v3080 = vadd.f32 %v3051, %v3079
    %3081 = vmatmul.f32.gmra.mxu0 %v1847
    %v3082 = vpop.f32.mrf.mxu0
    %v3083 = vadd.f32 %v3054, %v3082
    %3084 = vdwg.mxu0
    %3085 = vmatpush.msra.mxu0 %v2043
    %3086 = vmatpush.msra.mxu0 %v2039
    %3087 = vmatpush.msra.mxu0 %v2035
    %3088 = vmatpush.msra.mxu0 %v2031
    %3089 = vmatpush.msra.mxu0 %v2027
    %3090 = vmatpush.msra.mxu0 %v2023
    %3091 = vmatpush.msra.mxu0 %v2019
    %3092 = vmatpush.msra.mxu0 %v2015
    %3093 = vmatpush.msra.mxu0 %v2011
    %3094 = vmatpush.msra.mxu0 %v2007
    %3095 = vmatpush.msra.mxu0 %v2003
    %3096 = vmatpush.msra.mxu0 %v1999
    %3097 = vmatpush.msra.mxu0 %v1995
    %3098 = vmatpush.msra.mxu0 %v1991
    %3099 = vmatpush.msra.mxu0 %v1987
    %3100 = vmatpush.msra.mxu0 %v1983
    %3101 = vmatmul.f32.gmra.mxu0 %v1832
    %v3102 = vpop.f32.mrf.mxu0
    %v3103 = vadd.f32 %v3074, %v3102
    %3104 = vmatmul.f32.gmra.mxu0 %v1836
    %v3105 = vpop.f32.mrf.mxu0
    %v3106 = vadd.f32 %v3077, %v3105
    %3107 = vmatmul.f32.gmra.mxu0 %v1844
    %v3108 = vpop.f32.mrf.mxu0
    %v3109 = vadd.f32 %v3080, %v3108
    %3110 = vmatmul.f32.gmra.mxu0 %v1848
    %v3111 = vpop.f32.mrf.mxu0
    %v3112 = vadd.f32 %v3083, %v3111
    %3113 = vdwg.mxu0
    %3114 = vmatpush.msra.mxu0 %v2107
    %3115 = vmatpush.msra.mxu0 %v2103
    %3116 = vmatpush.msra.mxu0 %v2099
    %3117 = vmatpush.msra.mxu0 %v2095
    %3118 = vmatpush.msra.mxu0 %v2091
    %3119 = vmatpush.msra.mxu0 %v2087
    %3120 = vmatpush.msra.mxu0 %v2083
    %3121 = vmatpush.msra.mxu0 %v2079
    %3122 = vmatpush.msra.mxu0 %v2075
    %3123 = vmatpush.msra.mxu0 %v2071
    %3124 = vmatpush.msra.mxu0 %v2067
    %3125 = vmatpush.msra.mxu0 %v2063
    %3126 = vmatpush.msra.mxu0 %v2059
    %3127 = vmatpush.msra.mxu0 %v2055
    %3128 = vmatpush.msra.mxu0 %v2051
    %3129 = vmatpush.msra.mxu0 %v2047
    %3130 = vmatmul.f32.gmra.mxu0 %v1833
    %v3131 = vpop.f32.mrf.mxu0
    %v3132 = vadd.f32 %v3103, %v3131
    %3133 = vmatmul.f32.gmra.mxu0 %v1837
    %v3134 = vpop.f32.mrf.mxu0
    %v3135 = vadd.f32 %v3106, %v3134
    %3136 = vmatmul.f32.gmra.mxu0 %v1845
    %v3137 = vpop.f32.mrf.mxu0
    %v3138 = vadd.f32 %v3109, %v3137
    %3139 = vmatmul.f32.gmra.mxu0 %v1849
    %v3140 = vpop.f32.mrf.mxu0
    %v3141 = vadd.f32 %v3112, %v3140
    %3142 = vdwg.mxu0
    %3143 = vmatpush.msra.mxu0 %v1916
    %3144 = vmatpush.msra.mxu0 %v1912
    %3145 = vmatpush.msra.mxu0 %v1908
    %3146 = vmatpush.msra.mxu0 %v1904
    %3147 = vmatpush.msra.mxu0 %v1900
    %3148 = vmatpush.msra.mxu0 %v1896
    %3149 = vmatpush.msra.mxu0 %v1892
    %3150 = vmatpush.msra.mxu0 %v1888
    %3151 = vmatpush.msra.mxu0 %v1884
    %3152 = vmatpush.msra.mxu0 %v1880
    %3153 = vmatpush.msra.mxu0 %v1876
    %3154 = vmatpush.msra.mxu0 %v1872
    %3155 = vmatpush.msra.mxu0 %v1868
    %3156 = vmatpush.msra.mxu0 %v1864
    %3157 = vmatpush.msra.mxu0 %v1860
    %3158 = vmatpush.msra.mxu0 %v1856
    %3159 = vmatmul.f32.gmra.mxu0 %v1830
    %v3160 = vpop.f32.mrf.mxu0
    %v3161 = vadd.f32 %v2784, %v3160
    %3162 = vmatmul.f32.gmra.mxu0 %v1834
    %v3163 = vpop.f32.mrf.mxu0
    %v3164 = vadd.f32 %v2787, %v3163
    %3165 = vmatmul.f32.gmra.mxu0 %v1842
    %v3166 = vpop.f32.mrf.mxu0
    %v3167 = vadd.f32 %v2790, %v3166
    %3168 = vmatmul.f32.gmra.mxu0 %v1846
    %v3169 = vpop.f32.mrf.mxu0
    %v3170 = vadd.f32 %v2793, %v3169
    %3171 = vdwg.mxu0
    %3172 = vmatpush.msra.mxu0 %v1980
    %3173 = vmatpush.msra.mxu0 %v1976
    %3174 = vmatpush.msra.mxu0 %v1972
    %3175 = vmatpush.msra.mxu0 %v1968
    %3176 = vmatpush.msra.mxu0 %v1964
    %3177 = vmatpush.msra.mxu0 %v1960
    %3178 = vmatpush.msra.mxu0 %v1956
    %3179 = vmatpush.msra.mxu0 %v1952
    %3180 = vmatpush.msra.mxu0 %v1948
    %3181 = vmatpush.msra.mxu0 %v1944
    %3182 = vmatpush.msra.mxu0 %v1940
    %3183 = vmatpush.msra.mxu0 %v1936
    %3184 = vmatpush.msra.mxu0 %v1932
    %3185 = vmatpush.msra.mxu0 %v1928
    %3186 = vmatpush.msra.mxu0 %v1924
    %3187 = vmatpush.msra.mxu0 %v1920
    %3188 = vmatmul.f32.gmra.mxu0 %v1831
    %v3189 = vpop.f32.mrf.mxu0
    %v3190 = vadd.f32 %v3161, %v3189
    %3191 = vmatmul.f32.gmra.mxu0 %v1835
    %v3192 = vpop.f32.mrf.mxu0
    %v3193 = vadd.f32 %v3164, %v3192
    %3194 = vmatmul.f32.gmra.mxu0 %v1843
    %v3195 = vpop.f32.mrf.mxu0
    %v3196 = vadd.f32 %v3167, %v3195
    %3197 = vmatmul.f32.gmra.mxu0 %v1847
    %v3198 = vpop.f32.mrf.mxu0
    %v3199 = vadd.f32 %v3170, %v3198
    %3200 = vdwg.mxu0
    %3201 = vmatpush.msra.mxu0 %v2044
    %3202 = vmatpush.msra.mxu0 %v2040
    %3203 = vmatpush.msra.mxu0 %v2036
    %3204 = vmatpush.msra.mxu0 %v2032
    %3205 = vmatpush.msra.mxu0 %v2028
    %3206 = vmatpush.msra.mxu0 %v2024
    %3207 = vmatpush.msra.mxu0 %v2020
    %3208 = vmatpush.msra.mxu0 %v2016
    %3209 = vmatpush.msra.mxu0 %v2012
    %3210 = vmatpush.msra.mxu0 %v2008
    %3211 = vmatpush.msra.mxu0 %v2004
    %3212 = vmatpush.msra.mxu0 %v2000
    %3213 = vmatpush.msra.mxu0 %v1996
    %3214 = vmatpush.msra.mxu0 %v1992
    %3215 = vmatpush.msra.mxu0 %v1988
    %3216 = vmatpush.msra.mxu0 %v1984
    %3217 = vmatmul.f32.gmra.mxu0 %v1832
    %v3218 = vpop.f32.mrf.mxu0
    %v3219 = vadd.f32 %v3190, %v3218
    %3220 = vmatmul.f32.gmra.mxu0 %v1836
    %v3221 = vpop.f32.mrf.mxu0
    %v3222 = vadd.f32 %v3193, %v3221
    %3223 = vmatmul.f32.gmra.mxu0 %v1844
    %v3224 = vpop.f32.mrf.mxu0
    %v3225 = vadd.f32 %v3196, %v3224
    %3226 = vmatmul.f32.gmra.mxu0 %v1848
    %v3227 = vpop.f32.mrf.mxu0
    %v3228 = vadd.f32 %v3199, %v3227
    %3229 = vdwg.mxu0
    %3230 = vmatpush.msra.mxu0 %v2108
    %3231 = vmatpush.msra.mxu0 %v2104
    %3232 = vmatpush.msra.mxu0 %v2100
    %3233 = vmatpush.msra.mxu0 %v2096
    %3234 = vmatpush.msra.mxu0 %v2092
    %3235 = vmatpush.msra.mxu0 %v2088
    %3236 = vmatpush.msra.mxu0 %v2084
    %3237 = vmatpush.msra.mxu0 %v2080
    %3238 = vmatpush.msra.mxu0 %v2076
    %3239 = vmatpush.msra.mxu0 %v2072
    %3240 = vmatpush.msra.mxu0 %v2068
    %3241 = vmatpush.msra.mxu0 %v2064
    %3242 = vmatpush.msra.mxu0 %v2060
    %3243 = vmatpush.msra.mxu0 %v2056
    %3244 = vmatpush.msra.mxu0 %v2052
    %3245 = vmatpush.msra.mxu0 %v2048
    %3246 = vmatmul.f32.gmra.mxu0 %v1833
    %v3247 = vpop.f32.mrf.mxu0
    %v3248 = vadd.f32 %v3219, %v3247
    %3249 = vmatmul.f32.gmra.mxu0 %v1837
    %v3250 = vpop.f32.mrf.mxu0
    %v3251 = vadd.f32 %v3222, %v3250
    %3252 = vmatmul.f32.gmra.mxu0 %v1845
    %v3253 = vpop.f32.mrf.mxu0
    %v3254 = vadd.f32 %v3225, %v3253
    %3255 = vmatmul.f32.gmra.mxu0 %v1849
    %v3256 = vpop.f32.mrf.mxu0
    %v3257 = vadd.f32 %v3228, %v3256
    %3258 = vdwg.mxu0
    %3259 = vmatpush.msra.mxu0 %v1917
    %3260 = vmatpush.msra.mxu0 %v1913
    %3261 = vmatpush.msra.mxu0 %v1909
    %3262 = vmatpush.msra.mxu0 %v1905
    %3263 = vmatpush.msra.mxu0 %v1901
    %3264 = vmatpush.msra.mxu0 %v1897
    %3265 = vmatpush.msra.mxu0 %v1893
    %3266 = vmatpush.msra.mxu0 %v1889
    %3267 = vmatpush.msra.mxu0 %v1885
    %3268 = vmatpush.msra.mxu0 %v1881
    %3269 = vmatpush.msra.mxu0 %v1877
    %3270 = vmatpush.msra.mxu0 %v1873
    %3271 = vmatpush.msra.mxu0 %v1869
    %3272 = vmatpush.msra.mxu0 %v1865
    %3273 = vmatpush.msra.mxu0 %v1861
    %3274 = vmatpush.msra.mxu0 %v1857
    %3275 = vmatmul.f32.gmra.mxu0 %v1830
    %v3276 = vpop.f32.mrf.mxu0
    %v3277 = vadd.f32 %v2900, %v3276
    %3278 = vmatmul.f32.gmra.mxu0 %v1834
    %v3279 = vpop.f32.mrf.mxu0
    %v3280 = vadd.f32 %v2903, %v3279
    %3281 = vmatmul.f32.gmra.mxu0 %v1842
    %v3282 = vpop.f32.mrf.mxu0
    %v3283 = vadd.f32 %v2906, %v3282
    %3284 = vmatmul.f32.gmra.mxu0 %v1846
    %v3285 = vpop.f32.mrf.mxu0
    %v3286 = vadd.f32 %v2909, %v3285
    %3287 = vdwg.mxu0
    %3288 = vmatpush.msra.mxu0 %v1981
    %3289 = vmatpush.msra.mxu0 %v1977
    %3290 = vmatpush.msra.mxu0 %v1973
    %3291 = vmatpush.msra.mxu0 %v1969
    %3292 = vmatpush.msra.mxu0 %v1965
    %3293 = vmatpush.msra.mxu0 %v1961
    %3294 = vmatpush.msra.mxu0 %v1957
    %3295 = vmatpush.msra.mxu0 %v1953
    %3296 = vmatpush.msra.mxu0 %v1949
    %3297 = vmatpush.msra.mxu0 %v1945
    %3298 = vmatpush.msra.mxu0 %v1941
    %3299 = vmatpush.msra.mxu0 %v1937
    %3300 = vmatpush.msra.mxu0 %v1933
    %3301 = vmatpush.msra.mxu0 %v1929
    %3302 = vmatpush.msra.mxu0 %v1925
    %3303 = vmatpush.msra.mxu0 %v1921
    %3304 = vmatmul.f32.gmra.mxu0 %v1831
    %v3305 = vpop.f32.mrf.mxu0
    %v3306 = vadd.f32 %v3277, %v3305
    %3307 = vmatmul.f32.gmra.mxu0 %v1835
    %v3308 = vpop.f32.mrf.mxu0
    %v3309 = vadd.f32 %v3280, %v3308
    %3310 = vmatmul.f32.gmra.mxu0 %v1843
    %v3311 = vpop.f32.mrf.mxu0
    %v3312 = vadd.f32 %v3283, %v3311
    %3313 = vmatmul.f32.gmra.mxu0 %v1847
    %v3314 = vpop.f32.mrf.mxu0
    %v3315 = vadd.f32 %v3286, %v3314
    %3316 = vdwg.mxu0
    %3317 = vmatpush.msra.mxu0 %v2045
    %3318 = vmatpush.msra.mxu0 %v2041
    %3319 = vmatpush.msra.mxu0 %v2037
    %3320 = vmatpush.msra.mxu0 %v2033
    %3321 = vmatpush.msra.mxu0 %v2029
    %3322 = vmatpush.msra.mxu0 %v2025
    %3323 = vmatpush.msra.mxu0 %v2021
    %3324 = vmatpush.msra.mxu0 %v2017
    %3325 = vmatpush.msra.mxu0 %v2013
    %3326 = vmatpush.msra.mxu0 %v2009
    %3327 = vmatpush.msra.mxu0 %v2005
    %3328 = vmatpush.msra.mxu0 %v2001
    %3329 = vmatpush.msra.mxu0 %v1997
    %3330 = vmatpush.msra.mxu0 %v1993
    %3331 = vmatpush.msra.mxu0 %v1989
    %3332 = vmatpush.msra.mxu0 %v1985
    %3333 = vmatmul.f32.gmra.mxu0 %v1832
    %v3334 = vpop.f32.mrf.mxu0
    %v3335 = vadd.f32 %v3306, %v3334
    %3336 = vmatmul.f32.gmra.mxu0 %v1836
    %v3337 = vpop.f32.mrf.mxu0
    %v3338 = vadd.f32 %v3309, %v3337
    %3339 = vmatmul.f32.gmra.mxu0 %v1844
    %v3340 = vpop.f32.mrf.mxu0
    %v3341 = vadd.f32 %v3312, %v3340
    %3342 = vmatmul.f32.gmra.mxu0 %v1848
    %v3343 = vpop.f32.mrf.mxu0
    %v3344 = vadd.f32 %v3315, %v3343
    %3345 = vdwg.mxu0
    %3346 = vmatpush.msra.mxu0 %v2109
    %3347 = vmatpush.msra.mxu0 %v2105
    %3348 = vmatpush.msra.mxu0 %v2101
    %3349 = vmatpush.msra.mxu0 %v2097
    %3350 = vmatpush.msra.mxu0 %v2093
    %3351 = vmatpush.msra.mxu0 %v2089
    %3352 = vmatpush.msra.mxu0 %v2085
    %3353 = vmatpush.msra.mxu0 %v2081
    %3354 = vmatpush.msra.mxu0 %v2077
    %3355 = vmatpush.msra.mxu0 %v2073
    %3356 = vmatpush.msra.mxu0 %v2069
    %3357 = vmatpush.msra.mxu0 %v2065
    %3358 = vmatpush.msra.mxu0 %v2061
    %3359 = vmatpush.msra.mxu0 %v2057
    %3360 = vmatpush.msra.mxu0 %v2053
    %3361 = vmatpush.msra.mxu0 %v2049
    %3362 = vmatmul.f32.gmra.mxu0 %v1833
    %v3363 = vpop.f32.mrf.mxu0
    %v3364 = vadd.f32 %v3335, %v3363
    %3365 = vmatmul.f32.gmra.mxu0 %v1837
    %v3366 = vpop.f32.mrf.mxu0
    %v3367 = vadd.f32 %v3338, %v3366
    %3368 = vmatmul.f32.gmra.mxu0 %v1845
    %v3369 = vpop.f32.mrf.mxu0
    %v3370 = vadd.f32 %v3341, %v3369
    %3371 = vmatmul.f32.gmra.mxu0 %v1849
    %v3372 = vpop.f32.mrf.mxu0
    %v3373 = vadd.f32 %v3344, %v3372
    %3374 = vdwg.mxu0
    %v3375 = vrot.slane %v1830, 2
    %v3376 = vrot.slane %v1834, 2
    %v3377 = vsel %vm654, %v3375, %v3376
    %v3378 = vrot.slane %v1831, 2
    %v3379 = vrot.slane %v1835, 2
    %v3380 = vsel %vm654, %v3378, %v3379
    %v3381 = vrot.slane %v1832, 2
    %v3382 = vrot.slane %v1836, 2
    %v3383 = vsel %vm654, %v3381, %v3382
    %v3384 = vrot.slane %v1833, 2
    %v3385 = vrot.slane %v1837, 2
    %v3386 = vsel %vm654, %v3384, %v3385
    %v3387 = vrot.slane %v1838, 2
    %v3388 = vsel %vm654, %v3376, %v3387
    %v3389 = vrot.slane %v1839, 2
    %v3390 = vsel %vm654, %v3379, %v3389
    %v3391 = vrot.slane %v1840, 2
    %v3392 = vsel %vm654, %v3382, %v3391
    %v3393 = vrot.slane %v1841, 2
    %v3394 = vsel %vm654, %v3385, %v3393
    %v3395 = vrot.slane %v1842, 2
    %v3396 = vrot.slane %v1846, 2
    %v3397 = vsel %vm654, %v3395, %v3396
    %v3398 = vrot.slane %v1843, 2
    %v3399 = vrot.slane %v1847, 2
    %v3400 = vsel %vm654, %v3398, %v3399
    %v3401 = vrot.slane %v1844, 2
    %v3402 = vrot.slane %v1848, 2
    %v3403 = vsel %vm654, %v3401, %v3402
    %v3404 = vrot.slane %v1845, 2
    %v3405 = vrot.slane %v1849, 2
    %v3406 = vsel %vm654, %v3404, %v3405
    %v3407 = vrot.slane %v1850, 2
    %v3408 = vsel %vm654, %v3396, %v3407
    %v3409 = vrot.slane %v1851, 2
    %v3410 = vsel %vm654, %v3399, %v3409
    %v3411 = vrot.slane %v1852, 2
    %v3412 = vsel %vm654, %v3402, %v3411
    %v3413 = vrot.slane %v1853, 2
    %v3414 = vsel %vm654, %v3405, %v3413
    %s3431 = scalar_lea.vmem [#allocation15], 4096
    %v3432 = vld [vmem:[%s3431] sm:$0xff]
    %v3433 = vld [vmem:[%s3431 + $0x8] sm:$0xff]
    %v3434 = vld [vmem:[%s3431 + $0x10] sm:$0xff]
    %v3435 = vld [vmem:[%s3431 + $0x18] sm:$0xff]
    %v3436 = vld [vmem:[%s3431 + $0x20] sm:$0xff]
    %v3437 = vld [vmem:[%s3431 + $0x28] sm:$0xff]
    %v3438 = vld [vmem:[%s3431 + $0x30] sm:$0xff]
    %v3439 = vld [vmem:[%s3431 + $0x38] sm:$0xff]
    %v3440 = vld [vmem:[%s3431 + $0x40] sm:$0xff]
    %v3441 = vld [vmem:[%s3431 + $0x48] sm:$0xff]
    %v3442 = vld [vmem:[%s3431 + $0x50] sm:$0xff]
    %v3443 = vld [vmem:[%s3431 + $0x58] sm:$0xff]
    %v3444 = vld [vmem:[%s3431 + $0x60] sm:$0xff]
    %v3445 = vld [vmem:[%s3431 + $0x68] sm:$0xff]
    %v3446 = vld [vmem:[%s3431 + $0x70] sm:$0xff]
    %v3447 = vld [vmem:[%s3431 + $0x78] sm:$0xff]
    %v3448 = vld [vmem:[%s3431 + $0x80] sm:$0xff]
    %v3449 = vld [vmem:[%s3431 + $0x88] sm:$0xff]
    %v3450 = vld [vmem:[%s3431 + $0x90] sm:$0xff]
    %v3451 = vld [vmem:[%s3431 + $0x98] sm:$0xff]
    %v3452 = vld [vmem:[%s3431 + $0xa0] sm:$0xff]
    %v3453 = vld [vmem:[%s3431 + $0xa8] sm:$0xff]
    %v3454 = vld [vmem:[%s3431 + $0xb0] sm:$0xff]
    %v3455 = vld [vmem:[%s3431 + $0xb8] sm:$0xff]
    %v3456 = vld [vmem:[%s3431 + $0xc0] sm:$0xff]
    %v3457 = vld [vmem:[%s3431 + $0xc8] sm:$0xff]
    %v3458 = vld [vmem:[%s3431 + $0xd0] sm:$0xff]
    %v3459 = vld [vmem:[%s3431 + $0xd8] sm:$0xff]
    %v3460 = vld [vmem:[%s3431 + $0xe0] sm:$0xff]
    %v3461 = vld [vmem:[%s3431 + $0xe8] sm:$0xff]
    %v3462 = vld [vmem:[%s3431 + $0xf0] sm:$0xff]
    %v3463 = vld [vmem:[%s3431 + $0xf8] sm:$0xff]
    %v3464 = vld [vmem:[%s3431 + $0x100] sm:$0xff]
    %v3465 = vld [vmem:[%s3431 + $0x108] sm:$0xff]
    %v3466 = vld [vmem:[%s3431 + $0x110] sm:$0xff]
    %v3467 = vld [vmem:[%s3431 + $0x118] sm:$0xff]
    %v3468 = vld [vmem:[%s3431 + $0x120] sm:$0xff]
    %v3469 = vld [vmem:[%s3431 + $0x128] sm:$0xff]
    %v3470 = vld [vmem:[%s3431 + $0x130] sm:$0xff]
    %v3471 = vld [vmem:[%s3431 + $0x138] sm:$0xff]
    %v3472 = vld [vmem:[%s3431 + $0x140] sm:$0xff]
    %v3473 = vld [vmem:[%s3431 + $0x148] sm:$0xff]
    %v3474 = vld [vmem:[%s3431 + $0x150] sm:$0xff]
    %v3475 = vld [vmem:[%s3431 + $0x158] sm:$0xff]
    %v3476 = vld [vmem:[%s3431 + $0x160] sm:$0xff]
    %v3477 = vld [vmem:[%s3431 + $0x168] sm:$0xff]
    %v3478 = vld [vmem:[%s3431 + $0x170] sm:$0xff]
    %v3479 = vld [vmem:[%s3431 + $0x178] sm:$0xff]
    %v3480 = vld [vmem:[%s3431 + $0x180] sm:$0xff]
    %v3481 = vld [vmem:[%s3431 + $0x188] sm:$0xff]
    %v3482 = vld [vmem:[%s3431 + $0x190] sm:$0xff]
    %v3483 = vld [vmem:[%s3431 + $0x198] sm:$0xff]
    %v3484 = vld [vmem:[%s3431 + $0x1a0] sm:$0xff]
    %v3485 = vld [vmem:[%s3431 + $0x1a8] sm:$0xff]
    %v3486 = vld [vmem:[%s3431 + $0x1b0] sm:$0xff]
    %v3487 = vld [vmem:[%s3431 + $0x1b8] sm:$0xff]
    %v3488 = vld [vmem:[%s3431 + $0x1c0] sm:$0xff]
    %v3489 = vld [vmem:[%s3431 + $0x1c8] sm:$0xff]
    %v3490 = vld [vmem:[%s3431 + $0x1d0] sm:$0xff]
    %v3491 = vld [vmem:[%s3431 + $0x1d8] sm:$0xff]
    %v3492 = vld [vmem:[%s3431 + $0x1e0] sm:$0xff]
    %v3493 = vld [vmem:[%s3431 + $0x1e8] sm:$0xff]
    %v3494 = vld [vmem:[%s3431 + $0x1f0] sm:$0xff]
    %v3495 = vld [vmem:[%s3431 + $0x1f8] sm:$0xff]
    %v3496 = vld [vmem:[%s3431 + $0x200] sm:$0xff]
    %v3497 = vld [vmem:[%s3431 + $0x208] sm:$0xff]
    %v3498 = vld [vmem:[%s3431 + $0x210] sm:$0xff]
    %v3499 = vld [vmem:[%s3431 + $0x218] sm:$0xff]
    %v3500 = vld [vmem:[%s3431 + $0x220] sm:$0xff]
    %v3501 = vld [vmem:[%s3431 + $0x228] sm:$0xff]
    %v3502 = vld [vmem:[%s3431 + $0x230] sm:$0xff]
    %v3503 = vld [vmem:[%s3431 + $0x238] sm:$0xff]
    %v3504 = vld [vmem:[%s3431 + $0x240] sm:$0xff]
    %v3505 = vld [vmem:[%s3431 + $0x248] sm:$0xff]
    %v3506 = vld [vmem:[%s3431 + $0x250] sm:$0xff]
    %v3507 = vld [vmem:[%s3431 + $0x258] sm:$0xff]
    %v3508 = vld [vmem:[%s3431 + $0x260] sm:$0xff]
    %v3509 = vld [vmem:[%s3431 + $0x268] sm:$0xff]
    %v3510 = vld [vmem:[%s3431 + $0x270] sm:$0xff]
    %v3511 = vld [vmem:[%s3431 + $0x278] sm:$0xff]
    %v3512 = vld [vmem:[%s3431 + $0x280] sm:$0xff]
    %v3513 = vld [vmem:[%s3431 + $0x288] sm:$0xff]
    %v3514 = vld [vmem:[%s3431 + $0x290] sm:$0xff]
    %v3515 = vld [vmem:[%s3431 + $0x298] sm:$0xff]
    %v3516 = vld [vmem:[%s3431 + $0x2a0] sm:$0xff]
    %v3517 = vld [vmem:[%s3431 + $0x2a8] sm:$0xff]
    %v3518 = vld [vmem:[%s3431 + $0x2b0] sm:$0xff]
    %v3519 = vld [vmem:[%s3431 + $0x2b8] sm:$0xff]
    %v3520 = vld [vmem:[%s3431 + $0x2c0] sm:$0xff]
    %v3521 = vld [vmem:[%s3431 + $0x2c8] sm:$0xff]
    %v3522 = vld [vmem:[%s3431 + $0x2d0] sm:$0xff]
    %v3523 = vld [vmem:[%s3431 + $0x2d8] sm:$0xff]
    %v3524 = vld [vmem:[%s3431 + $0x2e0] sm:$0xff]
    %v3525 = vld [vmem:[%s3431 + $0x2e8] sm:$0xff]
    %v3526 = vld [vmem:[%s3431 + $0x2f0] sm:$0xff]
    %v3527 = vld [vmem:[%s3431 + $0x2f8] sm:$0xff]
    %v3528 = vld [vmem:[%s3431 + $0x300] sm:$0xff]
    %v3529 = vld [vmem:[%s3431 + $0x308] sm:$0xff]
    %v3530 = vld [vmem:[%s3431 + $0x310] sm:$0xff]
    %v3531 = vld [vmem:[%s3431 + $0x318] sm:$0xff]
    %v3532 = vld [vmem:[%s3431 + $0x320] sm:$0xff]
    %v3533 = vld [vmem:[%s3431 + $0x328] sm:$0xff]
    %v3534 = vld [vmem:[%s3431 + $0x330] sm:$0xff]
    %v3535 = vld [vmem:[%s3431 + $0x338] sm:$0xff]
    %v3536 = vld [vmem:[%s3431 + $0x340] sm:$0xff]
    %v3537 = vld [vmem:[%s3431 + $0x348] sm:$0xff]
    %v3538 = vld [vmem:[%s3431 + $0x350] sm:$0xff]
    %v3539 = vld [vmem:[%s3431 + $0x358] sm:$0xff]
    %v3540 = vld [vmem:[%s3431 + $0x360] sm:$0xff]
    %v3541 = vld [vmem:[%s3431 + $0x368] sm:$0xff]
    %v3542 = vld [vmem:[%s3431 + $0x370] sm:$0xff]
    %v3543 = vld [vmem:[%s3431 + $0x378] sm:$0xff]
    %v3544 = vld [vmem:[%s3431 + $0x380] sm:$0xff]
    %v3545 = vld [vmem:[%s3431 + $0x388] sm:$0xff]
    %v3546 = vld [vmem:[%s3431 + $0x390] sm:$0xff]
    %v3547 = vld [vmem:[%s3431 + $0x398] sm:$0xff]
    %v3548 = vld [vmem:[%s3431 + $0x3a0] sm:$0xff]
    %v3549 = vld [vmem:[%s3431 + $0x3a8] sm:$0xff]
    %v3550 = vld [vmem:[%s3431 + $0x3b0] sm:$0xff]
    %v3551 = vld [vmem:[%s3431 + $0x3b8] sm:$0xff]
    %v3552 = vld [vmem:[%s3431 + $0x3c0] sm:$0xff]
    %v3553 = vld [vmem:[%s3431 + $0x3c8] sm:$0xff]
    %v3554 = vld [vmem:[%s3431 + $0x3d0] sm:$0xff]
    %v3555 = vld [vmem:[%s3431 + $0x3d8] sm:$0xff]
    %v3556 = vld [vmem:[%s3431 + $0x3e0] sm:$0xff]
    %v3557 = vld [vmem:[%s3431 + $0x3e8] sm:$0xff]
    %v3558 = vld [vmem:[%s3431 + $0x3f0] sm:$0xff]
    %v3559 = vld [vmem:[%s3431 + $0x3f8] sm:$0xff]
    %v3560 = vld [vmem:[%s3431 + $0x400] sm:$0xff]
    %v3561 = vld [vmem:[%s3431 + $0x408] sm:$0xff]
    %v3562 = vld [vmem:[%s3431 + $0x410] sm:$0xff]
    %v3563 = vld [vmem:[%s3431 + $0x418] sm:$0xff]
    %v3564 = vld [vmem:[%s3431 + $0x420] sm:$0xff]
    %v3565 = vld [vmem:[%s3431 + $0x428] sm:$0xff]
    %v3566 = vld [vmem:[%s3431 + $0x430] sm:$0xff]
    %v3567 = vld [vmem:[%s3431 + $0x438] sm:$0xff]
    %v3568 = vld [vmem:[%s3431 + $0x440] sm:$0xff]
    %v3569 = vld [vmem:[%s3431 + $0x448] sm:$0xff]
    %v3570 = vld [vmem:[%s3431 + $0x450] sm:$0xff]
    %v3571 = vld [vmem:[%s3431 + $0x458] sm:$0xff]
    %v3572 = vld [vmem:[%s3431 + $0x460] sm:$0xff]
    %v3573 = vld [vmem:[%s3431 + $0x468] sm:$0xff]
    %v3574 = vld [vmem:[%s3431 + $0x470] sm:$0xff]
    %v3575 = vld [vmem:[%s3431 + $0x478] sm:$0xff]
    %v3576 = vld [vmem:[%s3431 + $0x480] sm:$0xff]
    %v3577 = vld [vmem:[%s3431 + $0x488] sm:$0xff]
    %v3578 = vld [vmem:[%s3431 + $0x490] sm:$0xff]
    %v3579 = vld [vmem:[%s3431 + $0x498] sm:$0xff]
    %v3580 = vld [vmem:[%s3431 + $0x4a0] sm:$0xff]
    %v3581 = vld [vmem:[%s3431 + $0x4a8] sm:$0xff]
    %v3582 = vld [vmem:[%s3431 + $0x4b0] sm:$0xff]
    %v3583 = vld [vmem:[%s3431 + $0x4b8] sm:$0xff]
    %v3584 = vld [vmem:[%s3431 + $0x4c0] sm:$0xff]
    %v3585 = vld [vmem:[%s3431 + $0x4c8] sm:$0xff]
    %v3586 = vld [vmem:[%s3431 + $0x4d0] sm:$0xff]
    %v3587 = vld [vmem:[%s3431 + $0x4d8] sm:$0xff]
    %v3588 = vld [vmem:[%s3431 + $0x4e0] sm:$0xff]
    %v3589 = vld [vmem:[%s3431 + $0x4e8] sm:$0xff]
    %v3590 = vld [vmem:[%s3431 + $0x4f0] sm:$0xff]
    %v3591 = vld [vmem:[%s3431 + $0x4f8] sm:$0xff]
    %v3592 = vld [vmem:[%s3431 + $0x500] sm:$0xff]
    %v3593 = vld [vmem:[%s3431 + $0x508] sm:$0xff]
    %v3594 = vld [vmem:[%s3431 + $0x510] sm:$0xff]
    %v3595 = vld [vmem:[%s3431 + $0x518] sm:$0xff]
    %v3596 = vld [vmem:[%s3431 + $0x520] sm:$0xff]
    %v3597 = vld [vmem:[%s3431 + $0x528] sm:$0xff]
    %v3598 = vld [vmem:[%s3431 + $0x530] sm:$0xff]
    %v3599 = vld [vmem:[%s3431 + $0x538] sm:$0xff]
    %v3600 = vld [vmem:[%s3431 + $0x540] sm:$0xff]
    %v3601 = vld [vmem:[%s3431 + $0x548] sm:$0xff]
    %v3602 = vld [vmem:[%s3431 + $0x550] sm:$0xff]
    %v3603 = vld [vmem:[%s3431 + $0x558] sm:$0xff]
    %v3604 = vld [vmem:[%s3431 + $0x560] sm:$0xff]
    %v3605 = vld [vmem:[%s3431 + $0x568] sm:$0xff]
    %v3606 = vld [vmem:[%s3431 + $0x570] sm:$0xff]
    %v3607 = vld [vmem:[%s3431 + $0x578] sm:$0xff]
    %v3608 = vld [vmem:[%s3431 + $0x580] sm:$0xff]
    %v3609 = vld [vmem:[%s3431 + $0x588] sm:$0xff]
    %v3610 = vld [vmem:[%s3431 + $0x590] sm:$0xff]
    %v3611 = vld [vmem:[%s3431 + $0x598] sm:$0xff]
    %v3612 = vld [vmem:[%s3431 + $0x5a0] sm:$0xff]
    %v3613 = vld [vmem:[%s3431 + $0x5a8] sm:$0xff]
    %v3614 = vld [vmem:[%s3431 + $0x5b0] sm:$0xff]
    %v3615 = vld [vmem:[%s3431 + $0x5b8] sm:$0xff]
    %v3616 = vld [vmem:[%s3431 + $0x5c0] sm:$0xff]
    %v3617 = vld [vmem:[%s3431 + $0x5c8] sm:$0xff]
    %v3618 = vld [vmem:[%s3431 + $0x5d0] sm:$0xff]
    %v3619 = vld [vmem:[%s3431 + $0x5d8] sm:$0xff]
    %v3620 = vld [vmem:[%s3431 + $0x5e0] sm:$0xff]
    %v3621 = vld [vmem:[%s3431 + $0x5e8] sm:$0xff]
    %v3622 = vld [vmem:[%s3431 + $0x5f0] sm:$0xff]
    %v3623 = vld [vmem:[%s3431 + $0x5f8] sm:$0xff]
    %v3624 = vld [vmem:[%s3431 + $0x600] sm:$0xff]
    %v3625 = vld [vmem:[%s3431 + $0x608] sm:$0xff]
    %v3626 = vld [vmem:[%s3431 + $0x610] sm:$0xff]
    %v3627 = vld [vmem:[%s3431 + $0x618] sm:$0xff]
    %v3628 = vld [vmem:[%s3431 + $0x620] sm:$0xff]
    %v3629 = vld [vmem:[%s3431 + $0x628] sm:$0xff]
    %v3630 = vld [vmem:[%s3431 + $0x630] sm:$0xff]
    %v3631 = vld [vmem:[%s3431 + $0x638] sm:$0xff]
    %v3632 = vld [vmem:[%s3431 + $0x640] sm:$0xff]
    %v3633 = vld [vmem:[%s3431 + $0x648] sm:$0xff]
    %v3634 = vld [vmem:[%s3431 + $0x650] sm:$0xff]
    %v3635 = vld [vmem:[%s3431 + $0x658] sm:$0xff]
    %v3636 = vld [vmem:[%s3431 + $0x660] sm:$0xff]
    %v3637 = vld [vmem:[%s3431 + $0x668] sm:$0xff]
    %v3638 = vld [vmem:[%s3431 + $0x670] sm:$0xff]
    %v3639 = vld [vmem:[%s3431 + $0x678] sm:$0xff]
    %v3640 = vld [vmem:[%s3431 + $0x680] sm:$0xff]
    %v3641 = vld [vmem:[%s3431 + $0x688] sm:$0xff]
    %v3642 = vld [vmem:[%s3431 + $0x690] sm:$0xff]
    %v3643 = vld [vmem:[%s3431 + $0x698] sm:$0xff]
    %v3644 = vld [vmem:[%s3431 + $0x6a0] sm:$0xff]
    %v3645 = vld [vmem:[%s3431 + $0x6a8] sm:$0xff]
    %v3646 = vld [vmem:[%s3431 + $0x6b0] sm:$0xff]
    %v3647 = vld [vmem:[%s3431 + $0x6b8] sm:$0xff]
    %v3648 = vld [vmem:[%s3431 + $0x6c0] sm:$0xff]
    %v3649 = vld [vmem:[%s3431 + $0x6c8] sm:$0xff]
    %v3650 = vld [vmem:[%s3431 + $0x6d0] sm:$0xff]
    %v3651 = vld [vmem:[%s3431 + $0x6d8] sm:$0xff]
    %v3652 = vld [vmem:[%s3431 + $0x6e0] sm:$0xff]
    %v3653 = vld [vmem:[%s3431 + $0x6e8] sm:$0xff]
    %v3654 = vld [vmem:[%s3431 + $0x6f0] sm:$0xff]
    %v3655 = vld [vmem:[%s3431 + $0x6f8] sm:$0xff]
    %v3656 = vld [vmem:[%s3431 + $0x700] sm:$0xff]
    %v3657 = vld [vmem:[%s3431 + $0x708] sm:$0xff]
    %v3658 = vld [vmem:[%s3431 + $0x710] sm:$0xff]
    %v3659 = vld [vmem:[%s3431 + $0x718] sm:$0xff]
    %v3660 = vld [vmem:[%s3431 + $0x720] sm:$0xff]
    %v3661 = vld [vmem:[%s3431 + $0x728] sm:$0xff]
    %v3662 = vld [vmem:[%s3431 + $0x730] sm:$0xff]
    %v3663 = vld [vmem:[%s3431 + $0x738] sm:$0xff]
    %v3664 = vld [vmem:[%s3431 + $0x740] sm:$0xff]
    %v3665 = vld [vmem:[%s3431 + $0x748] sm:$0xff]
    %v3666 = vld [vmem:[%s3431 + $0x750] sm:$0xff]
    %v3667 = vld [vmem:[%s3431 + $0x758] sm:$0xff]
    %v3668 = vld [vmem:[%s3431 + $0x760] sm:$0xff]
    %v3669 = vld [vmem:[%s3431 + $0x768] sm:$0xff]
    %v3670 = vld [vmem:[%s3431 + $0x770] sm:$0xff]
    %v3671 = vld [vmem:[%s3431 + $0x778] sm:$0xff]
    %v3672 = vld [vmem:[%s3431 + $0x780] sm:$0xff]
    %v3673 = vld [vmem:[%s3431 + $0x788] sm:$0xff]
    %v3674 = vld [vmem:[%s3431 + $0x790] sm:$0xff]
    %v3675 = vld [vmem:[%s3431 + $0x798] sm:$0xff]
    %v3676 = vld [vmem:[%s3431 + $0x7a0] sm:$0xff]
    %v3677 = vld [vmem:[%s3431 + $0x7a8] sm:$0xff]
    %v3678 = vld [vmem:[%s3431 + $0x7b0] sm:$0xff]
    %v3679 = vld [vmem:[%s3431 + $0x7b8] sm:$0xff]
    %v3680 = vld [vmem:[%s3431 + $0x7c0] sm:$0xff]
    %v3681 = vld [vmem:[%s3431 + $0x7c8] sm:$0xff]
    %v3682 = vld [vmem:[%s3431 + $0x7d0] sm:$0xff]
    %v3683 = vld [vmem:[%s3431 + $0x7d8] sm:$0xff]
    %v3684 = vld [vmem:[%s3431 + $0x7e0] sm:$0xff]
    %v3685 = vld [vmem:[%s3431 + $0x7e8] sm:$0xff]
    %v3686 = vld [vmem:[%s3431 + $0x7f0] sm:$0xff]
    %v3687 = vld [vmem:[%s3431 + $0x7f8] sm:$0xff]
    %3688 = vmatpush.msra.mxu0 %v3492
    %3689 = vmatpush.msra.mxu0 %v3488
    %3690 = vmatpush.msra.mxu0 %v3484
    %3691 = vmatpush.msra.mxu0 %v3480
    %3692 = vmatpush.msra.mxu0 %v3476
    %3693 = vmatpush.msra.mxu0 %v3472
    %3694 = vmatpush.msra.mxu0 %v3468
    %3695 = vmatpush.msra.mxu0 %v3464
    %3696 = vmatpush.msra.mxu0 %v3460
    %3697 = vmatpush.msra.mxu0 %v3456
    %3698 = vmatpush.msra.mxu0 %v3452
    %3699 = vmatpush.msra.mxu0 %v3448
    %3700 = vmatpush.msra.mxu0 %v3444
    %3701 = vmatpush.msra.mxu0 %v3440
    %3702 = vmatpush.msra.mxu0 %v3436
    %3703 = vmatpush.msra.mxu0 %v3432
    %3704 = vmatmul.f32.gmra.mxu0 %v3377
    %v3705 = vpop.f32.mrf.mxu0
    %v3706 = vadd.f32 0.0, %v3705
    %3707 = vmatmul.f32.gmra.mxu0 %v3388
    %v3708 = vpop.f32.mrf.mxu0
    %v3709 = vadd.f32 0.0, %v3708
    %3710 = vmatmul.f32.gmra.mxu0 %v3397
    %v3711 = vpop.f32.mrf.mxu0
    %v3712 = vadd.f32 0.0, %v3711
    %3713 = vmatmul.f32.gmra.mxu0 %v3408
    %v3714 = vpop.f32.mrf.mxu0
    %v3715 = vadd.f32 0.0, %v3714
    %3716 = vdwg.mxu0
    %3717 = vmatpush.msra.mxu0 %v3556
    %3718 = vmatpush.msra.mxu0 %v3552
    %3719 = vmatpush.msra.mxu0 %v3548
    %3720 = vmatpush.msra.mxu0 %v3544
    %3721 = vmatpush.msra.mxu0 %v3540
    %3722 = vmatpush.msra.mxu0 %v3536
    %3723 = vmatpush.msra.mxu0 %v3532
    %3724 = vmatpush.msra.mxu0 %v3528
    %3725 = vmatpush.msra.mxu0 %v3524
    %3726 = vmatpush.msra.mxu0 %v3520
    %3727 = vmatpush.msra.mxu0 %v3516
    %3728 = vmatpush.msra.mxu0 %v3512
    %3729 = vmatpush.msra.mxu0 %v3508
    %3730 = vmatpush.msra.mxu0 %v3504
    %3731 = vmatpush.msra.mxu0 %v3500
    %3732 = vmatpush.msra.mxu0 %v3496
    %3733 = vmatmul.f32.gmra.mxu0 %v3380
    %v3734 = vpop.f32.mrf.mxu0
    %v3735 = vadd.f32 %v3706, %v3734
    %3736 = vmatmul.f32.gmra.mxu0 %v3390
    %v3737 = vpop.f32.mrf.mxu0
    %v3738 = vadd.f32 %v3709, %v3737
    %3739 = vmatmul.f32.gmra.mxu0 %v3400
    %v3740 = vpop.f32.mrf.mxu0
    %v3741 = vadd.f32 %v3712, %v3740
    %3742 = vmatmul.f32.gmra.mxu0 %v3410
    %v3743 = vpop.f32.mrf.mxu0
    %v3744 = vadd.f32 %v3715, %v3743
    %3745 = vdwg.mxu0
    %3746 = vmatpush.msra.mxu0 %v3620
    %3747 = vmatpush.msra.mxu0 %v3616
    %3748 = vmatpush.msra.mxu0 %v3612
    %3749 = vmatpush.msra.mxu0 %v3608
    %3750 = vmatpush.msra.mxu0 %v3604
    %3751 = vmatpush.msra.mxu0 %v3600
    %3752 = vmatpush.msra.mxu0 %v3596
    %3753 = vmatpush.msra.mxu0 %v3592
    %3754 = vmatpush.msra.mxu0 %v3588
    %3755 = vmatpush.msra.mxu0 %v3584
    %3756 = vmatpush.msra.mxu0 %v3580
    %3757 = vmatpush.msra.mxu0 %v3576
    %3758 = vmatpush.msra.mxu0 %v3572
    %3759 = vmatpush.msra.mxu0 %v3568
    %3760 = vmatpush.msra.mxu0 %v3564
    %3761 = vmatpush.msra.mxu0 %v3560
    %3762 = vmatmul.f32.gmra.mxu0 %v3383
    %v3763 = vpop.f32.mrf.mxu0
    %v3764 = vadd.f32 %v3735, %v3763
    %3765 = vmatmul.f32.gmra.mxu0 %v3392
    %v3766 = vpop.f32.mrf.mxu0
    %v3767 = vadd.f32 %v3738, %v3766
    %3768 = vmatmul.f32.gmra.mxu0 %v3403
    %v3769 = vpop.f32.mrf.mxu0
    %v3770 = vadd.f32 %v3741, %v3769
    %3771 = vmatmul.f32.gmra.mxu0 %v3412
    %v3772 = vpop.f32.mrf.mxu0
    %v3773 = vadd.f32 %v3744, %v3772
    %3774 = vdwg.mxu0
    %3775 = vmatpush.msra.mxu0 %v3684
    %3776 = vmatpush.msra.mxu0 %v3680
    %3777 = vmatpush.msra.mxu0 %v3676
    %3778 = vmatpush.msra.mxu0 %v3672
    %3779 = vmatpush.msra.mxu0 %v3668
    %3780 = vmatpush.msra.mxu0 %v3664
    %3781 = vmatpush.msra.mxu0 %v3660
    %3782 = vmatpush.msra.mxu0 %v3656
    %3783 = vmatpush.msra.mxu0 %v3652
    %3784 = vmatpush.msra.mxu0 %v3648
    %3785 = vmatpush.msra.mxu0 %v3644
    %3786 = vmatpush.msra.mxu0 %v3640
    %3787 = vmatpush.msra.mxu0 %v3636
    %3788 = vmatpush.msra.mxu0 %v3632
    %3789 = vmatpush.msra.mxu0 %v3628
    %3790 = vmatpush.msra.mxu0 %v3624
    %3791 = vmatmul.f32.gmra.mxu0 %v3386
    %v3792 = vpop.f32.mrf.mxu0
    %v3793 = vadd.f32 %v3764, %v3792
    %3794 = vmatmul.f32.gmra.mxu0 %v3394
    %v3795 = vpop.f32.mrf.mxu0
    %v3796 = vadd.f32 %v3767, %v3795
    %3797 = vmatmul.f32.gmra.mxu0 %v3406
    %v3798 = vpop.f32.mrf.mxu0
    %v3799 = vadd.f32 %v3770, %v3798
    %3800 = vmatmul.f32.gmra.mxu0 %v3414
    %v3801 = vpop.f32.mrf.mxu0
    %v3802 = vadd.f32 %v3773, %v3801
    %3803 = vdwg.mxu0
    %3804 = vmatpush.msra.mxu0 %v3493
    %3805 = vmatpush.msra.mxu0 %v3489
    %3806 = vmatpush.msra.mxu0 %v3485
    %3807 = vmatpush.msra.mxu0 %v3481
    %3808 = vmatpush.msra.mxu0 %v3477
    %3809 = vmatpush.msra.mxu0 %v3473
    %3810 = vmatpush.msra.mxu0 %v3469
    %3811 = vmatpush.msra.mxu0 %v3465
    %3812 = vmatpush.msra.mxu0 %v3461
    %3813 = vmatpush.msra.mxu0 %v3457
    %3814 = vmatpush.msra.mxu0 %v3453
    %3815 = vmatpush.msra.mxu0 %v3449
    %3816 = vmatpush.msra.mxu0 %v3445
    %3817 = vmatpush.msra.mxu0 %v3441
    %3818 = vmatpush.msra.mxu0 %v3437
    %3819 = vmatpush.msra.mxu0 %v3433
    %3820 = vmatmul.f32.gmra.mxu0 %v3377
    %v3821 = vpop.f32.mrf.mxu0
    %v3822 = vadd.f32 0.0, %v3821
    %3823 = vmatmul.f32.gmra.mxu0 %v3388
    %v3824 = vpop.f32.mrf.mxu0
    %v3825 = vadd.f32 0.0, %v3824
    %3826 = vmatmul.f32.gmra.mxu0 %v3397
    %v3827 = vpop.f32.mrf.mxu0
    %v3828 = vadd.f32 0.0, %v3827
    %3829 = vmatmul.f32.gmra.mxu0 %v3408
    %v3830 = vpop.f32.mrf.mxu0
    %v3831 = vadd.f32 0.0, %v3830
    %3832 = vdwg.mxu0
    %3833 = vmatpush.msra.mxu0 %v3557
    %3834 = vmatpush.msra.mxu0 %v3553
    %3835 = vmatpush.msra.mxu0 %v3549
    %3836 = vmatpush.msra.mxu0 %v3545
    %3837 = vmatpush.msra.mxu0 %v3541
    %3838 = vmatpush.msra.mxu0 %v3537
    %3839 = vmatpush.msra.mxu0 %v3533
    %3840 = vmatpush.msra.mxu0 %v3529
    %3841 = vmatpush.msra.mxu0 %v3525
    %3842 = vmatpush.msra.mxu0 %v3521
    %3843 = vmatpush.msra.mxu0 %v3517
    %3844 = vmatpush.msra.mxu0 %v3513
    %3845 = vmatpush.msra.mxu0 %v3509
    %3846 = vmatpush.msra.mxu0 %v3505
    %3847 = vmatpush.msra.mxu0 %v3501
    %3848 = vmatpush.msra.mxu0 %v3497
    %3849 = vmatmul.f32.gmra.mxu0 %v3380
    %v3850 = vpop.f32.mrf.mxu0
    %v3851 = vadd.f32 %v3822, %v3850
    %3852 = vmatmul.f32.gmra.mxu0 %v3390
    %v3853 = vpop.f32.mrf.mxu0
    %v3854 = vadd.f32 %v3825, %v3853
    %3855 = vmatmul.f32.gmra.mxu0 %v3400
    %v3856 = vpop.f32.mrf.mxu0
    %v3857 = vadd.f32 %v3828, %v3856
    %3858 = vmatmul.f32.gmra.mxu0 %v3410
    %v3859 = vpop.f32.mrf.mxu0
    %v3860 = vadd.f32 %v3831, %v3859
    %3861 = vdwg.mxu0
    %3862 = vmatpush.msra.mxu0 %v3621
    %3863 = vmatpush.msra.mxu0 %v3617
    %3864 = vmatpush.msra.mxu0 %v3613
    %3865 = vmatpush.msra.mxu0 %v3609
    %3866 = vmatpush.msra.mxu0 %v3605
    %3867 = vmatpush.msra.mxu0 %v3601
    %3868 = vmatpush.msra.mxu0 %v3597
    %3869 = vmatpush.msra.mxu0 %v3593
    %3870 = vmatpush.msra.mxu0 %v3589
    %3871 = vmatpush.msra.mxu0 %v3585
    %3872 = vmatpush.msra.mxu0 %v3581
    %3873 = vmatpush.msra.mxu0 %v3577
    %3874 = vmatpush.msra.mxu0 %v3573
    %3875 = vmatpush.msra.mxu0 %v3569
    %3876 = vmatpush.msra.mxu0 %v3565
    %3877 = vmatpush.msra.mxu0 %v3561
    %3878 = vmatmul.f32.gmra.mxu0 %v3383
    %v3879 = vpop.f32.mrf.mxu0
    %v3880 = vadd.f32 %v3851, %v3879
    %3881 = vmatmul.f32.gmra.mxu0 %v3392
    %v3882 = vpop.f32.mrf.mxu0
    %v3883 = vadd.f32 %v3854, %v3882
    %3884 = vmatmul.f32.gmra.mxu0 %v3403
    %v3885 = vpop.f32.mrf.mxu0
    %v3886 = vadd.f32 %v3857, %v3885
    %3887 = vmatmul.f32.gmra.mxu0 %v3412
    %v3888 = vpop.f32.mrf.mxu0
    %v3889 = vadd.f32 %v3860, %v3888
    %3890 = vdwg.mxu0
    %3891 = vmatpush.msra.mxu0 %v3685
    %3892 = vmatpush.msra.mxu0 %v3681
    %3893 = vmatpush.msra.mxu0 %v3677
    %3894 = vmatpush.msra.mxu0 %v3673
    %3895 = vmatpush.msra.mxu0 %v3669
    %3896 = vmatpush.msra.mxu0 %v3665
    %3897 = vmatpush.msra.mxu0 %v3661
    %3898 = vmatpush.msra.mxu0 %v3657
    %3899 = vmatpush.msra.mxu0 %v3653
    %3900 = vmatpush.msra.mxu0 %v3649
    %3901 = vmatpush.msra.mxu0 %v3645
    %3902 = vmatpush.msra.mxu0 %v3641
    %3903 = vmatpush.msra.mxu0 %v3637
    %3904 = vmatpush.msra.mxu0 %v3633
    %3905 = vmatpush.msra.mxu0 %v3629
    %3906 = vmatpush.msra.mxu0 %v3625
    %3907 = vmatmul.f32.gmra.mxu0 %v3386
    %v3908 = vpop.f32.mrf.mxu0
    %v3909 = vadd.f32 %v3880, %v3908
    %3910 = vmatmul.f32.gmra.mxu0 %v3394
    %v3911 = vpop.f32.mrf.mxu0
    %v3912 = vadd.f32 %v3883, %v3911
    %3913 = vmatmul.f32.gmra.mxu0 %v3406
    %v3914 = vpop.f32.mrf.mxu0
    %v3915 = vadd.f32 %v3886, %v3914
    %3916 = vmatmul.f32.gmra.mxu0 %v3414
    %v3917 = vpop.f32.mrf.mxu0
    %v3918 = vadd.f32 %v3889, %v3917
    %3919 = vdwg.mxu0
    %3920 = vmatpush.msra.mxu0 %v3494
    %3921 = vmatpush.msra.mxu0 %v3490
    %3922 = vmatpush.msra.mxu0 %v3486
    %3923 = vmatpush.msra.mxu0 %v3482
    %3924 = vmatpush.msra.mxu0 %v3478
    %3925 = vmatpush.msra.mxu0 %v3474
    %3926 = vmatpush.msra.mxu0 %v3470
    %3927 = vmatpush.msra.mxu0 %v3466
    %3928 = vmatpush.msra.mxu0 %v3462
    %3929 = vmatpush.msra.mxu0 %v3458
    %3930 = vmatpush.msra.mxu0 %v3454
    %3931 = vmatpush.msra.mxu0 %v3450
    %3932 = vmatpush.msra.mxu0 %v3446
    %3933 = vmatpush.msra.mxu0 %v3442
    %3934 = vmatpush.msra.mxu0 %v3438
    %3935 = vmatpush.msra.mxu0 %v3434
    %3936 = vmatmul.f32.gmra.mxu0 %v3377
    %v3937 = vpop.f32.mrf.mxu0
    %v3938 = vadd.f32 0.0, %v3937
    %3939 = vmatmul.f32.gmra.mxu0 %v3388
    %v3940 = vpop.f32.mrf.mxu0
    %v3941 = vadd.f32 0.0, %v3940
    %3942 = vmatmul.f32.gmra.mxu0 %v3397
    %v3943 = vpop.f32.mrf.mxu0
    %v3944 = vadd.f32 0.0, %v3943
    %3945 = vmatmul.f32.gmra.mxu0 %v3408
    %v3946 = vpop.f32.mrf.mxu0
    %v3947 = vadd.f32 0.0, %v3946
    %3948 = vdwg.mxu0
    %3949 = vmatpush.msra.mxu0 %v3558
    %3950 = vmatpush.msra.mxu0 %v3554
    %3951 = vmatpush.msra.mxu0 %v3550
    %3952 = vmatpush.msra.mxu0 %v3546
    %3953 = vmatpush.msra.mxu0 %v3542
    %3954 = vmatpush.msra.mxu0 %v3538
    %3955 = vmatpush.msra.mxu0 %v3534
    %3956 = vmatpush.msra.mxu0 %v3530
    %3957 = vmatpush.msra.mxu0 %v3526
    %3958 = vmatpush.msra.mxu0 %v3522
    %3959 = vmatpush.msra.mxu0 %v3518
    %3960 = vmatpush.msra.mxu0 %v3514
    %3961 = vmatpush.msra.mxu0 %v3510
    %3962 = vmatpush.msra.mxu0 %v3506
    %3963 = vmatpush.msra.mxu0 %v3502
    %3964 = vmatpush.msra.mxu0 %v3498
    %3965 = vmatmul.f32.gmra.mxu0 %v3380
    %v3966 = vpop.f32.mrf.mxu0
    %v3967 = vadd.f32 %v3938, %v3966
    %3968 = vmatmul.f32.gmra.mxu0 %v3390
    %v3969 = vpop.f32.mrf.mxu0
    %v3970 = vadd.f32 %v3941, %v3969
    %3971 = vmatmul.f32.gmra.mxu0 %v3400
    %v3972 = vpop.f32.mrf.mxu0
    %v3973 = vadd.f32 %v3944, %v3972
    %3974 = vmatmul.f32.gmra.mxu0 %v3410
    %v3975 = vpop.f32.mrf.mxu0
    %v3976 = vadd.f32 %v3947, %v3975
    %3977 = vdwg.mxu0
    %3978 = vmatpush.msra.mxu0 %v3622
    %3979 = vmatpush.msra.mxu0 %v3618
    %3980 = vmatpush.msra.mxu0 %v3614
    %3981 = vmatpush.msra.mxu0 %v3610
    %3982 = vmatpush.msra.mxu0 %v3606
    %3983 = vmatpush.msra.mxu0 %v3602
    %3984 = vmatpush.msra.mxu0 %v3598
    %3985 = vmatpush.msra.mxu0 %v3594
    %3986 = vmatpush.msra.mxu0 %v3590
    %3987 = vmatpush.msra.mxu0 %v3586
    %3988 = vmatpush.msra.mxu0 %v3582
    %3989 = vmatpush.msra.mxu0 %v3578
    %3990 = vmatpush.msra.mxu0 %v3574
    %3991 = vmatpush.msra.mxu0 %v3570
    %3992 = vmatpush.msra.mxu0 %v3566
    %3993 = vmatpush.msra.mxu0 %v3562
    %3994 = vmatmul.f32.gmra.mxu0 %v3383
    %v3995 = vpop.f32.mrf.mxu0
    %v3996 = vadd.f32 %v3967, %v3995
    %3997 = vmatmul.f32.gmra.mxu0 %v3392
    %v3998 = vpop.f32.mrf.mxu0
    %v3999 = vadd.f32 %v3970, %v3998
    %4000 = vmatmul.f32.gmra.mxu0 %v3403
    %v4001 = vpop.f32.mrf.mxu0
    %v4002 = vadd.f32 %v3973, %v4001
    %4003 = vmatmul.f32.gmra.mxu0 %v3412
    %v4004 = vpop.f32.mrf.mxu0
    %v4005 = vadd.f32 %v3976, %v4004
    %4006 = vdwg.mxu0
    %4007 = vmatpush.msra.mxu0 %v3686
    %4008 = vmatpush.msra.mxu0 %v3682
    %4009 = vmatpush.msra.mxu0 %v3678
    %4010 = vmatpush.msra.mxu0 %v3674
    %4011 = vmatpush.msra.mxu0 %v3670
    %4012 = vmatpush.msra.mxu0 %v3666
    %4013 = vmatpush.msra.mxu0 %v3662
    %4014 = vmatpush.msra.mxu0 %v3658
    %4015 = vmatpush.msra.mxu0 %v3654
    %4016 = vmatpush.msra.mxu0 %v3650
    %4017 = vmatpush.msra.mxu0 %v3646
    %4018 = vmatpush.msra.mxu0 %v3642
    %4019 = vmatpush.msra.mxu0 %v3638
    %4020 = vmatpush.msra.mxu0 %v3634
    %4021 = vmatpush.msra.mxu0 %v3630
    %4022 = vmatpush.msra.mxu0 %v3626
    %4023 = vmatmul.f32.gmra.mxu0 %v3386
    %v4024 = vpop.f32.mrf.mxu0
    %v4025 = vadd.f32 %v3996, %v4024
    %4026 = vmatmul.f32.gmra.mxu0 %v3394
    %v4027 = vpop.f32.mrf.mxu0
    %v4028 = vadd.f32 %v3999, %v4027
    %4029 = vmatmul.f32.gmra.mxu0 %v3406
    %v4030 = vpop.f32.mrf.mxu0
    %v4031 = vadd.f32 %v4002, %v4030
    %4032 = vmatmul.f32.gmra.mxu0 %v3414
    %v4033 = vpop.f32.mrf.mxu0
    %v4034 = vadd.f32 %v4005, %v4033
    %4035 = vdwg.mxu0
    %4036 = vmatpush.msra.mxu0 %v3495
    %4037 = vmatpush.msra.mxu0 %v3491
    %4038 = vmatpush.msra.mxu0 %v3487
    %4039 = vmatpush.msra.mxu0 %v3483
    %4040 = vmatpush.msra.mxu0 %v3479
    %4041 = vmatpush.msra.mxu0 %v3475
    %4042 = vmatpush.msra.mxu0 %v3471
    %4043 = vmatpush.msra.mxu0 %v3467
    %4044 = vmatpush.msra.mxu0 %v3463
    %4045 = vmatpush.msra.mxu0 %v3459
    %4046 = vmatpush.msra.mxu0 %v3455
    %4047 = vmatpush.msra.mxu0 %v3451
    %4048 = vmatpush.msra.mxu0 %v3447
    %4049 = vmatpush.msra.mxu0 %v3443
    %4050 = vmatpush.msra.mxu0 %v3439
    %4051 = vmatpush.msra.mxu0 %v3435
    %4052 = vmatmul.f32.gmra.mxu0 %v3377
    %v4053 = vpop.f32.mrf.mxu0
    %v4054 = vadd.f32 0.0, %v4053
    %4055 = vmatmul.f32.gmra.mxu0 %v3388
    %v4056 = vpop.f32.mrf.mxu0
    %v4057 = vadd.f32 0.0, %v4056
    %4058 = vmatmul.f32.gmra.mxu0 %v3397
    %v4059 = vpop.f32.mrf.mxu0
    %v4060 = vadd.f32 0.0, %v4059
    %4061 = vmatmul.f32.gmra.mxu0 %v3408
    %v4062 = vpop.f32.mrf.mxu0
    %v4063 = vadd.f32 0.0, %v4062
    %4064 = vdwg.mxu0
    %4065 = vmatpush.msra.mxu0 %v3559
    %4066 = vmatpush.msra.mxu0 %v3555
    %4067 = vmatpush.msra.mxu0 %v3551
    %4068 = vmatpush.msra.mxu0 %v3547
    %4069 = vmatpush.msra.mxu0 %v3543
    %4070 = vmatpush.msra.mxu0 %v3539
    %4071 = vmatpush.msra.mxu0 %v3535
    %4072 = vmatpush.msra.mxu0 %v3531
    %4073 = vmatpush.msra.mxu0 %v3527
    %4074 = vmatpush.msra.mxu0 %v3523
    %4075 = vmatpush.msra.mxu0 %v3519
    %4076 = vmatpush.msra.mxu0 %v3515
    %4077 = vmatpush.msra.mxu0 %v3511
    %4078 = vmatpush.msra.mxu0 %v3507
    %4079 = vmatpush.msra.mxu0 %v3503
    %4080 = vmatpush.msra.mxu0 %v3499
    %4081 = vmatmul.f32.gmra.mxu0 %v3380
    %v4082 = vpop.f32.mrf.mxu0
    %v4083 = vadd.f32 %v4054, %v4082
    %4084 = vmatmul.f32.gmra.mxu0 %v3390
    %v4085 = vpop.f32.mrf.mxu0
    %v4086 = vadd.f32 %v4057, %v4085
    %4087 = vmatmul.f32.gmra.mxu0 %v3400
    %v4088 = vpop.f32.mrf.mxu0
    %v4089 = vadd.f32 %v4060, %v4088
    %4090 = vmatmul.f32.gmra.mxu0 %v3410
    %v4091 = vpop.f32.mrf.mxu0
    %v4092 = vadd.f32 %v4063, %v4091
    %4093 = vdwg.mxu0
    %4094 = vmatpush.msra.mxu0 %v3623
    %4095 = vmatpush.msra.mxu0 %v3619
    %4096 = vmatpush.msra.mxu0 %v3615
    %4097 = vmatpush.msra.mxu0 %v3611
    %4098 = vmatpush.msra.mxu0 %v3607
    %4099 = vmatpush.msra.mxu0 %v3603
    %4100 = vmatpush.msra.mxu0 %v3599
    %4101 = vmatpush.msra.mxu0 %v3595
    %4102 = vmatpush.msra.mxu0 %v3591
    %4103 = vmatpush.msra.mxu0 %v3587
    %4104 = vmatpush.msra.mxu0 %v3583
    %4105 = vmatpush.msra.mxu0 %v3579
    %4106 = vmatpush.msra.mxu0 %v3575
    %4107 = vmatpush.msra.mxu0 %v3571
    %4108 = vmatpush.msra.mxu0 %v3567
    %4109 = vmatpush.msra.mxu0 %v3563
    %4110 = vmatmul.f32.gmra.mxu0 %v3383
    %v4111 = vpop.f32.mrf.mxu0
    %v4112 = vadd.f32 %v4083, %v4111
    %4113 = vmatmul.f32.gmra.mxu0 %v3392
    %v4114 = vpop.f32.mrf.mxu0
    %v4115 = vadd.f32 %v4086, %v4114
    %4116 = vmatmul.f32.gmra.mxu0 %v3403
    %v4117 = vpop.f32.mrf.mxu0
    %v4118 = vadd.f32 %v4089, %v4117
    %4119 = vmatmul.f32.gmra.mxu0 %v3412
    %v4120 = vpop.f32.mrf.mxu0
    %v4121 = vadd.f32 %v4092, %v4120
    %4122 = vdwg.mxu0
    %4123 = vmatpush.msra.mxu0 %v3687
    %4124 = vmatpush.msra.mxu0 %v3683
    %4125 = vmatpush.msra.mxu0 %v3679
    %4126 = vmatpush.msra.mxu0 %v3675
    %4127 = vmatpush.msra.mxu0 %v3671
    %4128 = vmatpush.msra.mxu0 %v3667
    %4129 = vmatpush.msra.mxu0 %v3663
    %4130 = vmatpush.msra.mxu0 %v3659
    %4131 = vmatpush.msra.mxu0 %v3655
    %4132 = vmatpush.msra.mxu0 %v3651
    %4133 = vmatpush.msra.mxu0 %v3647
    %4134 = vmatpush.msra.mxu0 %v3643
    %4135 = vmatpush.msra.mxu0 %v3639
    %4136 = vmatpush.msra.mxu0 %v3635
    %4137 = vmatpush.msra.mxu0 %v3631
    %4138 = vmatpush.msra.mxu0 %v3627
    %4139 = vmatmul.f32.gmra.mxu0 %v3386
    %v4140 = vpop.f32.mrf.mxu0
    %v4141 = vadd.f32 %v4112, %v4140
    %4142 = vmatmul.f32.gmra.mxu0 %v3394
    %v4143 = vpop.f32.mrf.mxu0
    %v4144 = vadd.f32 %v4115, %v4143
    %4145 = vmatmul.f32.gmra.mxu0 %v3406
    %v4146 = vpop.f32.mrf.mxu0
    %v4147 = vadd.f32 %v4118, %v4146
    %4148 = vmatmul.f32.gmra.mxu0 %v3414
    %v4149 = vpop.f32.mrf.mxu0
    %v4150 = vadd.f32 %v4121, %v4149
    %4151 = vdwg.mxu0
    %v4152 = vadd.f32 %v3016, %v3793
    %v4153 = vadd.f32 %v3132, %v3909
    %v4154 = vadd.f32 %v3248, %v4025
    %v4155 = vadd.f32 %v3364, %v4141
    %v4156 = vadd.f32 %v3019, %v3796
    %v4157 = vadd.f32 %v3135, %v3912
    %v4158 = vadd.f32 %v3251, %v4028
    %v4159 = vadd.f32 %v3367, %v4144
    %v4160 = vadd.f32 %v3022, %v3799
    %v4161 = vadd.f32 %v3138, %v3915
    %v4162 = vadd.f32 %v3254, %v4031
    %v4163 = vadd.f32 %v3370, %v4147
    %v4164 = vadd.f32 %v3025, %v3802
    %v4165 = vadd.f32 %v3141, %v3918
    %v4166 = vadd.f32 %v3257, %v4034
    %v4167 = vadd.f32 %v3373, %v4150
    %v4168 = vld [vmem:[#allocation16] sm:$0xf]
    %v4170 = vperm.slane %v4168, 0
    %v4171 = vperm.slane %v4168, 1
    %v4172 = vperm.slane %v4168, 2
    %v4173 = vperm.slane %v4168, 3
    %v4178 = vadd.f32 %v4152, %v4170
    %v4179 = vadd.f32 %v4153, %v4171
    %v4180 = vadd.f32 %v4154, %v4172
    %v4181 = vadd.f32 %v4155, %v4173
    %v4182 = vadd.f32 %v4156, %v4170
    %v4183 = vadd.f32 %v4157, %v4171
    %v4184 = vadd.f32 %v4158, %v4172
    %v4185 = vadd.f32 %v4159, %v4173
    %v4186 = vadd.f32 %v4160, %v4170
    %v4187 = vadd.f32 %v4161, %v4171
    %v4188 = vadd.f32 %v4162, %v4172
    %v4189 = vadd.f32 %v4163, %v4173
    %v4190 = vadd.f32 %v4164, %v4170
    %v4191 = vadd.f32 %v4165, %v4171
    %v4192 = vadd.f32 %v4166, %v4172
    %v4193 = vadd.f32 %v4167, %v4173
    %v4194 = vadd.f32 %v4178, %v4182
    %v4195 = vadd.f32 %v4194, %v4186
    %v4196 = vadd.f32 %v4195, %v4190
    %v4197 = vrot.slane %v4196, 4
    %v4198 = vadd.f32 %v4196, %v4197
    %v4199 = vrot.slane %v4198, 2
    %v4200 = vadd.f32 %v4198, %v4199
    %v4201 = vrot.slane %v4200, 1
    %v4202 = vadd.f32 %v4200, %v4201
    %v4203 = vadd.f32 %v4179, %v4183
    %v4204 = vadd.f32 %v4203, %v4187
    %v4205 = vadd.f32 %v4204, %v4191
    %v4206 = vrot.slane %v4205, 4
    %v4207 = vadd.f32 %v4205, %v4206
    %v4208 = vrot.slane %v4207, 2
    %v4209 = vadd.f32 %v4207, %v4208
    %v4210 = vrot.slane %v4209, 1
    %v4211 = vadd.f32 %v4209, %v4210
    %v4212 = vadd.f32 %v4180, %v4184
    %v4213 = vadd.f32 %v4212, %v4188
    %v4214 = vadd.f32 %v4213, %v4192
    %v4215 = vrot.slane %v4214, 4
    %v4216 = vadd.f32 %v4214, %v4215
    %v4217 = vrot.slane %v4216, 2
    %v4218 = vadd.f32 %v4216, %v4217
    %v4219 = vrot.slane %v4218, 1
    %v4220 = vadd.f32 %v4218, %v4219
    %v4221 = vadd.f32 %v4181, %v4185
    %v4222 = vadd.f32 %v4221, %v4189
    %v4223 = vadd.f32 %v4222, %v4193
    %v4224 = vrot.slane %v4223, 4
    %v4225 = vadd.f32 %v4223, %v4224
    %v4226 = vrot.slane %v4225, 2
    %v4227 = vadd.f32 %v4225, %v4226
    %v4228 = vrot.slane %v4227, 1
    %v4229 = vadd.f32 %v4227, %v4228
    %v4230 = vmul.f32 %v4178, %v4178
    %v4231 = vmul.f32 %v4179, %v4179
    %v4232 = vmul.f32 %v4180, %v4180
    %v4233 = vmul.f32 %v4181, %v4181
    %v4234 = vmul.f32 %v4182, %v4182
    %v4235 = vmul.f32 %v4183, %v4183
    %v4236 = vmul.f32 %v4184, %v4184
    %v4237 = vmul.f32 %v4185, %v4185
    %v4238 = vmul.f32 %v4186, %v4186
    %v4239 = vmul.f32 %v4187, %v4187
    %v4240 = vmul.f32 %v4188, %v4188
    %v4241 = vmul.f32 %v4189, %v4189
    %v4242 = vmul.f32 %v4190, %v4190
    %v4243 = vmul.f32 %v4191, %v4191
    %v4244 = vmul.f32 %v4192, %v4192
    %v4245 = vmul.f32 %v4193, %v4193
    %v4246 = vadd.f32 %v4230, %v4234
    %v4247 = vadd.f32 %v4246, %v4238
    %v4248 = vadd.f32 %v4247, %v4242
    %v4249 = vrot.slane %v4248, 4
    %v4250 = vadd.f32 %v4248, %v4249
    %v4251 = vrot.slane %v4250, 2
    %v4252 = vadd.f32 %v4250, %v4251
    %v4253 = vrot.slane %v4252, 1
    %v4254 = vadd.f32 %v4252, %v4253
    %v4255 = vadd.f32 %v4231, %v4235
    %v4256 = vadd.f32 %v4255, %v4239
    %v4257 = vadd.f32 %v4256, %v4243
    %v4258 = vrot.slane %v4257, 4
    %v4259 = vadd.f32 %v4257, %v4258
    %v4260 = vrot.slane %v4259, 2
    %v4261 = vadd.f32 %v4259, %v4260
    %v4262 = vrot.slane %v4261, 1
    %v4263 = vadd.f32 %v4261, %v4262
    %v4264 = vadd.f32 %v4232, %v4236
    %v4265 = vadd.f32 %v4264, %v4240
    %v4266 = vadd.f32 %v4265, %v4244
    %v4267 = vrot.slane %v4266, 4
    %v4268 = vadd.f32 %v4266, %v4267
    %v4269 = vrot.slane %v4268, 2
    %v4270 = vadd.f32 %v4268, %v4269
    %v4271 = vrot.slane %v4270, 1
    %v4272 = vadd.f32 %v4270, %v4271
    %v4273 = vadd.f32 %v4233, %v4237
    %v4274 = vadd.f32 %v4273, %v4241
    %v4275 = vadd.f32 %v4274, %v4245
    %v4276 = vrot.slane %v4275, 4
    %v4277 = vadd.f32 %v4275, %v4276
    %v4278 = vrot.slane %v4277, 2
    %v4279 = vadd.f32 %v4277, %v4278
    %v4280 = vrot.slane %v4279, 1
    %v4281 = vadd.f32 %v4279, %v4280
    %4282 = vmatpush.msra.mxu0 %v237
    %4283 = vmatpush.msra.mxu0 %v236
    %4284 = vmatpush.msra.mxu0 %v235
    %4285 = vmatpush.msra.mxu0 %v234
    %4286 = vmatpush.msra.mxu0 %v233
    %4287 = vmatpush.msra.mxu0 %v232
    %4288 = vmatpush.msra.mxu0 %v231
    %4289 = vmatpush.msra.mxu0 %v230
    %4290 = vmatpush.msra.mxu0 %v229
    %4291 = vmatpush.msra.mxu0 %v228
    %4292 = vmatpush.msra.mxu0 %v227
    %4293 = vmatpush.msra.mxu0 %v226
    %4294 = vmatpush.msra.mxu0 %v225
    %4295 = vmatpush.msra.mxu0 %v224
    %4296 = vmatpush.msra.mxu0 %v223
    %4297 = vmatpush.msra.mxu0 %v222
    %4298 = vmatmul.f32.gmra.mxu0 %v4202
    %v4299 = vpop.f32.mrf.mxu0
    %v4300 = vadd.f32 0.0, %v4299
    %4301 = vdwg.mxu0
    %4302 = vmatpush.msra.mxu0 %v253
    %4303 = vmatpush.msra.mxu0 %v252
    %4304 = vmatpush.msra.mxu0 %v251
    %4305 = vmatpush.msra.mxu0 %v250
    %4306 = vmatpush.msra.mxu0 %v249
    %4307 = vmatpush.msra.mxu0 %v248
    %4308 = vmatpush.msra.mxu0 %v247
    %4309 = vmatpush.msra.mxu0 %v246
    %4310 = vmatpush.msra.mxu0 %v245
    %4311 = vmatpush.msra.mxu0 %v244
    %4312 = vmatpush.msra.mxu0 %v243
    %4313 = vmatpush.msra.mxu0 %v242
    %4314 = vmatpush.msra.mxu0 %v241
    %4315 = vmatpush.msra.mxu0 %v240
    %4316 = vmatpush.msra.mxu0 %v239
    %4317 = vmatpush.msra.mxu0 %v238
    %4318 = vmatmul.f32.gmra.mxu0 %v4211
    %v4319 = vpop.f32.mrf.mxu0
    %v4320 = vadd.f32 %v4300, %v4319
    %4321 = vdwg.mxu0
    %4322 = vmatpush.msra.mxu0 %v269
    %4323 = vmatpush.msra.mxu0 %v268
    %4324 = vmatpush.msra.mxu0 %v267
    %4325 = vmatpush.msra.mxu0 %v266
    %4326 = vmatpush.msra.mxu0 %v265
    %4327 = vmatpush.msra.mxu0 %v264
    %4328 = vmatpush.msra.mxu0 %v263
    %4329 = vmatpush.msra.mxu0 %v262
    %4330 = vmatpush.msra.mxu0 %v261
    %4331 = vmatpush.msra.mxu0 %v260
    %4332 = vmatpush.msra.mxu0 %v259
    %4333 = vmatpush.msra.mxu0 %v258
    %4334 = vmatpush.msra.mxu0 %v257
    %4335 = vmatpush.msra.mxu0 %v256
    %4336 = vmatpush.msra.mxu0 %v255
    %4337 = vmatpush.msra.mxu0 %v254
    %4338 = vmatmul.f32.gmra.mxu0 %v4220
    %v4339 = vpop.f32.mrf.mxu0
    %v4340 = vadd.f32 %v4320, %v4339
    %4341 = vdwg.mxu0
    %4342 = vmatpush.msra.mxu0 %v285
    %4343 = vmatpush.msra.mxu0 %v284
    %4344 = vmatpush.msra.mxu0 %v283
    %4345 = vmatpush.msra.mxu0 %v282
    %4346 = vmatpush.msra.mxu0 %v281
    %4347 = vmatpush.msra.mxu0 %v280
    %4348 = vmatpush.msra.mxu0 %v279
    %4349 = vmatpush.msra.mxu0 %v278
    %4350 = vmatpush.msra.mxu0 %v277
    %4351 = vmatpush.msra.mxu0 %v276
    %4352 = vmatpush.msra.mxu0 %v275
    %4353 = vmatpush.msra.mxu0 %v274
    %4354 = vmatpush.msra.mxu0 %v273
    %4355 = vmatpush.msra.mxu0 %v272
    %4356 = vmatpush.msra.mxu0 %v271
    %4357 = vmatpush.msra.mxu0 %v270
    %4358 = vmatmul.f32.gmra.mxu0 %v4229
    %v4359 = vpop.f32.mrf.mxu0
    %v4360 = vadd.f32 %v4340, %v4359
    %4361 = vdwg.mxu0
    %v4362 = vmul.f32 %v4360, 0.001953125
    %4363 = vmatpush.msra.mxu0 %v237
    %4364 = vmatpush.msra.mxu0 %v236
    %4365 = vmatpush.msra.mxu0 %v235
    %4366 = vmatpush.msra.mxu0 %v234
    %4367 = vmatpush.msra.mxu0 %v233
    %4368 = vmatpush.msra.mxu0 %v232
    %4369 = vmatpush.msra.mxu0 %v231
    %4370 = vmatpush.msra.mxu0 %v230
    %4371 = vmatpush.msra.mxu0 %v229
    %4372 = vmatpush.msra.mxu0 %v228
    %4373 = vmatpush.msra.mxu0 %v227
    %4374 = vmatpush.msra.mxu0 %v226
    %4375 = vmatpush.msra.mxu0 %v225
    %4376 = vmatpush.msra.mxu0 %v224
    %4377 = vmatpush.msra.mxu0 %v223
    %4378 = vmatpush.msra.mxu0 %v222
    %4379 = vmatmul.f32.gmra.mxu0 %v4254
    %v4380 = vpop.f32.mrf.mxu0
    %v4381 = vadd.f32 0.0, %v4380
    %4382 = vdwg.mxu0
    %4383 = vmatpush.msra.mxu0 %v253
    %4384 = vmatpush.msra.mxu0 %v252
    %4385 = vmatpush.msra.mxu0 %v251
    %4386 = vmatpush.msra.mxu0 %v250
    %4387 = vmatpush.msra.mxu0 %v249
    %4388 = vmatpush.msra.mxu0 %v248
    %4389 = vmatpush.msra.mxu0 %v247
    %4390 = vmatpush.msra.mxu0 %v246
    %4391 = vmatpush.msra.mxu0 %v245
    %4392 = vmatpush.msra.mxu0 %v244
    %4393 = vmatpush.msra.mxu0 %v243
    %4394 = vmatpush.msra.mxu0 %v242
    %4395 = vmatpush.msra.mxu0 %v241
    %4396 = vmatpush.msra.mxu0 %v240
    %4397 = vmatpush.msra.mxu0 %v239
    %4398 = vmatpush.msra.mxu0 %v238
    %4399 = vmatmul.f32.gmra.mxu0 %v4263
    %v4400 = vpop.f32.mrf.mxu0
    %v4401 = vadd.f32 %v4381, %v4400
    %4402 = vdwg.mxu0
    %4403 = vmatpush.msra.mxu0 %v269
    %4404 = vmatpush.msra.mxu0 %v268
    %4405 = vmatpush.msra.mxu0 %v267
    %4406 = vmatpush.msra.mxu0 %v266
    %4407 = vmatpush.msra.mxu0 %v265
    %4408 = vmatpush.msra.mxu0 %v264
    %4409 = vmatpush.msra.mxu0 %v263
    %4410 = vmatpush.msra.mxu0 %v262
    %4411 = vmatpush.msra.mxu0 %v261
    %4412 = vmatpush.msra.mxu0 %v260
    %4413 = vmatpush.msra.mxu0 %v259
    %4414 = vmatpush.msra.mxu0 %v258
    %4415 = vmatpush.msra.mxu0 %v257
    %4416 = vmatpush.msra.mxu0 %v256
    %4417 = vmatpush.msra.mxu0 %v255
    %4418 = vmatpush.msra.mxu0 %v254
    %4419 = vmatmul.f32.gmra.mxu0 %v4272
    %v4420 = vpop.f32.mrf.mxu0
    %v4421 = vadd.f32 %v4401, %v4420
    %4422 = vdwg.mxu0
    %4423 = vmatpush.msra.mxu0 %v285
    %4424 = vmatpush.msra.mxu0 %v284
    %4425 = vmatpush.msra.mxu0 %v283
    %4426 = vmatpush.msra.mxu0 %v282
    %4427 = vmatpush.msra.mxu0 %v281
    %4428 = vmatpush.msra.mxu0 %v280
    %4429 = vmatpush.msra.mxu0 %v279
    %4430 = vmatpush.msra.mxu0 %v278
    %4431 = vmatpush.msra.mxu0 %v277
    %4432 = vmatpush.msra.mxu0 %v276
    %4433 = vmatpush.msra.mxu0 %v275
    %4434 = vmatpush.msra.mxu0 %v274
    %4435 = vmatpush.msra.mxu0 %v273
    %4436 = vmatpush.msra.mxu0 %v272
    %4437 = vmatpush.msra.mxu0 %v271
    %4438 = vmatpush.msra.mxu0 %v270
    %4439 = vmatmul.f32.gmra.mxu0 %v4281
    %v4440 = vpop.f32.mrf.mxu0
    %v4441 = vadd.f32 %v4421, %v4440
    %4442 = vdwg.mxu0
    %v4443 = vmul.f32 %v4441, 0.001953125
    %v4444 = vmul.f32 %v4362, %v4362
    %v4445 = vsub.f32 %v4443, %v4444
    %v4446 = vld [vmem:[#allocation18] sm:$0x1]
    %v4447 = vadd.f32 %v4445, 1e-05
    %v4448 = vrsqrt.pop %v4447
    %v4449 = vmul.f32 %v4448, %v4447
    %v4450 = vmul.f32 %v4449, %v4448
    %v4451 = vmul.f32 0.5, %v4450
    %v4452 = vsub.f32 1.5, %v4451
    %v4453 = vmul.f32 %v4448, %v4452
    %vm4454 = vweird.f32 %v4447
    %vm4455 = vweird.f32 %v4448
    %vm4456 = vmor %vm4454, %vm4455
    %v4457 = vsel %vm4456, %v4448, %v4453
    %v4458 = vmul.f32 %v4446, %v4457
    %v4459 = vld [vmem:[#allocation19] sm:$0x1]
    %v4460 = vmul.f32 %v4362, %v4458
    %v4461 = vsub.f32 %v4459, %v4460
    %v4463 = vsel %vm1132, %v4458, 0
    %4465 = vmatpush.msra.mxu0 0.0
    %4466 = vmatpush.msra.mxu0 0.0
    %4467 = vmatpush.msra.mxu0 0.0
    %4468 = vmatpush.msra.mxu0 0.0
    %4469 = vmatpush.msra.mxu0 0.0
    %4470 = vmatpush.msra.mxu0 0.0
    %4471 = vmatpush.msra.mxu0 0.0
    %4472 = vmatpush.msra.mxu0 0.0
    %4473 = vmatpush.msra.mxu0 0.0
    %4474 = vmatpush.msra.mxu0 0.0
    %4475 = vmatpush.msra.mxu0 0.0
    %4476 = vmatpush.msra.mxu0 0.0
    %4477 = vmatpush.msra.mxu0 %v298
    %4478 = vmatpush.msra.mxu0 %v294
    %4479 = vmatpush.msra.mxu0 %v290
    %4480 = vmatpush.msra.mxu0 %v286
    %4481 = vmatmul.f32.gmra.mxu0 %v4463
    %v4482 = vpop.f32.mrf.mxu0
    %v4483 = vadd.f32 0.0, %v4482
    %4484 = vdwg.mxu0
    %4485 = vmatpush.msra.mxu0 0.0
    %4486 = vmatpush.msra.mxu0 0.0
    %4487 = vmatpush.msra.mxu0 0.0
    %4488 = vmatpush.msra.mxu0 0.0
    %4489 = vmatpush.msra.mxu0 0.0
    %4490 = vmatpush.msra.mxu0 0.0
    %4491 = vmatpush.msra.mxu0 0.0
    %4492 = vmatpush.msra.mxu0 0.0
    %4493 = vmatpush.msra.mxu0 0.0
    %4494 = vmatpush.msra.mxu0 0.0
    %4495 = vmatpush.msra.mxu0 0.0
    %4496 = vmatpush.msra.mxu0 0.0
    %4497 = vmatpush.msra.mxu0 %v299
    %4498 = vmatpush.msra.mxu0 %v295
    %4499 = vmatpush.msra.mxu0 %v291
    %4500 = vmatpush.msra.mxu0 %v287
    %4501 = vmatmul.f32.gmra.mxu0 %v4463
    %v4502 = vpop.f32.mrf.mxu0
    %v4503 = vadd.f32 0.0, %v4502
    %4504 = vdwg.mxu0
    %4505 = vmatpush.msra.mxu0 0.0
    %4506 = vmatpush.msra.mxu0 0.0
    %4507 = vmatpush.msra.mxu0 0.0
    %4508 = vmatpush.msra.mxu0 0.0
    %4509 = vmatpush.msra.mxu0 0.0
    %4510 = vmatpush.msra.mxu0 0.0
    %4511 = vmatpush.msra.mxu0 0.0
    %4512 = vmatpush.msra.mxu0 0.0
    %4513 = vmatpush.msra.mxu0 0.0
    %4514 = vmatpush.msra.mxu0 0.0
    %4515 = vmatpush.msra.mxu0 0.0
    %4516 = vmatpush.msra.mxu0 0.0
    %4517 = vmatpush.msra.mxu0 %v300
    %4518 = vmatpush.msra.mxu0 %v296
    %4519 = vmatpush.msra.mxu0 %v292
    %4520 = vmatpush.msra.mxu0 %v288
    %4521 = vmatmul.f32.gmra.mxu0 %v4463
    %v4522 = vpop.f32.mrf.mxu0
    %v4523 = vadd.f32 0.0, %v4522
    %4524 = vdwg.mxu0
    %4525 = vmatpush.msra.mxu0 0.0
    %4526 = vmatpush.msra.mxu0 0.0
    %4527 = vmatpush.msra.mxu0 0.0
    %4528 = vmatpush.msra.mxu0 0.0
    %4529 = vmatpush.msra.mxu0 0.0
    %4530 = vmatpush.msra.mxu0 0.0
    %4531 = vmatpush.msra.mxu0 0.0
    %4532 = vmatpush.msra.mxu0 0.0
    %4533 = vmatpush.msra.mxu0 0.0
    %4534 = vmatpush.msra.mxu0 0.0
    %4535 = vmatpush.msra.mxu0 0.0
    %4536 = vmatpush.msra.mxu0 0.0
    %4537 = vmatpush.msra.mxu0 %v301
    %4538 = vmatpush.msra.mxu0 %v297
    %4539 = vmatpush.msra.mxu0 %v293
    %4540 = vmatpush.msra.mxu0 %v289
    %4541 = vmatmul.f32.gmra.mxu0 %v4463
    %v4542 = vpop.f32.mrf.mxu0
    %v4543 = vadd.f32 0.0, %v4542
    %4544 = vdwg.mxu0
    %v4546 = vsel %vm1132, %v4461, 0
    %4548 = vmatpush.msra.mxu0 0.0
    %4549 = vmatpush.msra.mxu0 0.0
    %4550 = vmatpush.msra.mxu0 0.0
    %4551 = vmatpush.msra.mxu0 0.0
    %4552 = vmatpush.msra.mxu0 0.0
    %4553 = vmatpush.msra.mxu0 0.0
    %4554 = vmatpush.msra.mxu0 0.0
    %4555 = vmatpush.msra.mxu0 0.0
    %4556 = vmatpush.msra.mxu0 0.0
    %4557 = vmatpush.msra.mxu0 0.0
    %4558 = vmatpush.msra.mxu0 0.0
    %4559 = vmatpush.msra.mxu0 0.0
    %4560 = vmatpush.msra.mxu0 %v298
    %4561 = vmatpush.msra.mxu0 %v294
    %4562 = vmatpush.msra.mxu0 %v290
    %4563 = vmatpush.msra.mxu0 %v286
    %4564 = vmatmul.f32.gmra.mxu0 %v4546
    %v4565 = vpop.f32.mrf.mxu0
    %v4566 = vadd.f32 0.0, %v4565
    %4567 = vdwg.mxu0
    %4568 = vmatpush.msra.mxu0 0.0
    %4569 = vmatpush.msra.mxu0 0.0
    %4570 = vmatpush.msra.mxu0 0.0
    %4571 = vmatpush.msra.mxu0 0.0
    %4572 = vmatpush.msra.mxu0 0.0
    %4573 = vmatpush.msra.mxu0 0.0
    %4574 = vmatpush.msra.mxu0 0.0
    %4575 = vmatpush.msra.mxu0 0.0
    %4576 = vmatpush.msra.mxu0 0.0
    %4577 = vmatpush.msra.mxu0 0.0
    %4578 = vmatpush.msra.mxu0 0.0
    %4579 = vmatpush.msra.mxu0 0.0
    %4580 = vmatpush.msra.mxu0 %v299
    %4581 = vmatpush.msra.mxu0 %v295
    %4582 = vmatpush.msra.mxu0 %v291
    %4583 = vmatpush.msra.mxu0 %v287
    %4584 = vmatmul.f32.gmra.mxu0 %v4546
    %v4585 = vpop.f32.mrf.mxu0
    %v4586 = vadd.f32 0.0, %v4585
    %4587 = vdwg.mxu0
    %4588 = vmatpush.msra.mxu0 0.0
    %4589 = vmatpush.msra.mxu0 0.0
    %4590 = vmatpush.msra.mxu0 0.0
    %4591 = vmatpush.msra.mxu0 0.0
    %4592 = vmatpush.msra.mxu0 0.0
    %4593 = vmatpush.msra.mxu0 0.0
    %4594 = vmatpush.msra.mxu0 0.0
    %4595 = vmatpush.msra.mxu0 0.0
    %4596 = vmatpush.msra.mxu0 0.0
    %4597 = vmatpush.msra.mxu0 0.0
    %4598 = vmatpush.msra.mxu0 0.0
    %4599 = vmatpush.msra.mxu0 0.0
    %4600 = vmatpush.msra.mxu0 %v300
    %4601 = vmatpush.msra.mxu0 %v296
    %4602 = vmatpush.msra.mxu0 %v292
    %4603 = vmatpush.msra.mxu0 %v288
    %4604 = vmatmul.f32.gmra.mxu0 %v4546
    %v4605 = vpop.f32.mrf.mxu0
    %v4606 = vadd.f32 0.0, %v4605
    %4607 = vdwg.mxu0
    %4608 = vmatpush.msra.mxu0 0.0
    %4609 = vmatpush.msra.mxu0 0.0
    %4610 = vmatpush.msra.mxu0 0.0
    %4611 = vmatpush.msra.mxu0 0.0
    %4612 = vmatpush.msra.mxu0 0.0
    %4613 = vmatpush.msra.mxu0 0.0
    %4614 = vmatpush.msra.mxu0 0.0
    %4615 = vmatpush.msra.mxu0 0.0
    %4616 = vmatpush.msra.mxu0 0.0
    %4617 = vmatpush.msra.mxu0 0.0
    %4618 = vmatpush.msra.mxu0 0.0
    %4619 = vmatpush.msra.mxu0 0.0
    %4620 = vmatpush.msra.mxu0 %v301
    %4621 = vmatpush.msra.mxu0 %v297
    %4622 = vmatpush.msra.mxu0 %v293
    %4623 = vmatpush.msra.mxu0 %v289
    %4624 = vmatmul.f32.gmra.mxu0 %v4546
    %v4625 = vpop.f32.mrf.mxu0
    %v4626 = vadd.f32 0.0, %v4625
    %4627 = vdwg.mxu0
    %v4628 = vperm.slane %v4483, 0
    %v4629 = vperm.slane %v4503, 0
    %v4630 = vperm.slane %v4523, 0
    %v4631 = vperm.slane %v4543, 0
    %v4632 = vmul.f32 %v4178, %v4628
    %v4633 = vmul.f32 %v4179, %v4629
    %v4634 = vmul.f32 %v4180, %v4630
    %v4635 = vmul.f32 %v4181, %v4631
    %v4636 = vmul.f32 %v4182, %v4628
    %v4637 = vmul.f32 %v4183, %v4629
    %v4638 = vmul.f32 %v4184, %v4630
    %v4639 = vmul.f32 %v4185, %v4631
    %v4640 = vmul.f32 %v4186, %v4628
    %v4641 = vmul.f32 %v4187, %v4629
    %v4642 = vmul.f32 %v4188, %v4630
    %v4643 = vmul.f32 %v4189, %v4631
    %v4644 = vmul.f32 %v4190, %v4628
    %v4645 = vmul.f32 %v4191, %v4629
    %v4646 = vmul.f32 %v4192, %v4630
    %v4647 = vmul.f32 %v4193, %v4631
    %v4648 = vperm.slane %v4566, 0
    %v4649 = vperm.slane %v4586, 0
    %v4650 = vperm.slane %v4606, 0
    %v4651 = vperm.slane %v4626, 0
    %v4652 = vadd.f32 %v4632, %v4648
    %v4653 = vadd.f32 %v4633, %v4649
    %v4654 = vadd.f32 %v4634, %v4650
    %v4655 = vadd.f32 %v4635, %v4651
    %v4656 = vadd.f32 %v4636, %v4648
    %v4657 = vadd.f32 %v4637, %v4649
    %v4658 = vadd.f32 %v4638, %v4650
    %v4659 = vadd.f32 %v4639, %v4651
    %v4660 = vadd.f32 %v4640, %v4648
    %v4661 = vadd.f32 %v4641, %v4649
    %v4662 = vadd.f32 %v4642, %v4650
    %v4663 = vadd.f32 %v4643, %v4651
    %v4664 = vadd.f32 %v4644, %v4648
    %v4665 = vadd.f32 %v4645, %v4649
    %v4666 = vadd.f32 %v4646, %v4650
    %v4667 = vadd.f32 %v4647, %v4651
    %v4668 = vmax.f32 %v4652, 0.0
    %v4669 = vmax.f32 %v4653, 0.0
    %v4670 = vmax.f32 %v4654, 0.0
    %v4671 = vmax.f32 %v4655, 0.0
    %v4672 = vmax.f32 %v4656, 0.0
    %v4673 = vmax.f32 %v4657, 0.0
    %v4674 = vmax.f32 %v4658, 0.0
    %v4675 = vmax.f32 %v4659, 0.0
    %v4676 = vmax.f32 %v4660, 0.0
    %v4677 = vmax.f32 %v4661, 0.0
    %v4678 = vmax.f32 %v4662, 0.0
    %v4679 = vmax.f32 %v4663, 0.0
    %v4680 = vmax.f32 %v4664, 0.0
    %v4681 = vmax.f32 %v4665, 0.0
    %v4682 = vmax.f32 %v4666, 0.0
    %v4683 = vmax.f32 %v4667, 0.0
    %v4684 = vadd.f32 %v4668, %v4672
    %v4685 = vrot.slane %v4684, 4
    %v4686 = vadd.f32 %v4684, %v4685
    %v4687 = vrot.slane %v4686, 2
    %v4688 = vadd.f32 %v4686, %v4687
    %v4689 = vrot.slane %v4688, 1
    %v4690 = vadd.f32 %v4688, %v4689
    %v4691 = vadd.f32 %v4669, %v4673
    %v4692 = vrot.slane %v4691, 4
    %v4693 = vadd.f32 %v4691, %v4692
    %v4694 = vrot.slane %v4693, 2
    %v4695 = vadd.f32 %v4693, %v4694
    %v4696 = vrot.slane %v4695, 1
    %v4697 = vadd.f32 %v4695, %v4696
    %v4698 = vadd.f32 %v4670, %v4674
    %v4699 = vrot.slane %v4698, 4
    %v4700 = vadd.f32 %v4698, %v4699
    %v4701 = vrot.slane %v4700, 2
    %v4702 = vadd.f32 %v4700, %v4701
    %v4703 = vrot.slane %v4702, 1
    %v4704 = vadd.f32 %v4702, %v4703
    %v4705 = vadd.f32 %v4671, %v4675
    %v4706 = vrot.slane %v4705, 4
    %v4707 = vadd.f32 %v4705, %v4706
    %v4708 = vrot.slane %v4707, 2
    %v4709 = vadd.f32 %v4707, %v4708
    %v4710 = vrot.slane %v4709, 1
    %v4711 = vadd.f32 %v4709, %v4710
    %v4712 = vadd.f32 %v4676, %v4680
    %v4713 = vrot.slane %v4712, 4
    %v4714 = vadd.f32 %v4712, %v4713
    %v4715 = vrot.slane %v4714, 2
    %v4716 = vadd.f32 %v4714, %v4715
    %v4717 = vrot.slane %v4716, 1
    %v4718 = vadd.f32 %v4716, %v4717
    %v4719 = vadd.f32 %v4677, %v4681
    %v4720 = vrot.slane %v4719, 4
    %v4721 = vadd.f32 %v4719, %v4720
    %v4722 = vrot.slane %v4721, 2
    %v4723 = vadd.f32 %v4721, %v4722
    %v4724 = vrot.slane %v4723, 1
    %v4725 = vadd.f32 %v4723, %v4724
    %v4726 = vadd.f32 %v4678, %v4682
    %v4727 = vrot.slane %v4726, 4
    %v4728 = vadd.f32 %v4726, %v4727
    %v4729 = vrot.slane %v4728, 2
    %v4730 = vadd.f32 %v4728, %v4729
    %v4731 = vrot.slane %v4730, 1
    %v4732 = vadd.f32 %v4730, %v4731
    %v4733 = vadd.f32 %v4679, %v4683
    %v4734 = vrot.slane %v4733, 4
    %v4735 = vadd.f32 %v4733, %v4734
    %v4736 = vrot.slane %v4735, 2
    %v4737 = vadd.f32 %v4735, %v4736
    %v4738 = vrot.slane %v4737, 1
    %v4739 = vadd.f32 %v4737, %v4738
    %v4748 = vsel %vm1419, %v4718, %v4690
    %v4749 = vsel %vm1419, %v4725, %v4697
    %v4750 = vsel %vm1419, %v4732, %v4704
    %v4751 = vsel %vm1419, %v4739, %v4711
    %4756 = vmatpush.msra.mxu0 %v237
    %4757 = vmatpush.msra.mxu0 %v236
    %4758 = vmatpush.msra.mxu0 %v235
    %4759 = vmatpush.msra.mxu0 %v234
    %4760 = vmatpush.msra.mxu0 %v233
    %4761 = vmatpush.msra.mxu0 %v232
    %4762 = vmatpush.msra.mxu0 %v231
    %4763 = vmatpush.msra.mxu0 %v230
    %4764 = vmatpush.msra.mxu0 %v229
    %4765 = vmatpush.msra.mxu0 %v228
    %4766 = vmatpush.msra.mxu0 %v227
    %4767 = vmatpush.msra.mxu0 %v226
    %4768 = vmatpush.msra.mxu0 %v225
    %4769 = vmatpush.msra.mxu0 %v224
    %4770 = vmatpush.msra.mxu0 %v223
    %4771 = vmatpush.msra.mxu0 %v222
    %4772 = vmatmul.f32.gmra.mxu0 %v4748
    %v4773 = vpop.f32.mrf.mxu0
    %v4774 = vadd.f32 0.0, %v4773
    %4775 = vdwg.mxu0
    %4776 = vmatpush.msra.mxu0 %v253
    %4777 = vmatpush.msra.mxu0 %v252
    %4778 = vmatpush.msra.mxu0 %v251
    %4779 = vmatpush.msra.mxu0 %v250
    %4780 = vmatpush.msra.mxu0 %v249
    %4781 = vmatpush.msra.mxu0 %v248
    %4782 = vmatpush.msra.mxu0 %v247
    %4783 = vmatpush.msra.mxu0 %v246
    %4784 = vmatpush.msra.mxu0 %v245
    %4785 = vmatpush.msra.mxu0 %v244
    %4786 = vmatpush.msra.mxu0 %v243
    %4787 = vmatpush.msra.mxu0 %v242
    %4788 = vmatpush.msra.mxu0 %v241
    %4789 = vmatpush.msra.mxu0 %v240
    %4790 = vmatpush.msra.mxu0 %v239
    %4791 = vmatpush.msra.mxu0 %v238
    %4792 = vmatmul.f32.gmra.mxu0 %v4749
    %v4793 = vpop.f32.mrf.mxu0
    %v4794 = vadd.f32 %v4774, %v4793
    %4795 = vdwg.mxu0
    %4796 = vmatpush.msra.mxu0 %v269
    %4797 = vmatpush.msra.mxu0 %v268
    %4798 = vmatpush.msra.mxu0 %v267
    %4799 = vmatpush.msra.mxu0 %v266
    %4800 = vmatpush.msra.mxu0 %v265
    %4801 = vmatpush.msra.mxu0 %v264
    %4802 = vmatpush.msra.mxu0 %v263
    %4803 = vmatpush.msra.mxu0 %v262
    %4804 = vmatpush.msra.mxu0 %v261
    %4805 = vmatpush.msra.mxu0 %v260
    %4806 = vmatpush.msra.mxu0 %v259
    %4807 = vmatpush.msra.mxu0 %v258
    %4808 = vmatpush.msra.mxu0 %v257
    %4809 = vmatpush.msra.mxu0 %v256
    %4810 = vmatpush.msra.mxu0 %v255
    %4811 = vmatpush.msra.mxu0 %v254
    %4812 = vmatmul.f32.gmra.mxu0 %v4750
    %v4813 = vpop.f32.mrf.mxu0
    %v4814 = vadd.f32 %v4794, %v4813
    %4815 = vdwg.mxu0
    %4816 = vmatpush.msra.mxu0 %v285
    %4817 = vmatpush.msra.mxu0 %v284
    %4818 = vmatpush.msra.mxu0 %v283
    %4819 = vmatpush.msra.mxu0 %v282
    %4820 = vmatpush.msra.mxu0 %v281
    %4821 = vmatpush.msra.mxu0 %v280
    %4822 = vmatpush.msra.mxu0 %v279
    %4823 = vmatpush.msra.mxu0 %v278
    %4824 = vmatpush.msra.mxu0 %v277
    %4825 = vmatpush.msra.mxu0 %v276
    %4826 = vmatpush.msra.mxu0 %v275
    %4827 = vmatpush.msra.mxu0 %v274
    %4828 = vmatpush.msra.mxu0 %v273
    %4829 = vmatpush.msra.mxu0 %v272
    %4830 = vmatpush.msra.mxu0 %v271
    %4831 = vmatpush.msra.mxu0 %v270
    %4832 = vmatmul.f32.gmra.mxu0 %v4751
    %v4833 = vpop.f32.mrf.mxu0
    %v4834 = vadd.f32 %v4814, %v4833
    %4835 = vdwg.mxu0
    %v4836 = vmul.f32 %v4834, 0.00390625
    %v4837 = vld [vmem:[%s11] sm:$0xff]
    %v4838 = vld [vmem:[%s11 + $0x8] sm:$0xff]
    %v4839 = vld [vmem:[%s11 + $0x10] sm:$0xff]
    %v4840 = vld [vmem:[%s11 + $0x18] sm:$0xff]
    %v4842 = vsel %vm1132, %v4836, 0
    %4844 = vmatpush.msra.mxu0 0.0
    %4845 = vmatpush.msra.mxu0 0.0
    %4846 = vmatpush.msra.mxu0 0.0
    %4847 = vmatpush.msra.mxu0 0.0
    %4848 = vmatpush.msra.mxu0 0.0
    %4849 = vmatpush.msra.mxu0 0.0
    %4850 = vmatpush.msra.mxu0 0.0
    %4851 = vmatpush.msra.mxu0 0.0
    %4852 = vmatpush.msra.mxu0 0.0
    %4853 = vmatpush.msra.mxu0 0.0
    %4854 = vmatpush.msra.mxu0 0.0
    %4855 = vmatpush.msra.mxu0 0.0
    %4856 = vmatpush.msra.mxu0 %v4840
    %4857 = vmatpush.msra.mxu0 %v4839
    %4858 = vmatpush.msra.mxu0 %v4838
    %4859 = vmatpush.msra.mxu0 %v4837
    %4860 = vmatmul.f32.gmra.mxu0 %v4842
    %v4861 = vpop.f32.mrf.mxu0
    %v4862 = vadd.f32 0.0, %v4861
    %4863 = vdwg.mxu0
    %v4864 = vmax.f32 %v4862, 0.0
    %v4865 = vld [vmem:[#allocation21] sm:$0x3]
    %v4867 = vsel %vm1538, %v4864, 0
    %v4870 = vsel %vm1542, %v4865, 0
    %4872 = vmatpush.msra.mxu0 0.0
    %4873 = vmatpush.msra.mxu0 0.0
    %4874 = vmatpush.msra.mxu0 0.0
    %4875 = vmatpush.msra.mxu0 0.0
    %4876 = vmatpush.msra.mxu0 0.0
    %4877 = vmatpush.msra.mxu0 0.0
    %4878 = vmatpush.msra.mxu0 0.0
    %4879 = vmatpush.msra.mxu0 0.0
    %4880 = vmatpush.msra.mxu0 0.0
    %4881 = vmatpush.msra.mxu0 0.0
    %4882 = vmatpush.msra.mxu0 0.0
    %4883 = vmatpush.msra.mxu0 0.0
    %4884 = vmatpush.msra.mxu0 0.0
    %4885 = vmatpush.msra.mxu0 0.0
    %4886 = vmatpush.msra.mxu0 0.0
    %4887 = vmatpush.msra.mxu0 %v4870
    %4888 = vmatmul.f32.gmra.mxu0 %v4867
    %v4889 = vpop.f32.mrf.mxu0
    %v4890 = vadd.f32 0.0, %v4889
    %4891 = vdwg.mxu0
    %v4892 = vxor.u32 %v4890, 2147483648
    %v4893 = vmul.f32 %v4892, 1.442695
    %v4894 = vpow.pop %v4893
    %v4895 = vadd.f32 %v4894, 1.0
    %v4896 = vrcp.pop %v4895
    %v4897 = vmul.f32 %v4895, %v4896
    %v4898 = vsub.f32 1.0, %v4897
    %v4899 = vmul.f32 %v4896, %v4898
    %v4900 = vadd.f32 %v4896, %v4899
    %vm4901 = vweird.f32 %v4895
    %vm4902 = vweird.f32 %v4896
    %vm4903 = vmor %vm4901, %vm4902
    %v4904 = vsel %vm4903, %v4896, %v4900
    %v4905 = vand.u32 2147483647, %v4895
    %vm4906 = vcmp.eq.f32.partialorder %v4905, 8.507059e+37
    %v4907 = vand.u32 %v4895, 2147483648
    %v4908 = vor.u32 1.1754944e-38, %v4907
    %v4909 = vsel %vm4906, %v4908, %v4904
    %v4910 = vmul.f32 1.0, %v4909
    %v4912 = vsel %vm1132, %v4910, 0
    %4914 = vmatpush.msra.mxu0 0.0
    %4915 = vmatpush.msra.mxu0 0.0
    %4916 = vmatpush.msra.mxu0 0.0
    %4917 = vmatpush.msra.mxu0 0.0
    %4918 = vmatpush.msra.mxu0 0.0
    %4919 = vmatpush.msra.mxu0 0.0
    %4920 = vmatpush.msra.mxu0 0.0
    %4921 = vmatpush.msra.mxu0 0.0
    %4922 = vmatpush.msra.mxu0 0.0
    %4923 = vmatpush.msra.mxu0 0.0
    %4924 = vmatpush.msra.mxu0 0.0
    %4925 = vmatpush.msra.mxu0 0.0
    %4926 = vmatpush.msra.mxu0 %v298
    %4927 = vmatpush.msra.mxu0 %v294
    %4928 = vmatpush.msra.mxu0 %v290
    %4929 = vmatpush.msra.mxu0 %v286
    %4930 = vmatmul.f32.gmra.mxu0 %v4912
    %v4931 = vpop.f32.mrf.mxu0
    %v4932 = vadd.f32 0.0, %v4931
    %4933 = vdwg.mxu0
    %4934 = vmatpush.msra.mxu0 0.0
    %4935 = vmatpush.msra.mxu0 0.0
    %4936 = vmatpush.msra.mxu0 0.0
    %4937 = vmatpush.msra.mxu0 0.0
    %4938 = vmatpush.msra.mxu0 0.0
    %4939 = vmatpush.msra.mxu0 0.0
    %4940 = vmatpush.msra.mxu0 0.0
    %4941 = vmatpush.msra.mxu0 0.0
    %4942 = vmatpush.msra.mxu0 0.0
    %4943 = vmatpush.msra.mxu0 0.0
    %4944 = vmatpush.msra.mxu0 0.0
    %4945 = vmatpush.msra.mxu0 0.0
    %4946 = vmatpush.msra.mxu0 %v299
    %4947 = vmatpush.msra.mxu0 %v295
    %4948 = vmatpush.msra.mxu0 %v291
    %4949 = vmatpush.msra.mxu0 %v287
    %4950 = vmatmul.f32.gmra.mxu0 %v4912
    %v4951 = vpop.f32.mrf.mxu0
    %v4952 = vadd.f32 0.0, %v4951
    %4953 = vdwg.mxu0
    %4954 = vmatpush.msra.mxu0 0.0
    %4955 = vmatpush.msra.mxu0 0.0
    %4956 = vmatpush.msra.mxu0 0.0
    %4957 = vmatpush.msra.mxu0 0.0
    %4958 = vmatpush.msra.mxu0 0.0
    %4959 = vmatpush.msra.mxu0 0.0
    %4960 = vmatpush.msra.mxu0 0.0
    %4961 = vmatpush.msra.mxu0 0.0
    %4962 = vmatpush.msra.mxu0 0.0
    %4963 = vmatpush.msra.mxu0 0.0
    %4964 = vmatpush.msra.mxu0 0.0
    %4965 = vmatpush.msra.mxu0 0.0
    %4966 = vmatpush.msra.mxu0 %v300
    %4967 = vmatpush.msra.mxu0 %v296
    %4968 = vmatpush.msra.mxu0 %v292
    %4969 = vmatpush.msra.mxu0 %v288
    %4970 = vmatmul.f32.gmra.mxu0 %v4912
    %v4971 = vpop.f32.mrf.mxu0
    %v4972 = vadd.f32 0.0, %v4971
    %4973 = vdwg.mxu0
    %4974 = vmatpush.msra.mxu0 0.0
    %4975 = vmatpush.msra.mxu0 0.0
    %4976 = vmatpush.msra.mxu0 0.0
    %4977 = vmatpush.msra.mxu0 0.0
    %4978 = vmatpush.msra.mxu0 0.0
    %4979 = vmatpush.msra.mxu0 0.0
    %4980 = vmatpush.msra.mxu0 0.0
    %4981 = vmatpush.msra.mxu0 0.0
    %4982 = vmatpush.msra.mxu0 0.0
    %4983 = vmatpush.msra.mxu0 0.0
    %4984 = vmatpush.msra.mxu0 0.0
    %4985 = vmatpush.msra.mxu0 0.0
    %4986 = vmatpush.msra.mxu0 %v301
    %4987 = vmatpush.msra.mxu0 %v297
    %4988 = vmatpush.msra.mxu0 %v293
    %4989 = vmatpush.msra.mxu0 %v289
    %4990 = vmatmul.f32.gmra.mxu0 %v4912
    %v4991 = vpop.f32.mrf.mxu0
    %v4992 = vadd.f32 0.0, %v4991
    %4993 = vdwg.mxu0
    %v4998 = vrot.slane %v4952, 7
    %v4999 = vrot.slane %v4972, 6
    %v5000 = vrot.slane %v4992, 5
    %v5001 = vsel %vm1675, %v4932, %v4998
    %v5002 = vsel %vm1677, %v4999, %v5000
    %v5003 = vsel %vm1542, %v5001, %v5002
    %v5004 = vsel %vm1419, %v4932, %v4998
    %v5005 = vsel %vm1681, %v4999, %v5000
    %v5006 = vsel %vm1683, %v5004, %v5005
    %v5007 = vrot.slane %v5006, 1
    %v5008 = vperm.slane %v5003, 0
    %v5009 = vperm.slane %v5003, 1
    %v5010 = vperm.slane %v5003, 2
    %v5011 = vperm.slane %v5003, 3
    %v5012 = vperm.slane %v5007, 0
    %v5013 = vperm.slane %v5007, 1
    %v5014 = vperm.slane %v5007, 2
    %v5015 = vperm.slane %v5007, 3
    %v5024 = vmul.f32 %v4668, %v5008
    %v5025 = vmul.f32 %v4669, %v5009
    %v5026 = vmul.f32 %v4670, %v5010
    %v5027 = vmul.f32 %v4671, %v5011
    %v5028 = vmul.f32 %v4672, %v5008
    %v5029 = vmul.f32 %v4673, %v5009
    %v5030 = vmul.f32 %v4674, %v5010
    %v5031 = vmul.f32 %v4675, %v5011
    %v5032 = vmul.f32 %v4676, %v5012
    %v5033 = vmul.f32 %v4677, %v5013
    %v5034 = vmul.f32 %v4678, %v5014
    %v5035 = vmul.f32 %v4679, %v5015
    %v5036 = vmul.f32 %v4680, %v5012
    %v5037 = vmul.f32 %v4681, %v5013
    %v5038 = vmul.f32 %v4682, %v5014
    %v5039 = vmul.f32 %v4683, %v5015
    %5040 = vst [vmem:[#allocation24] sm:$0xff] %v5024
    %5041 = vst [vmem:[#allocation24 + $0x8] sm:$0xff] %v5025
    %5042 = vst [vmem:[#allocation24 + $0x10] sm:$0xff] %v5026
    %5043 = vst [vmem:[#allocation24 + $0x18] sm:$0xff] %v5027
    %5044 = vst [vmem:[#allocation24 + $0x20] sm:$0xff] %v5028
    %5045 = vst [vmem:[#allocation24 + $0x28] sm:$0xff] %v5029
    %5046 = vst [vmem:[#allocation24 + $0x30] sm:$0xff] %v5030
    %5047 = vst [vmem:[#allocation24 + $0x38] sm:$0xff] %v5031
    %5048 = vst [vmem:[#allocation24 + $0x40] sm:$0xff] %v5032
    %5049 = vst [vmem:[#allocation24 + $0x48] sm:$0xff] %v5033
    %5050 = vst [vmem:[#allocation24 + $0x50] sm:$0xff] %v5034
    %5051 = vst [vmem:[#allocation24 + $0x58] sm:$0xff] %v5035
    %5052 = vst [vmem:[#allocation24 + $0x60] sm:$0xff] %v5036
    %5053 = vst [vmem:[#allocation24 + $0x68] sm:$0xff] %v5037
    %5054 = vst [vmem:[#allocation24 + $0x70] sm:$0xff] %v5038
    %5055 = vst [vmem:[#allocation24 + $0x78] sm:$0xff] %v5039
    // Predicated region
    $region110: #{tpu_custom_call.1} parent=1 // pred_check
      _
    $region111: #{tpu_custom_call.1} parent=1 // pred_check_branch
      %5057 = sbr.rel (0) target = $region113
    $region112: #{tpu_custom_call.1} parent=1 // pred_region
      %5059 = vsyncadd [#allocation6], 0
      %s5060 = sshll.u32 [#allocation24], 4
      %s5061 = int_to_ptr.vmem [resolvable:$true] %s5060
      %s5062 = sshll.u32 %s15, 4
      %s5063 = int_to_ptr.hbm [resolvable:$true] %s5062
      %5068 = dma.vmem_to_hbm [thread:$0]  %s5061, 2048, %s5063, [#allocation6], 512, 512, 32
    $region113: #{tpu_custom_call.1} parent=1 // pred_fallthru
      _
    // Predicated region
    $region114: #{tpu_custom_call.1} parent=1 // pred_check
      _
    $region115: #{tpu_custom_call.1} parent=1 // pred_check_branch
      %5070 = sbr.rel (0) target = $region117
    $region116: #{tpu_custom_call.1} parent=1 // pred_region
      %5072 = dma.done [#allocation6], 2048
    $region117: #{tpu_custom_call.1} parent=1 // pred_fallthru
      _
    %5073 = vsyncpa [#allocation5], 1
    %5074 = vsyncpa [#allocation8], 1
    %5075 = vsyncpa [#allocation11], 1
    %5076 = vsyncpa [#allocation14], 1
    %5077 = vsyncpa [#allocation17], 1
    %5078 = vsyncpa [#allocation20], 1
    %5079 = vsyncpa [#allocation23], 1
    %5080 = vsyncpa [#allocation6], 1

</llo_original>
